<compile_context>
chip_gen: v6e
topology: v6e:2x2x1
jax: 0.10.0
libtpu: 0.0.40
codegen_flags: <defaults>
</compile_context>

<pallas_src>
import math

import jax
import jax.numpy as jnp
import numpy as np
from jax.experimental import pallas as pl
from jax.experimental.pallas import tpu as pltpu

# ----------------------------- configuration --------------------------------
B = 2                        # real batch
BP = 8                       # batch padded to one full sublane tile
T = 8                        # seq_len
N_BINS = 2
CARDS = [3, 5]
N_CATS = len(CARDS)
N_NUMS = 3
N_DISC = N_BINS + N_CATS
CAT_EMB_DIM = 4
NUM_TERMS = 8
INPUT_SIZE = 16
HIDDEN = 32
NUM_LAYERS = 2
LAT_DIM = 8

H2 = 2 * HIDDEN              # 64   mu|logvar hidden states stacked on features
G6 = 3 * H2                  # 192  r|z|n gates for both stacks
N_HEAD = N_BINS + sum(CARDS) + N_NUMS    # 13
N_LIN = N_BINS + sum(CARDS)              # 10 (non-sigmoid head columns)
K_OUT = 3 * LAT_DIM + N_HEAD             # 37: [mu|logvar|emb|bins|cats|nums]


# --------------------------- the fused kernel --------------------------------
def fused_kernel(disc_ref, sc_ref, eps_ref,
                 w1n_ref, b1n_ref, w2n_ref, b2n_ref,
                 w1od_ref, w1on_ref, b1o_ref, w2o_ref, b2o_ref,
                 wi0_ref, bx0_ref, wh0_ref, bh0_ref,
                 wi1_ref, bx1_ref, wh1_ref, bh1_ref,
                 fcw_ref, fcb_ref, dw1_ref, db1_ref, dw2_ref, db2_ref,
                 hw_ref, hb_ref,
                 out_ref, h1_scr):
    dot = lambda a, b: jnp.dot(a, b, preferred_element_type=jnp.float32)

    # ---- Embedding_data: mlp_nums (SiLU) + mlp_output (ReLU) ----------------
    h = dot(sc_ref[...], w1n_ref[...]) + b1n_ref[...]
    h = h * jax.nn.sigmoid(h)                                  # SiLU
    h = dot(h, w2n_ref[...]) + b2n_ref[...]                    # (R, 48)
    # cat([disc_emb, nums_emb]) @ W1o == disc @ W1o_d + nums @ W1o_n
    y = dot(disc_ref[...], w1od_ref[...]) + dot(h, w1on_ref[...]) + b1o_ref[...]
    y = jnp.maximum(y, 0.0)                                    # ReLU
    x_emb = dot(y, w2o_ref[...]) + b2o_ref[...]                # (R, 16)

    # ---- encoder_mu + encoder_logvar: two 2-layer GRUs, feature-stacked -----
    # layer-0 input gates for ALL timesteps in one wide matmul
    gx0_all = dot(x_emb, wi0_ref[...]) + bx0_ref[...]          # (R, 6H)
    wh0 = wh0_ref[...]
    wi1 = wi1_ref[...]
    wh1 = wh1_ref[...]
    # hoist bias broadcasts out of the time loop (broadcast_in_dim is not CSE'd)
    bh0 = jnp.broadcast_to(bh0_ref[...], (BP, G6))
    bx1 = jnp.broadcast_to(bx1_ref[...], (BP, G6))
    bh1 = jnp.broadcast_to(bh1_ref[...], (BP, G6))

    def gru_cell(gx, h, wh, bh):
        gh = dot(h, wh) + bh
        r = jax.nn.sigmoid(gx[:, :H2] + gh[:, :H2])
        z = jax.nn.sigmoid(gx[:, H2:2 * H2] + gh[:, H2:2 * H2])
        n = jnp.tanh(gx[:, 2 * H2:] + r * gh[:, 2 * H2:])
        return (1.0 - z) * n + z * h

    h0 = jnp.zeros((BP, H2), jnp.float32)
    h1 = jnp.zeros((BP, H2), jnp.float32)
    for t in range(T):                       # fully unrolled; all slices static
        h0 = gru_cell(gx0_all[t * BP:(t + 1) * BP, :], h0, wh0, bh0)
        h1 = gru_cell(dot(h0, wi1) + bx1, h1, wh1, bh1)
        h1_scr[t * BP:(t + 1) * BP, :] = h1

    # ---- fc_mu|fc_logvar, reparametrize, decoder_mlp, output heads ----------
    h_all = h1_scr[...]                                        # (R, 2H)
    fc = dot(h_all, fcw_ref[...]) + fcb_ref[...]               # (R, 16) = [mu|logvar]
    mu = fc[:, :LAT_DIM]
    lv = fc[:, LAT_DIM:]
    emb = mu + eps_ref[...] * jnp.exp(0.5 * lv)                # reparametrize
    d = jnp.maximum(dot(emb, dw1_ref[...]) + db1_ref[...], 0.0)
    d = dot(d, dw2_ref[...]) + db2_ref[...]
    logits = dot(d, hw_ref[...]) + hb_ref[...]                 # (R, 13)

    # single lane-contiguous output slab
    out_ref[:, 0:LAT_DIM] = mu
    out_ref[:, LAT_DIM:2 * LAT_DIM] = lv
    out_ref[:, 2 * LAT_DIM:3 * LAT_DIM] = emb
    out_ref[:, 3 * LAT_DIM:3 * LAT_DIM + N_LIN] = logits[:, :N_LIN]
    out_ref[:, 3 * LAT_DIM + N_LIN:K_OUT] = jax.nn.sigmoid(logits[:, N_LIN:])


# --------------------- fused-weight preparation (XLA, tiny) -------------------
def _bd(a, b):
    """Block-diagonal [[a, 0], [0, b]]."""
    za = jnp.zeros((a.shape[0], b.shape[1]), jnp.float32)
    zb = jnp.zeros((b.shape[0], a.shape[1]), jnp.float32)
    return jnp.concatenate([jnp.concatenate([a, za], axis=1),
                            jnp.concatenate([zb, b], axis=1)], axis=0)


def prepare_fused_weights(p):
    mu0, lv0 = p["gru_mu"][0], p["gru_lv"][0]
    mu1, lv1 = p["gru_mu"][1], p["gru_lv"][1]

    def shared_in(mu, lv):        # layer 0: same input for both stacks -> (I, 6H)
        return jnp.concatenate([mu["w_ir"], lv["w_ir"], mu["w_iz"], lv["w_iz"],
                                mu["w_in"], lv["w_in"]], axis=1)

    def blockdiag(mu, lv, names):  # separate (h_mu | h_lv) inputs -> (2*in, 6H)
        return jnp.concatenate([_bd(mu[n], lv[n]) for n in names], axis=1)

    def bias_x(mu, lv):            # [b_r | b_z | b_in] per stack -> (1, 6H)
        return jnp.concatenate([mu["b_r"], lv["b_r"], mu["b_z"], lv["b_z"],
                                mu["b_in"], lv["b_in"]], axis=1)

    def bias_h(mu, lv):            # [0 | 0 | b_hn] per stack -> (1, 6H)
        return jnp.concatenate([jnp.zeros((1, 2 * H2), jnp.float32),
                                mu["b_hn"], lv["b_hn"]], axis=1)

    wi0 = shared_in(mu0, lv0)                                     # (16, 192)
    wh0 = blockdiag(mu0, lv0, ("w_hr", "w_hz", "w_hn"))           # (64, 192)
    wi1 = blockdiag(mu1, lv1, ("w_ir", "w_iz", "w_in"))           # (64, 192)
    wh1 = blockdiag(mu1, lv1, ("w_hr", "w_hz", "w_hn"))           # (64, 192)
    bx0, bh0 = bias_x(mu0, lv0), bias_h(mu0, lv0)
    bx1, bh1 = bias_x(mu1, lv1), bias_h(mu1, lv1)

    fcw = _bd(p["fc_mu_w"], p["fc_lv_w"])                         # (64, 16)
    fcb = jnp.concatenate([p["fc_mu_b"], p["fc_lv_b"]], axis=1)   # (1, 16)
    hw = jnp.concatenate([p["bins_w"]] + p["cat_w"] + [p["nums_w"]], axis=1)  # (32,13)
    hb = jnp.concatenate([p["bins_b"]] + p["cat_b"] + [p["nums_b"]], axis=1)  # (1,13)

    return (p["w1n"], p["b1n"], p["w2n"], p["b2n"],
            p["w1o_d"], p["w1o_n"], p["b1o"], p["w2o"], p["b2o"],
            wi0, bx0, wh0, bh0, wi1, bx1, wh1, bh1,
            fcw, fcb, p["dec_w1"], p["dec_b1"], p["dec_w2"], p["dec_b2"], hw, hb)


# ------------------------------- glue / wrapper -------------------------------
def _disc_and_sincos(x, p):
    bsz, tlen, _ = x.shape
    x_disc = x[:, :, :N_DISC].astype(jnp.int32)
    x_nums = x[:, :, N_DISC:N_DISC + N_NUMS]
    # nn.Embedding lookups (gather) stay in XLA.
    embs = [jnp.take(tbl, x_disc[:, :, i], axis=0) for i, tbl in enumerate(p["emb_tables"])]
    disc_emb = jnp.concatenate(embs, axis=-1)                    # (B,T,16)
    # compute_sine_cosine(v, 8): angles = 2^k * pi * v, concat(sin, cos)
    scales = (2.0 ** jnp.arange(NUM_TERMS, dtype=jnp.float32)) * math.pi
    ang = x_nums[..., None] * scales                             # (B,T,3,8)
    sincos = jnp.concatenate(
        [jnp.sin(ang).reshape(bsz, tlen, -1), jnp.cos(ang).reshape(bsz, tlen, -1)], axis=-1)
    return disc_emb, sincos


def _to_rows(a, bsz, tlen):
    """(B,T,F) -> time-major rows (T*BP, F), batch zero-padded to BP."""
    a = jnp.transpose(a, (1, 0, 2))
    a = jnp.pad(a, ((0, 0), (0, BP - bsz), (0, 0)))
    return a.reshape(tlen * BP, a.shape[-1])


def deapstack_forward(x, params, eps):
    bsz, tlen, _ = x.shape
    assert bsz <= BP and tlen == T
    disc_emb, sincos = _disc_and_sincos(x, params)
    disc_rows = _to_rows(disc_emb, bsz, tlen)
    sc_rows = _to_rows(sincos, bsz, tlen)
    eps_rows = _to_rows(eps, bsz, tlen)
    fused = prepare_fused_weights(params)
    n_rows = tlen * BP

    out = pl.pallas_call(
        fused_kernel,
        out_shape=jax.ShapeDtypeStruct((n_rows, K_OUT), jnp.float32),
        scratch_shapes=[pltpu.VMEM((n_rows, H2), jnp.float32)],
    )(disc_rows, sc_rows, eps_rows, *fused)

    out = jnp.transpose(out.reshape(tlen, BP, K_OUT)[:, :bsz, :], (1, 0, 2))  # (B,T,K)
    mu = out[..., 0:LAT_DIM]
    lv = out[..., LAT_DIM:2 * LAT_DIM]
    emb = out[..., 2 * LAT_DIM:3 * LAT_DIM]
    o = 3 * LAT_DIM
    bins = out[..., o:o + N_BINS]
    o += N_BINS
    cats = []
    for c in CARDS:
        cats.append(out[..., o:o + c])
        o += c
    nums = out[..., o:o + N_NUMS]
    return {"bins": bins, "cats": cats, "nums": nums}, emb, mu, lv


# ------------------------------ parameters ------------------------------------
def init_params(key):
    keys = iter(jax.random.split(key, 128))

    def dense(fan_in, fan_out):
        w = jax.random.normal(next(keys), (fan_in, fan_out), jnp.float32) / math.sqrt(fan_in)
        b = jax.random.normal(next(keys), (1, fan_out), jnp.float32) * 0.05
        return w, b

    p = {}
    p["emb_tables"] = [jax.random.normal(next(keys), (c, CAT_EMB_DIM), jnp.float32) * 0.3
                       for c in [2] * N_BINS + CARDS]
    p["w1n"], p["b1n"] = dense(16 * N_NUMS, 16 * N_NUMS)
    p["w2n"], p["b2n"] = dense(16 * N_NUMS, 16 * N_NUMS)
    w1o, p["b1o"] = dense(CAT_EMB_DIM * N_DISC + 16 * N_NUMS, CAT_EMB_DIM)
    p["w1o_d"] = w1o[:CAT_EMB_DIM * N_DISC]
    p["w1o_n"] = w1o[CAT_EMB_DIM * N_DISC:]
    p["w2o"], p["b2o"] = dense(CAT_EMB_DIM, INPUT_SIZE)

    def gru_layer(in_dim):
        lp = {}
        for name in ("w_ir", "w_iz", "w_in"):
            lp[name] = jax.random.normal(next(keys), (in_dim, HIDDEN), jnp.float32) / math.sqrt(in_dim)
        for name in ("w_hr", "w_hz", "w_hn"):
            lp[name] = jax.random.normal(next(keys), (HIDDEN, HIDDEN), jnp.float32) / math.sqrt(HIDDEN)
        for name in ("b_r", "b_z", "b_in", "b_hn"):
            lp[name] = jax.random.normal(next(keys), (1, HIDDEN), jnp.float32) * 0.05
        return lp

    p["gru_mu"] = [gru_layer(INPUT_SIZE if l == 0 else HIDDEN) for l in range(NUM_LAYERS)]
    p["gru_lv"] = [gru_layer(INPUT_SIZE if l == 0 else HIDDEN) for l in range(NUM_LAYERS)]

    p["fc_mu_w"], p["fc_mu_b"] = dense(HIDDEN, LAT_DIM)
    p["fc_lv_w"], p["fc_lv_b"] = dense(HIDDEN, LAT_DIM)
    p["dec_w1"], p["dec_b1"] = dense(LAT_DIM, HIDDEN)
    p["dec_w2"], p["dec_b2"] = dense(HIDDEN, HIDDEN)
    p["bins_w"], p["bins_b"] = dense(HIDDEN, N_BINS)
    cat_w, cat_b = [], []
    for c in CARDS:
        w, b = dense(HIDDEN, c)
        cat_w.append(w)
        cat_b.append(b)
    p["cat_w"], p["cat_b"] = cat_w, cat_b
    p["nums_w"], p["nums_b"] = dense(HIDDEN, N_NUMS)
    return p


# ------------------------------ pure-JAX reference ----------------------------
def reference_forward(x, p, eps):
    bsz, tlen, _ = x.shape
    disc_emb, sincos = _disc_and_sincos(x, p)
    h = sincos @ p["w1n"] + p["b1n"]
    h = h * jax.nn.sigmoid(h)
    h = h @ p["w2n"] + p["b2n"]
    y = jnp.maximum(disc_emb @ p["w1o_d"] + h @ p["w1o_n"] + p["b1o"], 0.0)
    x_emb = y @ p["w2o"] + p["b2o"]

    def gru_ref(seq, layers):
        out = seq
        for lp in layers:
            def step(hprev, xt):
                r = jax.nn.sigmoid(xt @ lp["w_ir"] + hprev @ lp["w_hr"] + lp["b_r"])
                z = jax.nn.sigmoid(xt @ lp["w_iz"] + hprev @ lp["w_hz"] + lp["b_z"])
                n = jnp.tanh(xt @ lp["w_in"] + lp["b_in"] + r * (hprev @ lp["w_hn"] + lp["b_hn"]))
                hn = (1.0 - z) * n + z * hprev
                return hn, hn
            h0 = jnp.zeros((bsz, HIDDEN), jnp.float32)
            _, ys = jax.lax.scan(step, h0, jnp.transpose(out, (1, 0, 2)))
            out = jnp.transpose(ys, (1, 0, 2))
        return out

    hm = gru_ref(x_emb, p["gru_mu"])
    hl = gru_ref(x_emb, p["gru_lv"])
    mu = hm @ p["fc_mu_w"] + p["fc_mu_b"]
    lv = hl @ p["fc_lv_w"] + p["fc_lv_b"]
    emb = mu + eps * jnp.exp(0.5 * lv)
    d = jnp.maximum(emb @ p["dec_w1"] + p["dec_b1"], 0.0)
    d = d @ p["dec_w2"] + p["dec_b2"]
    outputs = {
        "bins": d @ p["bins_w"] + p["bins_b"],
        "cats": [d @ p["cat_w"][c] + p["cat_b"][c] for c in range(N_CATS)],
        "nums": jax.nn.sigmoid(d @ p["nums_w"] + p["nums_b"]),
    }
    return outputs, emb, mu, lv


# ----------------------------------- main --------------------------------------
if __name__ == "__main__":
    key = jax.random.PRNGKey(0)
    kp, kb, kc, kn, ke = jax.random.split(key, 5)
    params = init_params(kp)

    bins_x = jax.random.randint(kb, (B, T, N_BINS), 0, 2)
    cats_x = jnp.stack([jax.random.randint(jax.random.fold_in(kc, i), (B, T), 0, CARDS[i])
                        for i in range(N_CATS)], axis=-1)
    nums_x = jax.random.uniform(kn, (B, T, N_NUMS), jnp.float32)
    x = jnp.concatenate([bins_x.astype(jnp.float32), cats_x.astype(jnp.float32), nums_x], axis=-1)
    # TODO(synk): torch.randn_like inside reparametrize has no in-kernel equivalent
    # with identical RNG; eps is drawn host-side and passed into the kernel.
    eps = jax.random.normal(ke, (B, T, LAT_DIM), jnp.float32)

    fwd = jax.jit(deapstack_forward)
    outputs, emb, mu_z, logvar_z = fwd(x, params, eps)
    jax.block_until_ready((outputs, emb, mu_z, logvar_z))

    ref_out, ref_emb, ref_mu, ref_lv = reference_forward(x, params, eps)
    np.testing.assert_allclose(np.asarray(mu_z), np.asarray(ref_mu), rtol=5e-3, atol=5e-3)
    np.testing.assert_allclose(np.asarray(logvar_z), np.asarray(ref_lv), rtol=5e-3, atol=5e-3)
    np.testing.assert_allclose(np.asarray(emb), np.asarray(ref_emb), rtol=5e-3, atol=5e-3)
    np.testing.assert_allclose(np.asarray(outputs["bins"]), np.asarray(ref_out["bins"]),
                               rtol=5e-3, atol=5e-3)
    for c in range(N_CATS):
        np.testing.assert_allclose(np.asarray(outputs["cats"][c]), np.asarray(ref_out["cats"][c]),
                                   rtol=5e-3, atol=5e-3)
    np.testing.assert_allclose(np.asarray(outputs["nums"]), np.asarray(ref_out["nums"]),
                               rtol=5e-3, atol=5e-3)
    print("KERNEL_OK")
</pallas_src>

<mosaic_0001>
module attributes {stable_mosaic.version = 11 : i64} {
  func.func @fused_kernel(%arg0: memref<64x16xf32, #tpu.memory_space<vmem>>, %arg1: memref<64x48xf32, #tpu.memory_space<vmem>>, %arg2: memref<64x8xf32, #tpu.memory_space<vmem>>, %arg3: memref<48x48xf32, #tpu.memory_space<vmem>>, %arg4: memref<1x48xf32, #tpu.memory_space<vmem>>, %arg5: memref<48x48xf32, #tpu.memory_space<vmem>>, %arg6: memref<1x48xf32, #tpu.memory_space<vmem>>, %arg7: memref<16x4xf32, #tpu.memory_space<vmem>>, %arg8: memref<48x4xf32, #tpu.memory_space<vmem>>, %arg9: memref<1x4xf32, #tpu.memory_space<vmem>>, %arg10: memref<4x16xf32, #tpu.memory_space<vmem>>, %arg11: memref<1x16xf32, #tpu.memory_space<vmem>>, %arg12: memref<16x192xf32, #tpu.memory_space<vmem>>, %arg13: memref<1x192xf32, #tpu.memory_space<vmem>>, %arg14: memref<64x192xf32, #tpu.memory_space<vmem>>, %arg15: memref<1x192xf32, #tpu.memory_space<vmem>>, %arg16: memref<64x192xf32, #tpu.memory_space<vmem>>, %arg17: memref<1x192xf32, #tpu.memory_space<vmem>>, %arg18: memref<64x192xf32, #tpu.memory_space<vmem>>, %arg19: memref<1x192xf32, #tpu.memory_space<vmem>>, %arg20: memref<64x16xf32, #tpu.memory_space<vmem>>, %arg21: memref<1x16xf32, #tpu.memory_space<vmem>>, %arg22: memref<8x32xf32, #tpu.memory_space<vmem>>, %arg23: memref<1x32xf32, #tpu.memory_space<vmem>>, %arg24: memref<32x32xf32, #tpu.memory_space<vmem>>, %arg25: memref<1x32xf32, #tpu.memory_space<vmem>>, %arg26: memref<32x13xf32, #tpu.memory_space<vmem>>, %arg27: memref<1x13xf32, #tpu.memory_space<vmem>>, %arg28: memref<64x37xf32, #tpu.memory_space<vmem>>, %arg29: memref<64x64xf32, #tpu.memory_space<vmem>>) attributes {dimension_semantics = [], scalar_prefetch = 0 : i64, scratch_operands = 1 : i64, tpu.core_type = #tpu.core_type<tc>} {
    %c0 = arith.constant 0 : index
    %c0_0 = arith.constant 0 : index
    %0 = vector.load %arg1[%c0, %c0_0] : memref<64x48xf32, #tpu.memory_space<vmem>>, vector<64x48xf32>
    %c0_1 = arith.constant 0 : index
    %c0_2 = arith.constant 0 : index
    %1 = vector.load %arg3[%c0_1, %c0_2] : memref<48x48xf32, #tpu.memory_space<vmem>>, vector<48x48xf32>
    %cst = arith.constant dense<0.000000e+00> : vector<64x48xf32>
    %2 = tpu.matmul %0, %1, %cst {dimension_numbers = #tpu.dot_dimension_numbers<[1], [0], [0], [1], [0, 0, 1, 1], [], []>} : vector<64x48xf32>, vector<48x48xf32>, vector<64x48xf32> -> vector<64x48xf32>
    %c0_3 = arith.constant 0 : index
    %c0_4 = arith.constant 0 : index
    %3 = vector.load %arg4[%c0_3, %c0_4] : memref<1x48xf32, #tpu.memory_space<vmem>>, vector<1x48xf32>
    %4 = vector.broadcast %3 : vector<1x48xf32> to vector<64x48xf32>
    %5 = arith.addf %2, %4 : vector<64x48xf32>
    %6 = arith.negf %5 : vector<64x48xf32>
    %7 = math.exp %6 : vector<64x48xf32>
    %cst_5 = arith.constant 1.000000e+00 : f32
    %8 = vector.broadcast %cst_5 : f32 to vector<64x48xf32>
    %9 = arith.addf %8, %7 : vector<64x48xf32>
    %10 = arith.divf %8, %9 : vector<64x48xf32>
    %11 = arith.mulf %5, %10 : vector<64x48xf32>
    %c0_6 = arith.constant 0 : index
    %c0_7 = arith.constant 0 : index
    %12 = vector.load %arg5[%c0_6, %c0_7] : memref<48x48xf32, #tpu.memory_space<vmem>>, vector<48x48xf32>
    %cst_8 = arith.constant dense<0.000000e+00> : vector<64x48xf32>
    %13 = tpu.matmul %11, %12, %cst_8 {dimension_numbers = #tpu.dot_dimension_numbers<[1], [0], [0], [1], [0, 0, 1, 1], [], []>} : vector<64x48xf32>, vector<48x48xf32>, vector<64x48xf32> -> vector<64x48xf32>
    %c0_9 = arith.constant 0 : index
    %c0_10 = arith.constant 0 : index
    %14 = vector.load %arg6[%c0_9, %c0_10] : memref<1x48xf32, #tpu.memory_space<vmem>>, vector<1x48xf32>
    %15 = vector.broadcast %14 : vector<1x48xf32> to vector<64x48xf32>
    %16 = arith.addf %13, %15 : vector<64x48xf32>
    %c0_11 = arith.constant 0 : index
    %c0_12 = arith.constant 0 : index
    %17 = vector.load %arg0[%c0_11, %c0_12] : memref<64x16xf32, #tpu.memory_space<vmem>>, vector<64x16xf32>
    %c0_13 = arith.constant 0 : index
    %c0_14 = arith.constant 0 : index
    %18 = vector.load %arg7[%c0_13, %c0_14] : memref<16x4xf32, #tpu.memory_space<vmem>>, vector<16x4xf32>
    %cst_15 = arith.constant dense<0.000000e+00> : vector<64x4xf32>
    %19 = tpu.matmul %17, %18, %cst_15 {dimension_numbers = #tpu.dot_dimension_numbers<[1], [0], [0], [1], [0, 0, 1, 1], [], []>} : vector<64x16xf32>, vector<16x4xf32>, vector<64x4xf32> -> vector<64x4xf32>
    %c0_16 = arith.constant 0 : index
    %c0_17 = arith.constant 0 : index
    %20 = vector.load %arg8[%c0_16, %c0_17] : memref<48x4xf32, #tpu.memory_space<vmem>>, vector<48x4xf32>
    %cst_18 = arith.constant dense<0.000000e+00> : vector<64x4xf32>
    %21 = tpu.matmul %16, %20, %cst_18 {dimension_numbers = #tpu.dot_dimension_numbers<[1], [0], [0], [1], [0, 0, 1, 1], [], []>} : vector<64x48xf32>, vector<48x4xf32>, vector<64x4xf32> -> vector<64x4xf32>
    %22 = arith.addf %19, %21 : vector<64x4xf32>
    %c0_19 = arith.constant 0 : index
    %c0_20 = arith.constant 0 : index
    %23 = vector.load %arg9[%c0_19, %c0_20] : memref<1x4xf32, #tpu.memory_space<vmem>>, vector<1x4xf32>
    %24 = vector.broadcast %23 : vector<1x4xf32> to vector<64x4xf32>
    %25 = arith.addf %22, %24 : vector<64x4xf32>
    %cst_21 = arith.constant 0.000000e+00 : f32
    %26 = vector.broadcast %cst_21 : f32 to vector<64x4xf32>
    %27 = arith.maximumf %25, %26 : vector<64x4xf32>
    %c0_22 = arith.constant 0 : index
    %c0_23 = arith.constant 0 : index
    %28 = vector.load %arg10[%c0_22, %c0_23] : memref<4x16xf32, #tpu.memory_space<vmem>>, vector<4x16xf32>
    %cst_24 = arith.constant dense<0.000000e+00> : vector<64x16xf32>
    %29 = tpu.matmul %27, %28, %cst_24 {dimension_numbers = #tpu.dot_dimension_numbers<[1], [0], [0], [1], [0, 0, 1, 1], [], []>} : vector<64x4xf32>, vector<4x16xf32>, vector<64x16xf32> -> vector<64x16xf32>
    %c0_25 = arith.constant 0 : index
    %c0_26 = arith.constant 0 : index
    %30 = vector.load %arg11[%c0_25, %c0_26] : memref<1x16xf32, #tpu.memory_space<vmem>>, vector<1x16xf32>
    %31 = vector.broadcast %30 : vector<1x16xf32> to vector<64x16xf32>
    %32 = arith.addf %29, %31 : vector<64x16xf32>
    %c0_27 = arith.constant 0 : index
    %c0_28 = arith.constant 0 : index
    %33 = vector.load %arg12[%c0_27, %c0_28] : memref<16x192xf32, #tpu.memory_space<vmem>>, vector<16x192xf32>
    %cst_29 = arith.constant dense<0.000000e+00> : vector<64x192xf32>
    %34 = tpu.matmul %32, %33, %cst_29 {dimension_numbers = #tpu.dot_dimension_numbers<[1], [0], [0], [1], [0, 0, 1, 1], [], []>} : vector<64x16xf32>, vector<16x192xf32>, vector<64x192xf32> -> vector<64x192xf32>
    %c0_30 = arith.constant 0 : index
    %c0_31 = arith.constant 0 : index
    %35 = vector.load %arg13[%c0_30, %c0_31] : memref<1x192xf32, #tpu.memory_space<vmem>>, vector<1x192xf32>
    %36 = vector.broadcast %35 : vector<1x192xf32> to vector<64x192xf32>
    %37 = arith.addf %34, %36 : vector<64x192xf32>
    %c0_32 = arith.constant 0 : index
    %c0_33 = arith.constant 0 : index
    %38 = vector.load %arg14[%c0_32, %c0_33] : memref<64x192xf32, #tpu.memory_space<vmem>>, vector<64x192xf32>
    %c0_34 = arith.constant 0 : index
    %c0_35 = arith.constant 0 : index
    %39 = vector.load %arg16[%c0_34, %c0_35] : memref<64x192xf32, #tpu.memory_space<vmem>>, vector<64x192xf32>
    %c0_36 = arith.constant 0 : index
    %c0_37 = arith.constant 0 : index
    %40 = vector.load %arg18[%c0_36, %c0_37] : memref<64x192xf32, #tpu.memory_space<vmem>>, vector<64x192xf32>
    %c0_38 = arith.constant 0 : index
    %c0_39 = arith.constant 0 : index
    %41 = vector.load %arg15[%c0_38, %c0_39] : memref<1x192xf32, #tpu.memory_space<vmem>>, vector<1x192xf32>
    %42 = vector.shape_cast %41 : vector<1x192xf32> to vector<1x192xf32>
    %43 = vector.broadcast %42 : vector<1x192xf32> to vector<8x192xf32>
    %c0_40 = arith.constant 0 : index
    %c0_41 = arith.constant 0 : index
    %44 = vector.load %arg17[%c0_40, %c0_41] : memref<1x192xf32, #tpu.memory_space<vmem>>, vector<1x192xf32>
    %45 = vector.shape_cast %44 : vector<1x192xf32> to vector<1x192xf32>
    %46 = vector.broadcast %45 : vector<1x192xf32> to vector<8x192xf32>
    %c0_42 = arith.constant 0 : index
    %c0_43 = arith.constant 0 : index
    %47 = vector.load %arg19[%c0_42, %c0_43] : memref<1x192xf32, #tpu.memory_space<vmem>>, vector<1x192xf32>
    %48 = vector.shape_cast %47 : vector<1x192xf32> to vector<1x192xf32>
    %49 = vector.broadcast %48 : vector<1x192xf32> to vector<8x192xf32>
    %cst_44 = arith.constant 0.000000e+00 : f32
    %50 = vector.broadcast %cst_44 : f32 to vector<8x64xf32>
    %cst_45 = arith.constant 0.000000e+00 : f32
    %51 = vector.broadcast %cst_45 : f32 to vector<8x64xf32>
    %52 = vector.extract_strided_slice %37 {offsets = [0, 0], sizes = [8, 192], strides = [1, 1]} : vector<64x192xf32> to vector<8x192xf32>
    %cst_46 = arith.constant dense<0.000000e+00> : vector<8x192xf32>
    %53 = tpu.matmul %50, %38, %cst_46 {dimension_numbers = #tpu.dot_dimension_numbers<[1], [0], [0], [1], [0, 0, 1, 1], [], []>} : vector<8x64xf32>, vector<64x192xf32>, vector<8x192xf32> -> vector<8x192xf32>
    %54 = arith.addf %53, %43 : vector<8x192xf32>
    %55 = vector.extract_strided_slice %52 {offsets = [0, 0], sizes = [8, 64], strides = [1, 1]} : vector<8x192xf32> to vector<8x64xf32>
    %56 = vector.extract_strided_slice %54 {offsets = [0, 0], sizes = [8, 64], strides = [1, 1]} : vector<8x192xf32> to vector<8x64xf32>
    %57 = arith.addf %55, %56 : vector<8x64xf32>
    %58 = arith.negf %57 : vector<8x64xf32>
    %59 = math.exp %58 : vector<8x64xf32>
    %cst_47 = arith.constant 1.000000e+00 : f32
    %60 = vector.broadcast %cst_47 : f32 to vector<8x64xf32>
    %61 = arith.addf %60, %59 : vector<8x64xf32>
    %62 = arith.divf %60, %61 : vector<8x64xf32>
    %63 = vector.extract_strided_slice %52 {offsets = [0, 64], sizes = [8, 64], strides = [1, 1]} : vector<8x192xf32> to vector<8x64xf32>
    %64 = vector.extract_strided_slice %54 {offsets = [0, 64], sizes = [8, 64], strides = [1, 1]} : vector<8x192xf32> to vector<8x64xf32>
    %65 = arith.addf %63, %64 : vector<8x64xf32>
    %66 = arith.negf %65 : vector<8x64xf32>
    %67 = math.exp %66 : vector<8x64xf32>
    %cst_48 = arith.constant 1.000000e+00 : f32
    %68 = vector.broadcast %cst_48 : f32 to vector<8x64xf32>
    %69 = arith.addf %68, %67 : vector<8x64xf32>
    %70 = arith.divf %68, %69 : vector<8x64xf32>
    %71 = vector.extract_strided_slice %52 {offsets = [0, 128], sizes = [8, 64], strides = [1, 1]} : vector<8x192xf32> to vector<8x64xf32>
    %72 = vector.extract_strided_slice %54 {offsets = [0, 128], sizes = [8, 64], strides = [1, 1]} : vector<8x192xf32> to vector<8x64xf32>
    %73 = arith.mulf %62, %72 : vector<8x64xf32>
    %74 = arith.addf %71, %73 : vector<8x64xf32>
    %75 = math.tanh %74 : vector<8x64xf32>
    %cst_49 = arith.constant 1.000000e+00 : f32
    %76 = vector.broadcast %cst_49 : f32 to vector<8x64xf32>
    %77 = arith.subf %76, %70 : vector<8x64xf32>
    %78 = arith.mulf %77, %75 : vector<8x64xf32>
    %79 = arith.mulf %70, %50 : vector<8x64xf32>
    %80 = arith.addf %78, %79 : vector<8x64xf32>
    %cst_50 = arith.constant dense<0.000000e+00> : vector<8x192xf32>
    %81 = tpu.matmul %80, %39, %cst_50 {dimension_numbers = #tpu.dot_dimension_numbers<[1], [0], [0], [1], [0, 0, 1, 1], [], []>} : vector<8x64xf32>, vector<64x192xf32>, vector<8x192xf32> -> vector<8x192xf32>
    %82 = arith.addf %81, %46 : vector<8x192xf32>
    %cst_51 = arith.constant dense<0.000000e+00> : vector<8x192xf32>
    %83 = tpu.matmul %51, %40, %cst_51 {dimension_numbers = #tpu.dot_dimension_numbers<[1], [0], [0], [1], [0, 0, 1, 1], [], []>} : vector<8x64xf32>, vector<64x192xf32>, vector<8x192xf32> -> vector<8x192xf32>
    %84 = arith.addf %83, %49 : vector<8x192xf32>
    %85 = vector.extract_strided_slice %82 {offsets = [0, 0], sizes = [8, 64], strides = [1, 1]} : vector<8x192xf32> to vector<8x64xf32>
    %86 = vector.extract_strided_slice %84 {offsets = [0, 0], sizes = [8, 64], strides = [1, 1]} : vector<8x192xf32> to vector<8x64xf32>
    %87 = arith.addf %85, %86 : vector<8x64xf32>
    %88 = arith.negf %87 : vector<8x64xf32>
    %89 = math.exp %88 : vector<8x64xf32>
    %cst_52 = arith.constant 1.000000e+00 : f32
    %90 = vector.broadcast %cst_52 : f32 to vector<8x64xf32>
    %91 = arith.addf %90, %89 : vector<8x64xf32>
    %92 = arith.divf %90, %91 : vector<8x64xf32>
    %93 = vector.extract_strided_slice %82 {offsets = [0, 64], sizes = [8, 64], strides = [1, 1]} : vector<8x192xf32> to vector<8x64xf32>
    %94 = vector.extract_strided_slice %84 {offsets = [0, 64], sizes = [8, 64], strides = [1, 1]} : vector<8x192xf32> to vector<8x64xf32>
    %95 = arith.addf %93, %94 : vector<8x64xf32>
    %96 = arith.negf %95 : vector<8x64xf32>
    %97 = math.exp %96 : vector<8x64xf32>
    %cst_53 = arith.constant 1.000000e+00 : f32
    %98 = vector.broadcast %cst_53 : f32 to vector<8x64xf32>
    %99 = arith.addf %98, %97 : vector<8x64xf32>
    %100 = arith.divf %98, %99 : vector<8x64xf32>
    %101 = vector.extract_strided_slice %82 {offsets = [0, 128], sizes = [8, 64], strides = [1, 1]} : vector<8x192xf32> to vector<8x64xf32>
    %102 = vector.extract_strided_slice %84 {offsets = [0, 128], sizes = [8, 64], strides = [1, 1]} : vector<8x192xf32> to vector<8x64xf32>
    %103 = arith.mulf %92, %102 : vector<8x64xf32>
    %104 = arith.addf %101, %103 : vector<8x64xf32>
    %105 = math.tanh %104 : vector<8x64xf32>
    %cst_54 = arith.constant 1.000000e+00 : f32
    %106 = vector.broadcast %cst_54 : f32 to vector<8x64xf32>
    %107 = arith.subf %106, %100 : vector<8x64xf32>
    %108 = arith.mulf %107, %105 : vector<8x64xf32>
    %109 = arith.mulf %100, %51 : vector<8x64xf32>
    %110 = arith.addf %108, %109 : vector<8x64xf32>
    %c0_55 = arith.constant 0 : index
    %c0_56 = arith.constant 0 : index
    %111 = vector.load %arg29[%c0_55, %c0_56] : memref<64x64xf32, #tpu.memory_space<vmem>>, vector<8x64xf32>
    tpu.vector_store %arg29[%c0_55, %c0_56], %110 {strides = array<i32>} : memref<64x64xf32, #tpu.memory_space<vmem>>, vector<8x64xf32>,
    %112 = vector.extract_strided_slice %37 {offsets = [8, 0], sizes = [8, 192], strides = [1, 1]} : vector<64x192xf32> to vector<8x192xf32>
    %cst_57 = arith.constant dense<0.000000e+00> : vector<8x192xf32>
    %113 = tpu.matmul %80, %38, %cst_57 {dimension_numbers = #tpu.dot_dimension_numbers<[1], [0], [0], [1], [0, 0, 1, 1], [], []>} : vector<8x64xf32>, vector<64x192xf32>, vector<8x192xf32> -> vector<8x192xf32>
    %114 = arith.addf %113, %43 : vector<8x192xf32>
    %115 = vector.extract_strided_slice %112 {offsets = [0, 0], sizes = [8, 64], strides = [1, 1]} : vector<8x192xf32> to vector<8x64xf32>
    %116 = vector.extract_strided_slice %114 {offsets = [0, 0], sizes = [8, 64], strides = [1, 1]} : vector<8x192xf32> to vector<8x64xf32>
    %117 = arith.addf %115, %116 : vector<8x64xf32>
    %118 = arith.negf %117 : vector<8x64xf32>
    %119 = math.exp %118 : vector<8x64xf32>
    %cst_58 = arith.constant 1.000000e+00 : f32
    %120 = vector.broadcast %cst_58 : f32 to vector<8x64xf32>
    %121 = arith.addf %120, %119 : vector<8x64xf32>
    %122 = arith.divf %120, %121 : vector<8x64xf32>
    %123 = vector.extract_strided_slice %112 {offsets = [0, 64], sizes = [8, 64], strides = [1, 1]} : vector<8x192xf32> to vector<8x64xf32>
    %124 = vector.extract_strided_slice %114 {offsets = [0, 64], sizes = [8, 64], strides = [1, 1]} : vector<8x192xf32> to vector<8x64xf32>
    %125 = arith.addf %123, %124 : vector<8x64xf32>
    %126 = arith.negf %125 : vector<8x64xf32>
    %127 = math.exp %126 : vector<8x64xf32>
    %cst_59 = arith.constant 1.000000e+00 : f32
    %128 = vector.broadcast %cst_59 : f32 to vector<8x64xf32>
    %129 = arith.addf %128, %127 : vector<8x64xf32>
    %130 = arith.divf %128, %129 : vector<8x64xf32>
    %131 = vector.extract_strided_slice %112 {offsets = [0, 128], sizes = [8, 64], strides = [1, 1]} : vector<8x192xf32> to vector<8x64xf32>
    %132 = vector.extract_strided_slice %114 {offsets = [0, 128], sizes = [8, 64], strides = [1, 1]} : vector<8x192xf32> to vector<8x64xf32>
    %133 = arith.mulf %122, %132 : vector<8x64xf32>
    %134 = arith.addf %131, %133 : vector<8x64xf32>
    %135 = math.tanh %134 : vector<8x64xf32>
    %cst_60 = arith.constant 1.000000e+00 : f32
    %136 = vector.broadcast %cst_60 : f32 to vector<8x64xf32>
    %137 = arith.subf %136, %130 : vector<8x64xf32>
    %138 = arith.mulf %137, %135 : vector<8x64xf32>
    %139 = arith.mulf %130, %80 : vector<8x64xf32>
    %140 = arith.addf %138, %139 : vector<8x64xf32>
    %cst_61 = arith.constant dense<0.000000e+00> : vector<8x192xf32>
    %141 = tpu.matmul %140, %39, %cst_61 {dimension_numbers = #tpu.dot_dimension_numbers<[1], [0], [0], [1], [0, 0, 1, 1], [], []>} : vector<8x64xf32>, vector<64x192xf32>, vector<8x192xf32> -> vector<8x192xf32>
    %142 = arith.addf %141, %46 : vector<8x192xf32>
    %cst_62 = arith.constant dense<0.000000e+00> : vector<8x192xf32>
    %143 = tpu.matmul %110, %40, %cst_62 {dimension_numbers = #tpu.dot_dimension_numbers<[1], [0], [0], [1], [0, 0, 1, 1], [], []>} : vector<8x64xf32>, vector<64x192xf32>, vector<8x192xf32> -> vector<8x192xf32>
    %144 = arith.addf %143, %49 : vector<8x192xf32>
    %145 = vector.extract_strided_slice %142 {offsets = [0, 0], sizes = [8, 64], strides = [1, 1]} : vector<8x192xf32> to vector<8x64xf32>
    %146 = vector.extract_strided_slice %144 {offsets = [0, 0], sizes = [8, 64], strides = [1, 1]} : vector<8x192xf32> to vector<8x64xf32>
    %147 = arith.addf %145, %146 : vector<8x64xf32>
    %148 = arith.negf %147 : vector<8x64xf32>
    %149 = math.exp %148 : vector<8x64xf32>
    %cst_63 = arith.constant 1.000000e+00 : f32
    %150 = vector.broadcast %cst_63 : f32 to vector<8x64xf32>
    %151 = arith.addf %150, %149 : vector<8x64xf32>
    %152 = arith.divf %150, %151 : vector<8x64xf32>
    %153 = vector.extract_strided_slice %142 {offsets = [0, 64], sizes = [8, 64], strides = [1, 1]} : vector<8x192xf32> to vector<8x64xf32>
    %154 = vector.extract_strided_slice %144 {offsets = [0, 64], sizes = [8, 64], strides = [1, 1]} : vector<8x192xf32> to vector<8x64xf32>
    %155 = arith.addf %153, %154 : vector<8x64xf32>
    %156 = arith.negf %155 : vector<8x64xf32>
    %157 = math.exp %156 : vector<8x64xf32>
    %cst_64 = arith.constant 1.000000e+00 : f32
    %158 = vector.broadcast %cst_64 : f32 to vector<8x64xf32>
    %159 = arith.addf %158, %157 : vector<8x64xf32>
    %160 = arith.divf %158, %159 : vector<8x64xf32>
    %161 = vector.extract_strided_slice %142 {offsets = [0, 128], sizes = [8, 64], strides = [1, 1]} : vector<8x192xf32> to vector<8x64xf32>
    %162 = vector.extract_strided_slice %144 {offsets = [0, 128], sizes = [8, 64], strides = [1, 1]} : vector<8x192xf32> to vector<8x64xf32>
    %163 = arith.mulf %152, %162 : vector<8x64xf32>
    %164 = arith.addf %161, %163 : vector<8x64xf32>
    %165 = math.tanh %164 : vector<8x64xf32>
    %cst_65 = arith.constant 1.000000e+00 : f32
    %166 = vector.broadcast %cst_65 : f32 to vector<8x64xf32>
    %167 = arith.subf %166, %160 : vector<8x64xf32>
    %168 = arith.mulf %167, %165 : vector<8x64xf32>
    %169 = arith.mulf %160, %110 : vector<8x64xf32>
    %170 = arith.addf %168, %169 : vector<8x64xf32>
    %c8 = arith.constant 8 : index
    %c0_66 = arith.constant 0 : index
    %171 = vector.load %arg29[%c8, %c0_66] : memref<64x64xf32, #tpu.memory_space<vmem>>, vector<8x64xf32>
    tpu.vector_store %arg29[%c8, %c0_66], %170 {strides = array<i32>} : memref<64x64xf32, #tpu.memory_space<vmem>>, vector<8x64xf32>,
    %172 = vector.extract_strided_slice %37 {offsets = [16, 0], sizes = [8, 192], strides = [1, 1]} : vector<64x192xf32> to vector<8x192xf32>
    %cst_67 = arith.constant dense<0.000000e+00> : vector<8x192xf32>
    %173 = tpu.matmul %140, %38, %cst_67 {dimension_numbers = #tpu.dot_dimension_numbers<[1], [0], [0], [1], [0, 0, 1, 1], [], []>} : vector<8x64xf32>, vector<64x192xf32>, vector<8x192xf32> -> vector<8x192xf32>
    %174 = arith.addf %173, %43 : vector<8x192xf32>
    %175 = vector.extract_strided_slice %172 {offsets = [0, 0], sizes = [8, 64], strides = [1, 1]} : vector<8x192xf32> to vector<8x64xf32>
    %176 = vector.extract_strided_slice %174 {offsets = [0, 0], sizes = [8, 64], strides = [1, 1]} : vector<8x192xf32> to vector<8x64xf32>
    %177 = arith.addf %175, %176 : vector<8x64xf32>
    %178 = arith.negf %177 : vector<8x64xf32>
    %179 = math.exp %178 : vector<8x64xf32>
    %cst_68 = arith.constant 1.000000e+00 : f32
    %180 = vector.broadcast %cst_68 : f32 to vector<8x64xf32>
    %181 = arith.addf %180, %179 : vector<8x64xf32>
    %182 = arith.divf %180, %181 : vector<8x64xf32>
    %183 = vector.extract_strided_slice %172 {offsets = [0, 64], sizes = [8, 64], strides = [1, 1]} : vector<8x192xf32> to vector<8x64xf32>
    %184 = vector.extract_strided_slice %174 {offsets = [0, 64], sizes = [8, 64], strides = [1, 1]} : vector<8x192xf32> to vector<8x64xf32>
    %185 = arith.addf %183, %184 : vector<8x64xf32>
    %186 = arith.negf %185 : vector<8x64xf32>
    %187 = math.exp %186 : vector<8x64xf32>
    %cst_69 = arith.constant 1.000000e+00 : f32
    %188 = vector.broadcast %cst_69 : f32 to vector<8x64xf32>
    %189 = arith.addf %188, %187 : vector<8x64xf32>
    %190 = arith.divf %188, %189 : vector<8x64xf32>
    %191 = vector.extract_strided_slice %172 {offsets = [0, 128], sizes = [8, 64], strides = [1, 1]} : vector<8x192xf32> to vector<8x64xf32>
    %192 = vector.extract_strided_slice %174 {offsets = [0, 128], sizes = [8, 64], strides = [1, 1]} : vector<8x192xf32> to vector<8x64xf32>
    %193 = arith.mulf %182, %192 : vector<8x64xf32>
    %194 = arith.addf %191, %193 : vector<8x64xf32>
    %195 = math.tanh %194 : vector<8x64xf32>
    %cst_70 = arith.constant 1.000000e+00 : f32
    %196 = vector.broadcast %cst_70 : f32 to vector<8x64xf32>
    %197 = arith.subf %196, %190 : vector<8x64xf32>
    %198 = arith.mulf %197, %195 : vector<8x64xf32>
    %199 = arith.mulf %190, %140 : vector<8x64xf32>
    %200 = arith.addf %198, %199 : vector<8x64xf32>
    %cst_71 = arith.constant dense<0.000000e+00> : vector<8x192xf32>
    %201 = tpu.matmul %200, %39, %cst_71 {dimension_numbers = #tpu.dot_dimension_numbers<[1], [0], [0], [1], [0, 0, 1, 1], [], []>} : vector<8x64xf32>, vector<64x192xf32>, vector<8x192xf32> -> vector<8x192xf32>
    %202 = arith.addf %201, %46 : vector<8x192xf32>
    %cst_72 = arith.constant dense<0.000000e+00> : vector<8x192xf32>
    %203 = tpu.matmul %170, %40, %cst_72 {dimension_numbers = #tpu.dot_dimension_numbers<[1], [0], [0], [1], [0, 0, 1, 1], [], []>} : vector<8x64xf32>, vector<64x192xf32>, vector<8x192xf32> -> vector<8x192xf32>
    %204 = arith.addf %203, %49 : vector<8x192xf32>
    %205 = vector.extract_strided_slice %202 {offsets = [0, 0], sizes = [8, 64], strides = [1, 1]} : vector<8x192xf32> to vector<8x64xf32>
    %206 = vector.extract_strided_slice %204 {offsets = [0, 0], sizes = [8, 64], strides = [1, 1]} : vector<8x192xf32> to vector<8x64xf32>
    %207 = arith.addf %205, %206 : vector<8x64xf32>
    %208 = arith.negf %207 : vector<8x64xf32>
    %209 = math.exp %208 : vector<8x64xf32>
    %cst_73 = arith.constant 1.000000e+00 : f32
    %210 = vector.broadcast %cst_73 : f32 to vector<8x64xf32>
    %211 = arith.addf %210, %209 : vector<8x64xf32>
    %212 = arith.divf %210, %211 : vector<8x64xf32>
    %213 = vector.extract_strided_slice %202 {offsets = [0, 64], sizes = [8, 64], strides = [1, 1]} : vector<8x192xf32> to vector<8x64xf32>
    %214 = vector.extract_strided_slice %204 {offsets = [0, 64], sizes = [8, 64], strides = [1, 1]} : vector<8x192xf32> to vector<8x64xf32>
    %215 = arith.addf %213, %214 : vector<8x64xf32>
    %216 = arith.negf %215 : vector<8x64xf32>
    %217 = math.exp %216 : vector<8x64xf32>
    %cst_74 = arith.constant 1.000000e+00 : f32
    %218 = vector.broadcast %cst_74 : f32 to vector<8x64xf32>
    %219 = arith.addf %218, %217 : vector<8x64xf32>
    %220 = arith.divf %218, %219 : vector<8x64xf32>
    %221 = vector.extract_strided_slice %202 {offsets = [0, 128], sizes = [8, 64], strides = [1, 1]} : vector<8x192xf32> to vector<8x64xf32>
    %222 = vector.extract_strided_slice %204 {offsets = [0, 128], sizes = [8, 64], strides = [1, 1]} : vector<8x192xf32> to vector<8x64xf32>
    %223 = arith.mulf %212, %222 : vector<8x64xf32>
    %224 = arith.addf %221, %223 : vector<8x64xf32>
    %225 = math.tanh %224 : vector<8x64xf32>
    %cst_75 = arith.constant 1.000000e+00 : f32
    %226 = vector.broadcast %cst_75 : f32 to vector<8x64xf32>
    %227 = arith.subf %226, %220 : vector<8x64xf32>
    %228 = arith.mulf %227, %225 : vector<8x64xf32>
    %229 = arith.mulf %220, %170 : vector<8x64xf32>
    %230 = arith.addf %228, %229 : vector<8x64xf32>
    %c16 = arith.constant 16 : index
    %c0_76 = arith.constant 0 : index
    %231 = vector.load %arg29[%c16, %c0_76] : memref<64x64xf32, #tpu.memory_space<vmem>>, vector<8x64xf32>
    tpu.vector_store %arg29[%c16, %c0_76], %230 {strides = array<i32>} : memref<64x64xf32, #tpu.memory_space<vmem>>, vector<8x64xf32>,
    %232 = vector.extract_strided_slice %37 {offsets = [24, 0], sizes = [8, 192], strides = [1, 1]} : vector<64x192xf32> to vector<8x192xf32>
    %cst_77 = arith.constant dense<0.000000e+00> : vector<8x192xf32>
    %233 = tpu.matmul %200, %38, %cst_77 {dimension_numbers = #tpu.dot_dimension_numbers<[1], [0], [0], [1], [0, 0, 1, 1], [], []>} : vector<8x64xf32>, vector<64x192xf32>, vector<8x192xf32> -> vector<8x192xf32>
    %234 = arith.addf %233, %43 : vector<8x192xf32>
    %235 = vector.extract_strided_slice %232 {offsets = [0, 0], sizes = [8, 64], strides = [1, 1]} : vector<8x192xf32> to vector<8x64xf32>
    %236 = vector.extract_strided_slice %234 {offsets = [0, 0], sizes = [8, 64], strides = [1, 1]} : vector<8x192xf32> to vector<8x64xf32>
    %237 = arith.addf %235, %236 : vector<8x64xf32>
    %238 = arith.negf %237 : vector<8x64xf32>
    %239 = math.exp %238 : vector<8x64xf32>
    %cst_78 = arith.constant 1.000000e+00 : f32
    %240 = vector.broadcast %cst_78 : f32 to vector<8x64xf32>
    %241 = arith.addf %240, %239 : vector<8x64xf32>
    %242 = arith.divf %240, %241 : vector<8x64xf32>
    %243 = vector.extract_strided_slice %232 {offsets = [0, 64], sizes = [8, 64], strides = [1, 1]} : vector<8x192xf32> to vector<8x64xf32>
    %244 = vector.extract_strided_slice %234 {offsets = [0, 64], sizes = [8, 64], strides = [1, 1]} : vector<8x192xf32> to vector<8x64xf32>
    %245 = arith.addf %243, %244 : vector<8x64xf32>
    %246 = arith.negf %245 : vector<8x64xf32>
    %247 = math.exp %246 : vector<8x64xf32>
    %cst_79 = arith.constant 1.000000e+00 : f32
    %248 = vector.broadcast %cst_79 : f32 to vector<8x64xf32>
    %249 = arith.addf %248, %247 : vector<8x64xf32>
    %250 = arith.divf %248, %249 : vector<8x64xf32>
    %251 = vector.extract_strided_slice %232 {offsets = [0, 128], sizes = [8, 64], strides = [1, 1]} : vector<8x192xf32> to vector<8x64xf32>
    %252 = vector.extract_strided_slice %234 {offsets = [0, 128], sizes = [8, 64], strides = [1, 1]} : vector<8x192xf32> to vector<8x64xf32>
    %253 = arith.mulf %242, %252 : vector<8x64xf32>
    %254 = arith.addf %251, %253 : vector<8x64xf32>
    %255 = math.tanh %254 : vector<8x64xf32>
    %cst_80 = arith.constant 1.000000e+00 : f32
    %256 = vector.broadcast %cst_80 : f32 to vector<8x64xf32>
    %257 = arith.subf %256, %250 : vector<8x64xf32>
    %258 = arith.mulf %257, %255 : vector<8x64xf32>
    %259 = arith.mulf %250, %200 : vector<8x64xf32>
    %260 = arith.addf %258, %259 : vector<8x64xf32>
    %cst_81 = arith.constant dense<0.000000e+00> : vector<8x192xf32>
    %261 = tpu.matmul %260, %39, %cst_81 {dimension_numbers = #tpu.dot_dimension_numbers<[1], [0], [0], [1], [0, 0, 1, 1], [], []>} : vector<8x64xf32>, vector<64x192xf32>, vector<8x192xf32> -> vector<8x192xf32>
    %262 = arith.addf %261, %46 : vector<8x192xf32>
    %cst_82 = arith.constant dense<0.000000e+00> : vector<8x192xf32>
    %263 = tpu.matmul %230, %40, %cst_82 {dimension_numbers = #tpu.dot_dimension_numbers<[1], [0], [0], [1], [0, 0, 1, 1], [], []>} : vector<8x64xf32>, vector<64x192xf32>, vector<8x192xf32> -> vector<8x192xf32>
    %264 = arith.addf %263, %49 : vector<8x192xf32>
    %265 = vector.extract_strided_slice %262 {offsets = [0, 0], sizes = [8, 64], strides = [1, 1]} : vector<8x192xf32> to vector<8x64xf32>
    %266 = vector.extract_strided_slice %264 {offsets = [0, 0], sizes = [8, 64], strides = [1, 1]} : vector<8x192xf32> to vector<8x64xf32>
    %267 = arith.addf %265, %266 : vector<8x64xf32>
    %268 = arith.negf %267 : vector<8x64xf32>
    %269 = math.exp %268 : vector<8x64xf32>
    %cst_83 = arith.constant 1.000000e+00 : f32
    %270 = vector.broadcast %cst_83 : f32 to vector<8x64xf32>
    %271 = arith.addf %270, %269 : vector<8x64xf32>
    %272 = arith.divf %270, %271 : vector<8x64xf32>
    %273 = vector.extract_strided_slice %262 {offsets = [0, 64], sizes = [8, 64], strides = [1, 1]} : vector<8x192xf32> to vector<8x64xf32>
    %274 = vector.extract_strided_slice %264 {offsets = [0, 64], sizes = [8, 64], strides = [1, 1]} : vector<8x192xf32> to vector<8x64xf32>
    %275 = arith.addf %273, %274 : vector<8x64xf32>
    %276 = arith.negf %275 : vector<8x64xf32>
    %277 = math.exp %276 : vector<8x64xf32>
    %cst_84 = arith.constant 1.000000e+00 : f32
    %278 = vector.broadcast %cst_84 : f32 to vector<8x64xf32>
    %279 = arith.addf %278, %277 : vector<8x64xf32>
    %280 = arith.divf %278, %279 : vector<8x64xf32>
    %281 = vector.extract_strided_slice %262 {offsets = [0, 128], sizes = [8, 64], strides = [1, 1]} : vector<8x192xf32> to vector<8x64xf32>
    %282 = vector.extract_strided_slice %264 {offsets = [0, 128], sizes = [8, 64], strides = [1, 1]} : vector<8x192xf32> to vector<8x64xf32>
    %283 = arith.mulf %272, %282 : vector<8x64xf32>
    %284 = arith.addf %281, %283 : vector<8x64xf32>
    %285 = math.tanh %284 : vector<8x64xf32>
    %cst_85 = arith.constant 1.000000e+00 : f32
    %286 = vector.broadcast %cst_85 : f32 to vector<8x64xf32>
    %287 = arith.subf %286, %280 : vector<8x64xf32>
    %288 = arith.mulf %287, %285 : vector<8x64xf32>
    %289 = arith.mulf %280, %230 : vector<8x64xf32>
    %290 = arith.addf %288, %289 : vector<8x64xf32>
    %c24 = arith.constant 24 : index
    %c0_86 = arith.constant 0 : index
    %291 = vector.load %arg29[%c24, %c0_86] : memref<64x64xf32, #tpu.memory_space<vmem>>, vector<8x64xf32>
    tpu.vector_store %arg29[%c24, %c0_86], %290 {strides = array<i32>} : memref<64x64xf32, #tpu.memory_space<vmem>>, vector<8x64xf32>,
    %292 = vector.extract_strided_slice %37 {offsets = [32, 0], sizes = [8, 192], strides = [1, 1]} : vector<64x192xf32> to vector<8x192xf32>
    %cst_87 = arith.constant dense<0.000000e+00> : vector<8x192xf32>
    %293 = tpu.matmul %260, %38, %cst_87 {dimension_numbers = #tpu.dot_dimension_numbers<[1], [0], [0], [1], [0, 0, 1, 1], [], []>} : vector<8x64xf32>, vector<64x192xf32>, vector<8x192xf32> -> vector<8x192xf32>
    %294 = arith.addf %293, %43 : vector<8x192xf32>
    %295 = vector.extract_strided_slice %292 {offsets = [0, 0], sizes = [8, 64], strides = [1, 1]} : vector<8x192xf32> to vector<8x64xf32>
    %296 = vector.extract_strided_slice %294 {offsets = [0, 0], sizes = [8, 64], strides = [1, 1]} : vector<8x192xf32> to vector<8x64xf32>
    %297 = arith.addf %295, %296 : vector<8x64xf32>
    %298 = arith.negf %297 : vector<8x64xf32>
    %299 = math.exp %298 : vector<8x64xf32>
    %cst_88 = arith.constant 1.000000e+00 : f32
    %300 = vector.broadcast %cst_88 : f32 to vector<8x64xf32>
    %301 = arith.addf %300, %299 : vector<8x64xf32>
    %302 = arith.divf %300, %301 : vector<8x64xf32>
    %303 = vector.extract_strided_slice %292 {offsets = [0, 64], sizes = [8, 64], strides = [1, 1]} : vector<8x192xf32> to vector<8x64xf32>
    %304 = vector.extract_strided_slice %294 {offsets = [0, 64], sizes = [8, 64], strides = [1, 1]} : vector<8x192xf32> to vector<8x64xf32>
    %305 = arith.addf %303, %304 : vector<8x64xf32>
    %306 = arith.negf %305 : vector<8x64xf32>
    %307 = math.exp %306 : vector<8x64xf32>
    %cst_89 = arith.constant 1.000000e+00 : f32
    %308 = vector.broadcast %cst_89 : f32 to vector<8x64xf32>
    %309 = arith.addf %308, %307 : vector<8x64xf32>
    %310 = arith.divf %308, %309 : vector<8x64xf32>
    %311 = vector.extract_strided_slice %292 {offsets = [0, 128], sizes = [8, 64], strides = [1, 1]} : vector<8x192xf32> to vector<8x64xf32>
    %312 = vector.extract_strided_slice %294 {offsets = [0, 128], sizes = [8, 64], strides = [1, 1]} : vector<8x192xf32> to vector<8x64xf32>
    %313 = arith.mulf %302, %312 : vector<8x64xf32>
    %314 = arith.addf %311, %313 : vector<8x64xf32>
    %315 = math.tanh %314 : vector<8x64xf32>
    %cst_90 = arith.constant 1.000000e+00 : f32
    %316 = vector.broadcast %cst_90 : f32 to vector<8x64xf32>
    %317 = arith.subf %316, %310 : vector<8x64xf32>
    %318 = arith.mulf %317, %315 : vector<8x64xf32>
    %319 = arith.mulf %310, %260 : vector<8x64xf32>
    %320 = arith.addf %318, %319 : vector<8x64xf32>
    %cst_91 = arith.constant dense<0.000000e+00> : vector<8x192xf32>
    %321 = tpu.matmul %320, %39, %cst_91 {dimension_numbers = #tpu.dot_dimension_numbers<[1], [0], [0], [1], [0, 0, 1, 1], [], []>} : vector<8x64xf32>, vector<64x192xf32>, vector<8x192xf32> -> vector<8x192xf32>
    %322 = arith.addf %321, %46 : vector<8x192xf32>
    %cst_92 = arith.constant dense<0.000000e+00> : vector<8x192xf32>
    %323 = tpu.matmul %290, %40, %cst_92 {dimension_numbers = #tpu.dot_dimension_numbers<[1], [0], [0], [1], [0, 0, 1, 1], [], []>} : vector<8x64xf32>, vector<64x192xf32>, vector<8x192xf32> -> vector<8x192xf32>
    %324 = arith.addf %323, %49 : vector<8x192xf32>
    %325 = vector.extract_strided_slice %322 {offsets = [0, 0], sizes = [8, 64], strides = [1, 1]} : vector<8x192xf32> to vector<8x64xf32>
    %326 = vector.extract_strided_slice %324 {offsets = [0, 0], sizes = [8, 64], strides = [1, 1]} : vector<8x192xf32> to vector<8x64xf32>
    %327 = arith.addf %325, %326 : vector<8x64xf32>
    %328 = arith.negf %327 : vector<8x64xf32>
    %329 = math.exp %328 : vector<8x64xf32>
    %cst_93 = arith.constant 1.000000e+00 : f32
    %330 = vector.broadcast %cst_93 : f32 to vector<8x64xf32>
    %331 = arith.addf %330, %329 : vector<8x64xf32>
    %332 = arith.divf %330, %331 : vector<8x64xf32>
    %333 = vector.extract_strided_slice %322 {offsets = [0, 64], sizes = [8, 64], strides = [1, 1]} : vector<8x192xf32> to vector<8x64xf32>
    %334 = vector.extract_strided_slice %324 {offsets = [0, 64], sizes = [8, 64], strides = [1, 1]} : vector<8x192xf32> to vector<8x64xf32>
    %335 = arith.addf %333, %334 : vector<8x64xf32>
    %336 = arith.negf %335 : vector<8x64xf32>
    %337 = math.exp %336 : vector<8x64xf32>
    %cst_94 = arith.constant 1.000000e+00 : f32
    %338 = vector.broadcast %cst_94 : f32 to vector<8x64xf32>
    %339 = arith.addf %338, %337 : vector<8x64xf32>
    %340 = arith.divf %338, %339 : vector<8x64xf32>
    %341 = vector.extract_strided_slice %322 {offsets = [0, 128], sizes = [8, 64], strides = [1, 1]} : vector<8x192xf32> to vector<8x64xf32>
    %342 = vector.extract_strided_slice %324 {offsets = [0, 128], sizes = [8, 64], strides = [1, 1]} : vector<8x192xf32> to vector<8x64xf32>
    %343 = arith.mulf %332, %342 : vector<8x64xf32>
    %344 = arith.addf %341, %343 : vector<8x64xf32>
    %345 = math.tanh %344 : vector<8x64xf32>
    %cst_95 = arith.constant 1.000000e+00 : f32
    %346 = vector.broadcast %cst_95 : f32 to vector<8x64xf32>
    %347 = arith.subf %346, %340 : vector<8x64xf32>
    %348 = arith.mulf %347, %345 : vector<8x64xf32>
    %349 = arith.mulf %340, %290 : vector<8x64xf32>
    %350 = arith.addf %348, %349 : vector<8x64xf32>
    %c32 = arith.constant 32 : index
    %c0_96 = arith.constant 0 : index
    %351 = vector.load %arg29[%c32, %c0_96] : memref<64x64xf32, #tpu.memory_space<vmem>>, vector<8x64xf32>
    tpu.vector_store %arg29[%c32, %c0_96], %350 {strides = array<i32>} : memref<64x64xf32, #tpu.memory_space<vmem>>, vector<8x64xf32>,
    %352 = vector.extract_strided_slice %37 {offsets = [40, 0], sizes = [8, 192], strides = [1, 1]} : vector<64x192xf32> to vector<8x192xf32>
    %cst_97 = arith.constant dense<0.000000e+00> : vector<8x192xf32>
    %353 = tpu.matmul %320, %38, %cst_97 {dimension_numbers = #tpu.dot_dimension_numbers<[1], [0], [0], [1], [0, 0, 1, 1], [], []>} : vector<8x64xf32>, vector<64x192xf32>, vector<8x192xf32> -> vector<8x192xf32>
    %354 = arith.addf %353, %43 : vector<8x192xf32>
    %355 = vector.extract_strided_slice %352 {offsets = [0, 0], sizes = [8, 64], strides = [1, 1]} : vector<8x192xf32> to vector<8x64xf32>
    %356 = vector.extract_strided_slice %354 {offsets = [0, 0], sizes = [8, 64], strides = [1, 1]} : vector<8x192xf32> to vector<8x64xf32>
    %357 = arith.addf %355, %356 : vector<8x64xf32>
    %358 = arith.negf %357 : vector<8x64xf32>
    %359 = math.exp %358 : vector<8x64xf32>
    %cst_98 = arith.constant 1.000000e+00 : f32
    %360 = vector.broadcast %cst_98 : f32 to vector<8x64xf32>
    %361 = arith.addf %360, %359 : vector<8x64xf32>
    %362 = arith.divf %360, %361 : vector<8x64xf32>
    %363 = vector.extract_strided_slice %352 {offsets = [0, 64], sizes = [8, 64], strides = [1, 1]} : vector<8x192xf32> to vector<8x64xf32>
    %364 = vector.extract_strided_slice %354 {offsets = [0, 64], sizes = [8, 64], strides = [1, 1]} : vector<8x192xf32> to vector<8x64xf32>
    %365 = arith.addf %363, %364 : vector<8x64xf32>
    %366 = arith.negf %365 : vector<8x64xf32>
    %367 = math.exp %366 : vector<8x64xf32>
    %cst_99 = arith.constant 1.000000e+00 : f32
    %368 = vector.broadcast %cst_99 : f32 to vector<8x64xf32>
    %369 = arith.addf %368, %367 : vector<8x64xf32>
    %370 = arith.divf %368, %369 : vector<8x64xf32>
    %371 = vector.extract_strided_slice %352 {offsets = [0, 128], sizes = [8, 64], strides = [1, 1]} : vector<8x192xf32> to vector<8x64xf32>
    %372 = vector.extract_strided_slice %354 {offsets = [0, 128], sizes = [8, 64], strides = [1, 1]} : vector<8x192xf32> to vector<8x64xf32>
    %373 = arith.mulf %362, %372 : vector<8x64xf32>
    %374 = arith.addf %371, %373 : vector<8x64xf32>
    %375 = math.tanh %374 : vector<8x64xf32>
    %cst_100 = arith.constant 1.000000e+00 : f32
    %376 = vector.broadcast %cst_100 : f32 to vector<8x64xf32>
    %377 = arith.subf %376, %370 : vector<8x64xf32>
    %378 = arith.mulf %377, %375 : vector<8x64xf32>
    %379 = arith.mulf %370, %320 : vector<8x64xf32>
    %380 = arith.addf %378, %379 : vector<8x64xf32>
    %cst_101 = arith.constant dense<0.000000e+00> : vector<8x192xf32>
    %381 = tpu.matmul %380, %39, %cst_101 {dimension_numbers = #tpu.dot_dimension_numbers<[1], [0], [0], [1], [0, 0, 1, 1], [], []>} : vector<8x64xf32>, vector<64x192xf32>, vector<8x192xf32> -> vector<8x192xf32>
    %382 = arith.addf %381, %46 : vector<8x192xf32>
    %cst_102 = arith.constant dense<0.000000e+00> : vector<8x192xf32>
    %383 = tpu.matmul %350, %40, %cst_102 {dimension_numbers = #tpu.dot_dimension_numbers<[1], [0], [0], [1], [0, 0, 1, 1], [], []>} : vector<8x64xf32>, vector<64x192xf32>, vector<8x192xf32> -> vector<8x192xf32>
    %384 = arith.addf %383, %49 : vector<8x192xf32>
    %385 = vector.extract_strided_slice %382 {offsets = [0, 0], sizes = [8, 64], strides = [1, 1]} : vector<8x192xf32> to vector<8x64xf32>
    %386 = vector.extract_strided_slice %384 {offsets = [0, 0], sizes = [8, 64], strides = [1, 1]} : vector<8x192xf32> to vector<8x64xf32>
    %387 = arith.addf %385, %386 : vector<8x64xf32>
    %388 = arith.negf %387 : vector<8x64xf32>
    %389 = math.exp %388 : vector<8x64xf32>
    %cst_103 = arith.constant 1.000000e+00 : f32
    %390 = vector.broadcast %cst_103 : f32 to vector<8x64xf32>
    %391 = arith.addf %390, %389 : vector<8x64xf32>
    %392 = arith.divf %390, %391 : vector<8x64xf32>
    %393 = vector.extract_strided_slice %382 {offsets = [0, 64], sizes = [8, 64], strides = [1, 1]} : vector<8x192xf32> to vector<8x64xf32>
    %394 = vector.extract_strided_slice %384 {offsets = [0, 64], sizes = [8, 64], strides = [1, 1]} : vector<8x192xf32> to vector<8x64xf32>
    %395 = arith.addf %393, %394 : vector<8x64xf32>
    %396 = arith.negf %395 : vector<8x64xf32>
    %397 = math.exp %396 : vector<8x64xf32>
    %cst_104 = arith.constant 1.000000e+00 : f32
    %398 = vector.broadcast %cst_104 : f32 to vector<8x64xf32>
    %399 = arith.addf %398, %397 : vector<8x64xf32>
    %400 = arith.divf %398, %399 : vector<8x64xf32>
    %401 = vector.extract_strided_slice %382 {offsets = [0, 128], sizes = [8, 64], strides = [1, 1]} : vector<8x192xf32> to vector<8x64xf32>
    %402 = vector.extract_strided_slice %384 {offsets = [0, 128], sizes = [8, 64], strides = [1, 1]} : vector<8x192xf32> to vector<8x64xf32>
    %403 = arith.mulf %392, %402 : vector<8x64xf32>
    %404 = arith.addf %401, %403 : vector<8x64xf32>
    %405 = math.tanh %404 : vector<8x64xf32>
    %cst_105 = arith.constant 1.000000e+00 : f32
    %406 = vector.broadcast %cst_105 : f32 to vector<8x64xf32>
    %407 = arith.subf %406, %400 : vector<8x64xf32>
    %408 = arith.mulf %407, %405 : vector<8x64xf32>
    %409 = arith.mulf %400, %350 : vector<8x64xf32>
    %410 = arith.addf %408, %409 : vector<8x64xf32>
    %c40 = arith.constant 40 : index
    %c0_106 = arith.constant 0 : index
    %411 = vector.load %arg29[%c40, %c0_106] : memref<64x64xf32, #tpu.memory_space<vmem>>, vector<8x64xf32>
    tpu.vector_store %arg29[%c40, %c0_106], %410 {strides = array<i32>} : memref<64x64xf32, #tpu.memory_space<vmem>>, vector<8x64xf32>,
    %412 = vector.extract_strided_slice %37 {offsets = [48, 0], sizes = [8, 192], strides = [1, 1]} : vector<64x192xf32> to vector<8x192xf32>
    %cst_107 = arith.constant dense<0.000000e+00> : vector<8x192xf32>
    %413 = tpu.matmul %380, %38, %cst_107 {dimension_numbers = #tpu.dot_dimension_numbers<[1], [0], [0], [1], [0, 0, 1, 1], [], []>} : vector<8x64xf32>, vector<64x192xf32>, vector<8x192xf32> -> vector<8x192xf32>
    %414 = arith.addf %413, %43 : vector<8x192xf32>
    %415 = vector.extract_strided_slice %412 {offsets = [0, 0], sizes = [8, 64], strides = [1, 1]} : vector<8x192xf32> to vector<8x64xf32>
    %416 = vector.extract_strided_slice %414 {offsets = [0, 0], sizes = [8, 64], strides = [1, 1]} : vector<8x192xf32> to vector<8x64xf32>
    %417 = arith.addf %415, %416 : vector<8x64xf32>
    %418 = arith.negf %417 : vector<8x64xf32>
    %419 = math.exp %418 : vector<8x64xf32>
    %cst_108 = arith.constant 1.000000e+00 : f32
    %420 = vector.broadcast %cst_108 : f32 to vector<8x64xf32>
    %421 = arith.addf %420, %419 : vector<8x64xf32>
    %422 = arith.divf %420, %421 : vector<8x64xf32>
    %423 = vector.extract_strided_slice %412 {offsets = [0, 64], sizes = [8, 64], strides = [1, 1]} : vector<8x192xf32> to vector<8x64xf32>
    %424 = vector.extract_strided_slice %414 {offsets = [0, 64], sizes = [8, 64], strides = [1, 1]} : vector<8x192xf32> to vector<8x64xf32>
    %425 = arith.addf %423, %424 : vector<8x64xf32>
    %426 = arith.negf %425 : vector<8x64xf32>
    %427 = math.exp %426 : vector<8x64xf32>
    %cst_109 = arith.constant 1.000000e+00 : f32
    %428 = vector.broadcast %cst_109 : f32 to vector<8x64xf32>
    %429 = arith.addf %428, %427 : vector<8x64xf32>
    %430 = arith.divf %428, %429 : vector<8x64xf32>
    %431 = vector.extract_strided_slice %412 {offsets = [0, 128], sizes = [8, 64], strides = [1, 1]} : vector<8x192xf32> to vector<8x64xf32>
    %432 = vector.extract_strided_slice %414 {offsets = [0, 128], sizes = [8, 64], strides = [1, 1]} : vector<8x192xf32> to vector<8x64xf32>
    %433 = arith.mulf %422, %432 : vector<8x64xf32>
    %434 = arith.addf %431, %433 : vector<8x64xf32>
    %435 = math.tanh %434 : vector<8x64xf32>
    %cst_110 = arith.constant 1.000000e+00 : f32
    %436 = vector.broadcast %cst_110 : f32 to vector<8x64xf32>
    %437 = arith.subf %436, %430 : vector<8x64xf32>
    %438 = arith.mulf %437, %435 : vector<8x64xf32>
    %439 = arith.mulf %430, %380 : vector<8x64xf32>
    %440 = arith.addf %438, %439 : vector<8x64xf32>
    %cst_111 = arith.constant dense<0.000000e+00> : vector<8x192xf32>
    %441 = tpu.matmul %440, %39, %cst_111 {dimension_numbers = #tpu.dot_dimension_numbers<[1], [0], [0], [1], [0, 0, 1, 1], [], []>} : vector<8x64xf32>, vector<64x192xf32>, vector<8x192xf32> -> vector<8x192xf32>
    %442 = arith.addf %441, %46 : vector<8x192xf32>
    %cst_112 = arith.constant dense<0.000000e+00> : vector<8x192xf32>
    %443 = tpu.matmul %410, %40, %cst_112 {dimension_numbers = #tpu.dot_dimension_numbers<[1], [0], [0], [1], [0, 0, 1, 1], [], []>} : vector<8x64xf32>, vector<64x192xf32>, vector<8x192xf32> -> vector<8x192xf32>
    %444 = arith.addf %443, %49 : vector<8x192xf32>
    %445 = vector.extract_strided_slice %442 {offsets = [0, 0], sizes = [8, 64], strides = [1, 1]} : vector<8x192xf32> to vector<8x64xf32>
    %446 = vector.extract_strided_slice %444 {offsets = [0, 0], sizes = [8, 64], strides = [1, 1]} : vector<8x192xf32> to vector<8x64xf32>
    %447 = arith.addf %445, %446 : vector<8x64xf32>
    %448 = arith.negf %447 : vector<8x64xf32>
    %449 = math.exp %448 : vector<8x64xf32>
    %cst_113 = arith.constant 1.000000e+00 : f32
    %450 = vector.broadcast %cst_113 : f32 to vector<8x64xf32>
    %451 = arith.addf %450, %449 : vector<8x64xf32>
    %452 = arith.divf %450, %451 : vector<8x64xf32>
    %453 = vector.extract_strided_slice %442 {offsets = [0, 64], sizes = [8, 64], strides = [1, 1]} : vector<8x192xf32> to vector<8x64xf32>
    %454 = vector.extract_strided_slice %444 {offsets = [0, 64], sizes = [8, 64], strides = [1, 1]} : vector<8x192xf32> to vector<8x64xf32>
    %455 = arith.addf %453, %454 : vector<8x64xf32>
    %456 = arith.negf %455 : vector<8x64xf32>
    %457 = math.exp %456 : vector<8x64xf32>
    %cst_114 = arith.constant 1.000000e+00 : f32
    %458 = vector.broadcast %cst_114 : f32 to vector<8x64xf32>
    %459 = arith.addf %458, %457 : vector<8x64xf32>
    %460 = arith.divf %458, %459 : vector<8x64xf32>
    %461 = vector.extract_strided_slice %442 {offsets = [0, 128], sizes = [8, 64], strides = [1, 1]} : vector<8x192xf32> to vector<8x64xf32>
    %462 = vector.extract_strided_slice %444 {offsets = [0, 128], sizes = [8, 64], strides = [1, 1]} : vector<8x192xf32> to vector<8x64xf32>
    %463 = arith.mulf %452, %462 : vector<8x64xf32>
    %464 = arith.addf %461, %463 : vector<8x64xf32>
    %465 = math.tanh %464 : vector<8x64xf32>
    %cst_115 = arith.constant 1.000000e+00 : f32
    %466 = vector.broadcast %cst_115 : f32 to vector<8x64xf32>
    %467 = arith.subf %466, %460 : vector<8x64xf32>
    %468 = arith.mulf %467, %465 : vector<8x64xf32>
    %469 = arith.mulf %460, %410 : vector<8x64xf32>
    %470 = arith.addf %468, %469 : vector<8x64xf32>
    %c48 = arith.constant 48 : index
    %c0_116 = arith.constant 0 : index
    %471 = vector.load %arg29[%c48, %c0_116] : memref<64x64xf32, #tpu.memory_space<vmem>>, vector<8x64xf32>
    tpu.vector_store %arg29[%c48, %c0_116], %470 {strides = array<i32>} : memref<64x64xf32, #tpu.memory_space<vmem>>, vector<8x64xf32>,
    %472 = vector.extract_strided_slice %37 {offsets = [56, 0], sizes = [8, 192], strides = [1, 1]} : vector<64x192xf32> to vector<8x192xf32>
    %cst_117 = arith.constant dense<0.000000e+00> : vector<8x192xf32>
    %473 = tpu.matmul %440, %38, %cst_117 {dimension_numbers = #tpu.dot_dimension_numbers<[1], [0], [0], [1], [0, 0, 1, 1], [], []>} : vector<8x64xf32>, vector<64x192xf32>, vector<8x192xf32> -> vector<8x192xf32>
    %474 = arith.addf %473, %43 : vector<8x192xf32>
    %475 = vector.extract_strided_slice %472 {offsets = [0, 0], sizes = [8, 64], strides = [1, 1]} : vector<8x192xf32> to vector<8x64xf32>
    %476 = vector.extract_strided_slice %474 {offsets = [0, 0], sizes = [8, 64], strides = [1, 1]} : vector<8x192xf32> to vector<8x64xf32>
    %477 = arith.addf %475, %476 : vector<8x64xf32>
    %478 = arith.negf %477 : vector<8x64xf32>
    %479 = math.exp %478 : vector<8x64xf32>
    %cst_118 = arith.constant 1.000000e+00 : f32
    %480 = vector.broadcast %cst_118 : f32 to vector<8x64xf32>
    %481 = arith.addf %480, %479 : vector<8x64xf32>
    %482 = arith.divf %480, %481 : vector<8x64xf32>
    %483 = vector.extract_strided_slice %472 {offsets = [0, 64], sizes = [8, 64], strides = [1, 1]} : vector<8x192xf32> to vector<8x64xf32>
    %484 = vector.extract_strided_slice %474 {offsets = [0, 64], sizes = [8, 64], strides = [1, 1]} : vector<8x192xf32> to vector<8x64xf32>
    %485 = arith.addf %483, %484 : vector<8x64xf32>
    %486 = arith.negf %485 : vector<8x64xf32>
    %487 = math.exp %486 : vector<8x64xf32>
    %cst_119 = arith.constant 1.000000e+00 : f32
    %488 = vector.broadcast %cst_119 : f32 to vector<8x64xf32>
    %489 = arith.addf %488, %487 : vector<8x64xf32>
    %490 = arith.divf %488, %489 : vector<8x64xf32>
    %491 = vector.extract_strided_slice %472 {offsets = [0, 128], sizes = [8, 64], strides = [1, 1]} : vector<8x192xf32> to vector<8x64xf32>
    %492 = vector.extract_strided_slice %474 {offsets = [0, 128], sizes = [8, 64], strides = [1, 1]} : vector<8x192xf32> to vector<8x64xf32>
    %493 = arith.mulf %482, %492 : vector<8x64xf32>
    %494 = arith.addf %491, %493 : vector<8x64xf32>
    %495 = math.tanh %494 : vector<8x64xf32>
    %cst_120 = arith.constant 1.000000e+00 : f32
    %496 = vector.broadcast %cst_120 : f32 to vector<8x64xf32>
    %497 = arith.subf %496, %490 : vector<8x64xf32>
    %498 = arith.mulf %497, %495 : vector<8x64xf32>
    %499 = arith.mulf %490, %440 : vector<8x64xf32>
    %500 = arith.addf %498, %499 : vector<8x64xf32>
    %cst_121 = arith.constant dense<0.000000e+00> : vector<8x192xf32>
    %501 = tpu.matmul %500, %39, %cst_121 {dimension_numbers = #tpu.dot_dimension_numbers<[1], [0], [0], [1], [0, 0, 1, 1], [], []>} : vector<8x64xf32>, vector<64x192xf32>, vector<8x192xf32> -> vector<8x192xf32>
    %502 = arith.addf %501, %46 : vector<8x192xf32>
    %cst_122 = arith.constant dense<0.000000e+00> : vector<8x192xf32>
    %503 = tpu.matmul %470, %40, %cst_122 {dimension_numbers = #tpu.dot_dimension_numbers<[1], [0], [0], [1], [0, 0, 1, 1], [], []>} : vector<8x64xf32>, vector<64x192xf32>, vector<8x192xf32> -> vector<8x192xf32>
    %504 = arith.addf %503, %49 : vector<8x192xf32>
    %505 = vector.extract_strided_slice %502 {offsets = [0, 0], sizes = [8, 64], strides = [1, 1]} : vector<8x192xf32> to vector<8x64xf32>
    %506 = vector.extract_strided_slice %504 {offsets = [0, 0], sizes = [8, 64], strides = [1, 1]} : vector<8x192xf32> to vector<8x64xf32>
    %507 = arith.addf %505, %506 : vector<8x64xf32>
    %508 = arith.negf %507 : vector<8x64xf32>
    %509 = math.exp %508 : vector<8x64xf32>
    %cst_123 = arith.constant 1.000000e+00 : f32
    %510 = vector.broadcast %cst_123 : f32 to vector<8x64xf32>
    %511 = arith.addf %510, %509 : vector<8x64xf32>
    %512 = arith.divf %510, %511 : vector<8x64xf32>
    %513 = vector.extract_strided_slice %502 {offsets = [0, 64], sizes = [8, 64], strides = [1, 1]} : vector<8x192xf32> to vector<8x64xf32>
    %514 = vector.extract_strided_slice %504 {offsets = [0, 64], sizes = [8, 64], strides = [1, 1]} : vector<8x192xf32> to vector<8x64xf32>
    %515 = arith.addf %513, %514 : vector<8x64xf32>
    %516 = arith.negf %515 : vector<8x64xf32>
    %517 = math.exp %516 : vector<8x64xf32>
    %cst_124 = arith.constant 1.000000e+00 : f32
    %518 = vector.broadcast %cst_124 : f32 to vector<8x64xf32>
    %519 = arith.addf %518, %517 : vector<8x64xf32>
    %520 = arith.divf %518, %519 : vector<8x64xf32>
    %521 = vector.extract_strided_slice %502 {offsets = [0, 128], sizes = [8, 64], strides = [1, 1]} : vector<8x192xf32> to vector<8x64xf32>
    %522 = vector.extract_strided_slice %504 {offsets = [0, 128], sizes = [8, 64], strides = [1, 1]} : vector<8x192xf32> to vector<8x64xf32>
    %523 = arith.mulf %512, %522 : vector<8x64xf32>
    %524 = arith.addf %521, %523 : vector<8x64xf32>
    %525 = math.tanh %524 : vector<8x64xf32>
    %cst_125 = arith.constant 1.000000e+00 : f32
    %526 = vector.broadcast %cst_125 : f32 to vector<8x64xf32>
    %527 = arith.subf %526, %520 : vector<8x64xf32>
    %528 = arith.mulf %527, %525 : vector<8x64xf32>
    %529 = arith.mulf %520, %470 : vector<8x64xf32>
    %530 = arith.addf %528, %529 : vector<8x64xf32>
    %c56 = arith.constant 56 : index
    %c0_126 = arith.constant 0 : index
    %531 = vector.load %arg29[%c56, %c0_126] : memref<64x64xf32, #tpu.memory_space<vmem>>, vector<8x64xf32>
    tpu.vector_store %arg29[%c56, %c0_126], %530 {strides = array<i32>} : memref<64x64xf32, #tpu.memory_space<vmem>>, vector<8x64xf32>,
    %c0_127 = arith.constant 0 : index
    %c0_128 = arith.constant 0 : index
    %532 = vector.load %arg29[%c0_127, %c0_128] : memref<64x64xf32, #tpu.memory_space<vmem>>, vector<64x64xf32>
    %c0_129 = arith.constant 0 : index
    %c0_130 = arith.constant 0 : index
    %533 = vector.load %arg20[%c0_129, %c0_130] : memref<64x16xf32, #tpu.memory_space<vmem>>, vector<64x16xf32>
    %cst_131 = arith.constant dense<0.000000e+00> : vector<64x16xf32>
    %534 = tpu.matmul %532, %533, %cst_131 {dimension_numbers = #tpu.dot_dimension_numbers<[1], [0], [0], [1], [0, 0, 1, 1], [], []>} : vector<64x64xf32>, vector<64x16xf32>, vector<64x16xf32> -> vector<64x16xf32>
    %c0_132 = arith.constant 0 : index
    %c0_133 = arith.constant 0 : index
    %535 = vector.load %arg21[%c0_132, %c0_133] : memref<1x16xf32, #tpu.memory_space<vmem>>, vector<1x16xf32>
    %536 = vector.broadcast %535 : vector<1x16xf32> to vector<64x16xf32>
    %537 = arith.addf %534, %536 : vector<64x16xf32>
    %538 = vector.extract_strided_slice %537 {offsets = [0, 0], sizes = [64, 8], strides = [1, 1]} : vector<64x16xf32> to vector<64x8xf32>
    %539 = vector.extract_strided_slice %537 {offsets = [0, 8], sizes = [64, 8], strides = [1, 1]} : vector<64x16xf32> to vector<64x8xf32>
    %c0_134 = arith.constant 0 : index
    %c0_135 = arith.constant 0 : index
    %540 = vector.load %arg2[%c0_134, %c0_135] : memref<64x8xf32, #tpu.memory_space<vmem>>, vector<64x8xf32>
    %cst_136 = arith.constant 5.000000e-01 : f32
    %541 = vector.broadcast %cst_136 : f32 to vector<64x8xf32>
    %542 = arith.mulf %541, %539 : vector<64x8xf32>
    %543 = math.exp %542 : vector<64x8xf32>
    %544 = arith.mulf %540, %543 : vector<64x8xf32>
    %545 = arith.addf %538, %544 : vector<64x8xf32>
    %c0_137 = arith.constant 0 : index
    %c0_138 = arith.constant 0 : index
    %546 = vector.load %arg22[%c0_137, %c0_138] : memref<8x32xf32, #tpu.memory_space<vmem>>, vector<8x32xf32>
    %cst_139 = arith.constant dense<0.000000e+00> : vector<64x32xf32>
    %547 = tpu.matmul %545, %546, %cst_139 {dimension_numbers = #tpu.dot_dimension_numbers<[1], [0], [0], [1], [0, 0, 1, 1], [], []>} : vector<64x8xf32>, vector<8x32xf32>, vector<64x32xf32> -> vector<64x32xf32>
    %c0_140 = arith.constant 0 : index
    %c0_141 = arith.constant 0 : index
    %548 = vector.load %arg23[%c0_140, %c0_141] : memref<1x32xf32, #tpu.memory_space<vmem>>, vector<1x32xf32>
    %549 = vector.broadcast %548 : vector<1x32xf32> to vector<64x32xf32>
    %550 = arith.addf %547, %549 : vector<64x32xf32>
    %cst_142 = arith.constant 0.000000e+00 : f32
    %551 = vector.broadcast %cst_142 : f32 to vector<64x32xf32>
    %552 = arith.maximumf %550, %551 : vector<64x32xf32>
    %c0_143 = arith.constant 0 : index
    %c0_144 = arith.constant 0 : index
    %553 = vector.load %arg24[%c0_143, %c0_144] : memref<32x32xf32, #tpu.memory_space<vmem>>, vector<32x32xf32>
    %cst_145 = arith.constant dense<0.000000e+00> : vector<64x32xf32>
    %554 = tpu.matmul %552, %553, %cst_145 {dimension_numbers = #tpu.dot_dimension_numbers<[1], [0], [0], [1], [0, 0, 1, 1], [], []>} : vector<64x32xf32>, vector<32x32xf32>, vector<64x32xf32> -> vector<64x32xf32>
    %c0_146 = arith.constant 0 : index
    %c0_147 = arith.constant 0 : index
    %555 = vector.load %arg25[%c0_146, %c0_147] : memref<1x32xf32, #tpu.memory_space<vmem>>, vector<1x32xf32>
    %556 = vector.broadcast %555 : vector<1x32xf32> to vector<64x32xf32>
    %557 = arith.addf %554, %556 : vector<64x32xf32>
    %c0_148 = arith.constant 0 : index
    %c0_149 = arith.constant 0 : index
    %558 = vector.load %arg26[%c0_148, %c0_149] : memref<32x13xf32, #tpu.memory_space<vmem>>, vector<32x13xf32>
    %cst_150 = arith.constant dense<0.000000e+00> : vector<64x13xf32>
    %559 = tpu.matmul %557, %558, %cst_150 {dimension_numbers = #tpu.dot_dimension_numbers<[1], [0], [0], [1], [0, 0, 1, 1], [], []>} : vector<64x32xf32>, vector<32x13xf32>, vector<64x13xf32> -> vector<64x13xf32>
    %c0_151 = arith.constant 0 : index
    %c0_152 = arith.constant 0 : index
    %560 = vector.load %arg27[%c0_151, %c0_152] : memref<1x13xf32, #tpu.memory_space<vmem>>, vector<1x13xf32>
    %561 = vector.broadcast %560 : vector<1x13xf32> to vector<64x13xf32>
    %562 = arith.addf %559, %561 : vector<64x13xf32>
    %c0_153 = arith.constant 0 : index
    %c0_154 = arith.constant 0 : index
    %563 = vector.load %arg28[%c0_153, %c0_154] : memref<64x37xf32, #tpu.memory_space<vmem>>, vector<64x8xf32>
    tpu.vector_store %arg28[%c0_153, %c0_154], %538 {strides = array<i32>} : memref<64x37xf32, #tpu.memory_space<vmem>>, vector<64x8xf32>,
    %c0_155 = arith.constant 0 : index
    %c8_156 = arith.constant 8 : index
    %564 = vector.load %arg28[%c0_155, %c8_156] : memref<64x37xf32, #tpu.memory_space<vmem>>, vector<64x8xf32>
    tpu.vector_store %arg28[%c0_155, %c8_156], %539 {strides = array<i32>} : memref<64x37xf32, #tpu.memory_space<vmem>>, vector<64x8xf32>,
    %c0_157 = arith.constant 0 : index
    %c16_158 = arith.constant 16 : index
    %565 = vector.load %arg28[%c0_157, %c16_158] : memref<64x37xf32, #tpu.memory_space<vmem>>, vector<64x8xf32>
    tpu.vector_store %arg28[%c0_157, %c16_158], %545 {strides = array<i32>} : memref<64x37xf32, #tpu.memory_space<vmem>>, vector<64x8xf32>,
    %566 = vector.extract_strided_slice %562 {offsets = [0, 0], sizes = [64, 10], strides = [1, 1]} : vector<64x13xf32> to vector<64x10xf32>
    %c0_159 = arith.constant 0 : index
    %c24_160 = arith.constant 24 : index
    %567 = vector.load %arg28[%c0_159, %c24_160] : memref<64x37xf32, #tpu.memory_space<vmem>>, vector<64x10xf32>
    tpu.vector_store %arg28[%c0_159, %c24_160], %566 {strides = array<i32>} : memref<64x37xf32, #tpu.memory_space<vmem>>, vector<64x10xf32>,
    %568 = vector.extract_strided_slice %562 {offsets = [0, 10], sizes = [64, 3], strides = [1, 1]} : vector<64x13xf32> to vector<64x3xf32>
    %569 = arith.negf %568 : vector<64x3xf32>
    %570 = math.exp %569 : vector<64x3xf32>
    %cst_161 = arith.constant 1.000000e+00 : f32
    %571 = vector.broadcast %cst_161 : f32 to vector<64x3xf32>
    %572 = arith.addf %571, %570 : vector<64x3xf32>
    %573 = arith.divf %571, %572 : vector<64x3xf32>
    %c0_162 = arith.constant 0 : index
    %c34 = arith.constant 34 : index
    %574 = vector.load %arg28[%c0_162, %c34] : memref<64x37xf32, #tpu.memory_space<vmem>>, vector<64x3xf32>
    tpu.vector_store %arg28[%c0_162, %c34], %573 {strides = array<i32>} : memref<64x37xf32, #tpu.memory_space<vmem>>, vector<64x3xf32>,
    return
  }
}

</mosaic_0001>

<llo_original>
// kernel: deapstack_forward.1
$region0: #{deapstack_forward.1}
  #allocation0 [shape = 'u32[]', space=smem, size = 0x4, offset = 0x4, fixed_abs, tag = 'smem constant byte address 0x4 - core index']
  #allocation1 [shape = 'u32[144,128]{1,0:T(1,128)}', space=vmem, size = 0x12000, scoped, tag = 'internal scratch']
  #allocation2 [shape = 'f32[64,64]{1,0:T(8,128)}', space=vmem, size = 0x8000, scoped, tag = 'scratch operand']
  %s0 = inlined_call_operand.vmem [shape: f32[64,16], index: 0, kind: input, shape index: {}]
  %s1 = inlined_call_operand.vmem [shape: f32[64,48], index: 1, kind: input, shape index: {}]
  %s2 = inlined_call_operand.vmem [shape: f32[64,8], index: 2, kind: input, shape index: {}]
  %s3 = inlined_call_operand.vmem [shape: f32[48,48], index: 3, kind: input, shape index: {}]
  %s4 = inlined_call_operand.vmem [shape: f32[1,48], index: 4, kind: input, shape index: {}]
  %s5 = inlined_call_operand.vmem [shape: f32[48,48], index: 5, kind: input, shape index: {}]
  %s6 = inlined_call_operand.vmem [shape: f32[1,48], index: 6, kind: input, shape index: {}]
  %s7 = inlined_call_operand.vmem [shape: f32[16,4], index: 7, kind: input, shape index: {}]
  %s8 = inlined_call_operand.vmem [shape: f32[48,4], index: 8, kind: input, shape index: {}]
  %s9 = inlined_call_operand.vmem [shape: f32[1,4], index: 9, kind: input, shape index: {}]
  %s10 = inlined_call_operand.vmem [shape: f32[4,16], index: 10, kind: input, shape index: {}]
  %s11 = inlined_call_operand.vmem [shape: f32[1,16], index: 11, kind: input, shape index: {}]
  %s12 = inlined_call_operand.vmem [shape: f32[16,192], index: 12, kind: input, shape index: {}]
  %s13 = inlined_call_operand.vmem [shape: f32[1,192], index: 13, kind: input, shape index: {}]
  %s14 = inlined_call_operand.vmem [shape: f32[64,192], index: 14, kind: input, shape index: {}]
  %s15 = inlined_call_operand.vmem [shape: f32[1,192], index: 15, kind: input, shape index: {}]
  %s16 = inlined_call_operand.vmem [shape: f32[64,192], index: 16, kind: input, shape index: {}]
  %s17 = inlined_call_operand.vmem [shape: f32[1,192], index: 17, kind: input, shape index: {}]
  %s18 = inlined_call_operand.vmem [shape: f32[64,192], index: 18, kind: input, shape index: {}]
  %s19 = inlined_call_operand.vmem [shape: f32[1,192], index: 19, kind: input, shape index: {}]
  %s20 = inlined_call_operand.vmem [shape: f32[64,16], index: 20, kind: input, shape index: {}]
  %s21 = inlined_call_operand.vmem [shape: f32[1,16], index: 21, kind: input, shape index: {}]
  %s22 = inlined_call_operand.vmem [shape: f32[8,32], index: 22, kind: input, shape index: {}]
  %s23 = inlined_call_operand.vmem [shape: f32[1,32], index: 23, kind: input, shape index: {}]
  %s24 = inlined_call_operand.vmem [shape: f32[32,32], index: 24, kind: input, shape index: {}]
  %s25 = inlined_call_operand.vmem [shape: f32[1,32], index: 25, kind: input, shape index: {}]
  %s26 = inlined_call_operand.vmem [shape: f32[32,13], index: 26, kind: input, shape index: {}]
  %s27 = inlined_call_operand.vmem [shape: f32[1,13], index: 27, kind: input, shape index: {}]
  %s28 = inlined_call_operand.vmem [shape: f32[64,37], index: 28, kind: output, shape index: {}]
  %s29 = sld [smem:[#allocation0]]
  $region122: #{deapstack_forward.1} parent=0
    _
  %s31 = ssub.s32 1, %s29
  %s32 = scalar_select 0, %s31, %s29
  // Predicated region
  $region2: #{deapstack_forward.1} parent=0 // pred_check
    _
  $region3: #{deapstack_forward.1} parent=0 // pred_check_branch
    %34 = sbr.rel (0) target = $region5
  $region4: #{deapstack_forward.1} parent=0 // pred_region
    _
  $region5: #{deapstack_forward.1} parent=0 // pred_fallthru
    _
  // Predicated region
  $region6: #{deapstack_forward.1} parent=0 // pred_check
    _
  $region7: #{deapstack_forward.1} parent=0 // pred_check_branch
    %36 = sbr.rel (0) target = $region9
  $region8: #{deapstack_forward.1} parent=0 // pred_region
    _
  $region9: #{deapstack_forward.1} parent=0 // pred_fallthru
    _
  // Predicated region
  $region10: #{deapstack_forward.1} parent=0 // pred_check
    _
  $region11: #{deapstack_forward.1} parent=0 // pred_check_branch
    %38 = sbr.rel (0) target = $region13
  $region12: #{deapstack_forward.1} parent=0 // pred_region
    _
  $region13: #{deapstack_forward.1} parent=0 // pred_fallthru
    _
  // Predicated region
  $region14: #{deapstack_forward.1} parent=0 // pred_check
    _
  $region15: #{deapstack_forward.1} parent=0 // pred_check_branch
    %40 = sbr.rel (0) target = $region17
  $region16: #{deapstack_forward.1} parent=0 // pred_region
    _
  $region17: #{deapstack_forward.1} parent=0 // pred_fallthru
    _
  // Predicated region
  $region18: #{deapstack_forward.1} parent=0 // pred_check
    _
  $region19: #{deapstack_forward.1} parent=0 // pred_check_branch
    %42 = sbr.rel (0) target = $region21
  $region20: #{deapstack_forward.1} parent=0 // pred_region
    _
  $region21: #{deapstack_forward.1} parent=0 // pred_fallthru
    _
  // Predicated region
  $region22: #{deapstack_forward.1} parent=0 // pred_check
    _
  $region23: #{deapstack_forward.1} parent=0 // pred_check_branch
    %44 = sbr.rel (0) target = $region25
  $region24: #{deapstack_forward.1} parent=0 // pred_region
    _
  $region25: #{deapstack_forward.1} parent=0 // pred_fallthru
    _
  // Predicated region
  $region26: #{deapstack_forward.1} parent=0 // pred_check
    _
  $region27: #{deapstack_forward.1} parent=0 // pred_check_branch
    %46 = sbr.rel (0) target = $region29
  $region28: #{deapstack_forward.1} parent=0 // pred_region
    _
  $region29: #{deapstack_forward.1} parent=0 // pred_fallthru
    _
  // Predicated region
  $region30: #{deapstack_forward.1} parent=0 // pred_check
    _
  $region31: #{deapstack_forward.1} parent=0 // pred_check_branch
    %48 = sbr.rel (0) target = $region33
  $region32: #{deapstack_forward.1} parent=0 // pred_region
    _
  $region33: #{deapstack_forward.1} parent=0 // pred_fallthru
    _
  // Predicated region
  $region34: #{deapstack_forward.1} parent=0 // pred_check
    _
  $region35: #{deapstack_forward.1} parent=0 // pred_check_branch
    %50 = sbr.rel (0) target = $region37
  $region36: #{deapstack_forward.1} parent=0 // pred_region
    _
  $region37: #{deapstack_forward.1} parent=0 // pred_fallthru
    _
  // Predicated region
  $region38: #{deapstack_forward.1} parent=0 // pred_check
    _
  $region39: #{deapstack_forward.1} parent=0 // pred_check_branch
    %52 = sbr.rel (0) target = $region41
  $region40: #{deapstack_forward.1} parent=0 // pred_region
    _
  $region41: #{deapstack_forward.1} parent=0 // pred_fallthru
    _
  // Predicated region
  $region42: #{deapstack_forward.1} parent=0 // pred_check
    _
  $region43: #{deapstack_forward.1} parent=0 // pred_check_branch
    %54 = sbr.rel (0) target = $region45
  $region44: #{deapstack_forward.1} parent=0 // pred_region
    _
  $region45: #{deapstack_forward.1} parent=0 // pred_fallthru
    _
  // Predicated region
  $region46: #{deapstack_forward.1} parent=0 // pred_check
    _
  $region47: #{deapstack_forward.1} parent=0 // pred_check_branch
    %56 = sbr.rel (0) target = $region49
  $region48: #{deapstack_forward.1} parent=0 // pred_region
    _
  $region49: #{deapstack_forward.1} parent=0 // pred_fallthru
    _
  // Predicated region
  $region50: #{deapstack_forward.1} parent=0 // pred_check
    _
  $region51: #{deapstack_forward.1} parent=0 // pred_check_branch
    %58 = sbr.rel (0) target = $region53
  $region52: #{deapstack_forward.1} parent=0 // pred_region
    _
  $region53: #{deapstack_forward.1} parent=0 // pred_fallthru
    _
  // Predicated region
  $region54: #{deapstack_forward.1} parent=0 // pred_check
    _
  $region55: #{deapstack_forward.1} parent=0 // pred_check_branch
    %60 = sbr.rel (0) target = $region57
  $region56: #{deapstack_forward.1} parent=0 // pred_region
    _
  $region57: #{deapstack_forward.1} parent=0 // pred_fallthru
    _
  // Predicated region
  $region58: #{deapstack_forward.1} parent=0 // pred_check
    _
  $region59: #{deapstack_forward.1} parent=0 // pred_check_branch
    %62 = sbr.rel (0) target = $region61
  $region60: #{deapstack_forward.1} parent=0 // pred_region
    _
  $region61: #{deapstack_forward.1} parent=0 // pred_fallthru
    _
  // Predicated region
  $region62: #{deapstack_forward.1} parent=0 // pred_check
    _
  $region63: #{deapstack_forward.1} parent=0 // pred_check_branch
    %64 = sbr.rel (0) target = $region65
  $region64: #{deapstack_forward.1} parent=0 // pred_region
    _
  $region65: #{deapstack_forward.1} parent=0 // pred_fallthru
    _
  // Predicated region
  $region66: #{deapstack_forward.1} parent=0 // pred_check
    _
  $region67: #{deapstack_forward.1} parent=0 // pred_check_branch
    %66 = sbr.rel (0) target = $region69
  $region68: #{deapstack_forward.1} parent=0 // pred_region
    _
  $region69: #{deapstack_forward.1} parent=0 // pred_fallthru
    _
  // Predicated region
  $region70: #{deapstack_forward.1} parent=0 // pred_check
    _
  $region71: #{deapstack_forward.1} parent=0 // pred_check_branch
    %68 = sbr.rel (0) target = $region73
  $region72: #{deapstack_forward.1} parent=0 // pred_region
    _
  $region73: #{deapstack_forward.1} parent=0 // pred_fallthru
    _
  // Predicated region
  $region74: #{deapstack_forward.1} parent=0 // pred_check
    _
  $region75: #{deapstack_forward.1} parent=0 // pred_check_branch
    %70 = sbr.rel (0) target = $region77
  $region76: #{deapstack_forward.1} parent=0 // pred_region
    _
  $region77: #{deapstack_forward.1} parent=0 // pred_fallthru
    _
  // Predicated region
  $region78: #{deapstack_forward.1} parent=0 // pred_check
    _
  $region79: #{deapstack_forward.1} parent=0 // pred_check_branch
    %72 = sbr.rel (0) target = $region81
  $region80: #{deapstack_forward.1} parent=0 // pred_region
    _
  $region81: #{deapstack_forward.1} parent=0 // pred_fallthru
    _
  // Predicated region
  $region82: #{deapstack_forward.1} parent=0 // pred_check
    _
  $region83: #{deapstack_forward.1} parent=0 // pred_check_branch
    %74 = sbr.rel (0) target = $region85
  $region84: #{deapstack_forward.1} parent=0 // pred_region
    _
  $region85: #{deapstack_forward.1} parent=0 // pred_fallthru
    _
  // Predicated region
  $region86: #{deapstack_forward.1} parent=0 // pred_check
    _
  $region87: #{deapstack_forward.1} parent=0 // pred_check_branch
    %76 = sbr.rel (0) target = $region89
  $region88: #{deapstack_forward.1} parent=0 // pred_region
    _
  $region89: #{deapstack_forward.1} parent=0 // pred_fallthru
    _
  // Predicated region
  $region90: #{deapstack_forward.1} parent=0 // pred_check
    _
  $region91: #{deapstack_forward.1} parent=0 // pred_check_branch
    %78 = sbr.rel (0) target = $region93
  $region92: #{deapstack_forward.1} parent=0 // pred_region
    _
  $region93: #{deapstack_forward.1} parent=0 // pred_fallthru
    _
  // Predicated region
  $region94: #{deapstack_forward.1} parent=0 // pred_check
    _
  $region95: #{deapstack_forward.1} parent=0 // pred_check_branch
    %80 = sbr.rel (0) target = $region97
  $region96: #{deapstack_forward.1} parent=0 // pred_region
    _
  $region97: #{deapstack_forward.1} parent=0 // pred_fallthru
    _
  // Predicated region
  $region98: #{deapstack_forward.1} parent=0 // pred_check
    _
  $region99: #{deapstack_forward.1} parent=0 // pred_check_branch
    %82 = sbr.rel (0) target = $region101
  $region100: #{deapstack_forward.1} parent=0 // pred_region
    _
  $region101: #{deapstack_forward.1} parent=0 // pred_fallthru
    _
  // Predicated region
  $region102: #{deapstack_forward.1} parent=0 // pred_check
    _
  $region103: #{deapstack_forward.1} parent=0 // pred_check_branch
    %84 = sbr.rel (0) target = $region105
  $region104: #{deapstack_forward.1} parent=0 // pred_region
    _
  $region105: #{deapstack_forward.1} parent=0 // pred_fallthru
    _
  // Predicated region
  $region106: #{deapstack_forward.1} parent=0 // pred_check
    _
  $region107: #{deapstack_forward.1} parent=0 // pred_check_branch
    %86 = sbr.rel (0) target = $region109
  $region108: #{deapstack_forward.1} parent=0 // pred_region
    _
  $region109: #{deapstack_forward.1} parent=0 // pred_fallthru
    _
  // Predicated region
  $region110: #{deapstack_forward.1} parent=0 // pred_check
    _
  $region111: #{deapstack_forward.1} parent=0 // pred_check_branch
    %88 = sbr.rel (0) target = $region113
  $region112: #{deapstack_forward.1} parent=0 // pred_region
    _
  $region113: #{deapstack_forward.1} parent=0 // pred_fallthru
    _
  %v89 = vld [vmem:[%s1] sm:$0xff]
  %v90 = vld [vmem:[%s1 + $0x8] sm:$0xff]
  %v91 = vld [vmem:[%s1 + $0x10] sm:$0xff]
  %v92 = vld [vmem:[%s1 + $0x18] sm:$0xff]
  %v93 = vld [vmem:[%s1 + $0x20] sm:$0xff]
  %v94 = vld [vmem:[%s1 + $0x28] sm:$0xff]
  %v95 = vld [vmem:[%s1 + $0x30] sm:$0xff]
  %v96 = vld [vmem:[%s1 + $0x38] sm:$0xff]
  %v97 = vld [vmem:[%s3] sm:$0xff]
  %v98 = vld [vmem:[%s3 + $0x8] sm:$0xff]
  %v99 = vld [vmem:[%s3 + $0x10] sm:$0xff]
  %v100 = vld [vmem:[%s3 + $0x18] sm:$0xff]
  %v101 = vld [vmem:[%s3 + $0x20] sm:$0xff]
  %v102 = vld [vmem:[%s3 + $0x28] sm:$0xff]
  %v103 = vld [vmem:[%s4] sm:$0x1]
  %v105 = vlaneseq
  %v106 = vshrl.u32 %v105, 7
  %v107 = vsub.s32 0, %v106
  %v108 = vrot.slane %v103, %v107
  %vm110 = vcmask 392192
  %v112 = vsel %vm110, %v89, 0
  %v115 = vsel %vm110, %v90, 0
  %v118 = vsel %vm110, %v91, 0
  %v121 = vsel %vm110, %v92, 0
  %v124 = vsel %vm110, %v93, 0
  %v127 = vsel %vm110, %v94, 0
  %v130 = vsel %vm110, %v95, 0
  %v133 = vsel %vm110, %v96, 0
  %135 = vmatprep.subr.mxu0 0.0
  %136 = vmatpush1.msra.mxu0 0.0
  %137 = vmatprep.subr.mxu0 0.0
  %138 = vmatpush1.msra.mxu0 0.0
  %139 = vmatprep.subr.mxu0 0.0
  %140 = vmatpush1.msra.mxu0 0.0
  %141 = vmatprep.subr.mxu0 0.0
  %142 = vmatpush1.msra.mxu0 0.0
  %143 = vmatprep.subr.mxu0 0.0
  %144 = vmatpush1.msra.mxu0 0.0
  %145 = vmatprep.subr.mxu0 0.0
  %146 = vmatpush1.msra.mxu0 0.0
  %147 = vmatprep.subr.mxu0 0.0
  %148 = vmatpush1.msra.mxu0 0.0
  %149 = vmatprep.subr.mxu0 0.0
  %150 = vmatpush1.msra.mxu0 0.0
  %151 = vmatprep.subr.mxu0 0.0
  %152 = vmatpush1.msra.mxu0 0.0
  %153 = vmatprep.subr.mxu0 0.0
  %154 = vmatpush1.msra.mxu0 0.0
  %155 = vmatprep.subr.mxu0 0.0
  %156 = vmatpush1.msra.mxu0 %v102
  %157 = vmatprep.subr.mxu0 0.0
  %158 = vmatpush1.msra.mxu0 %v101
  %159 = vmatprep.subr.mxu0 0.0
  %160 = vmatpush1.msra.mxu0 %v100
  %161 = vmatprep.subr.mxu0 0.0
  %162 = vmatpush1.msra.mxu0 %v99
  %163 = vmatprep.subr.mxu0 0.0
  %164 = vmatpush1.msra.mxu0 %v98
  %165 = vmatprep.subr.mxu0 0.0
  %166 = vmatpush1.msra.mxu0 %v97
  %167 = vmatprep.subr.mxu0 0.0
  %168 = vmatpush2.msra.mxu0 0.0
  %169 = vmatprep.subr.mxu0 0.0
  %170 = vmatpush2.msra.mxu0 0.0
  %171 = vmatprep.subr.mxu0 0.0
  %172 = vmatpush2.msra.mxu0 0.0
  %173 = vmatprep.subr.mxu0 0.0
  %174 = vmatpush2.msra.mxu0 0.0
  %175 = vmatprep.subr.mxu0 0.0
  %176 = vmatpush2.msra.mxu0 0.0
  %177 = vmatprep.subr.mxu0 0.0
  %178 = vmatpush2.msra.mxu0 0.0
  %179 = vmatprep.subr.mxu0 0.0
  %180 = vmatpush2.msra.mxu0 0.0
  %181 = vmatprep.subr.mxu0 0.0
  %182 = vmatpush2.msra.mxu0 0.0
  %183 = vmatprep.subr.mxu0 0.0
  %184 = vmatpush2.msra.mxu0 0.0
  %185 = vmatprep.subr.mxu0 0.0
  %186 = vmatpush2.msra.mxu0 0.0
  %187 = vmatprep.subr.mxu0 0.0
  %188 = vmatpush2.msra.mxu0 0.0
  %189 = vmatprep.subr.mxu0 0.0
  %190 = vmatpush2.msra.mxu0 0.0
  %191 = vmatprep.subr.mxu0 0.0
  %192 = vmatpush2.msra.mxu0 0.0
  %193 = vmatprep.subr.mxu0 0.0
  %194 = vmatpush2.msra.mxu0 0.0
  %195 = vmatprep.subr.mxu0 0.0
  %196 = vmatpush2.msra.mxu0 0.0
  %197 = vmatprep.subr.mxu0 0.0
  %198 = vmatpush2.msra.mxu0 0.0
  %199 = vmatprep.mubr.f32.mxu0 0.0
  %200 = vmatmul.mubr.f32.gmra.mxu0 %v112
  %v201 = vpop.f32.mrf.mxu0
  %v202 = vadd.f32 %v108, %v201
  %v203 = vpop.f32.mrf.mxu0
  %204 = vmatprep.mubr.f32.mxu0 0.0
  %205 = vmatmul.mubr.f32.gmra.mxu0 %v115
  %v206 = vpop.f32.mrf.mxu0
  %v207 = vadd.f32 %v108, %v206
  %v208 = vpop.f32.mrf.mxu0
  %209 = vmatprep.mubr.f32.mxu0 0.0
  %210 = vmatmul.mubr.f32.gmra.mxu0 %v118
  %v211 = vpop.f32.mrf.mxu0
  %v212 = vadd.f32 %v108, %v211
  %v213 = vpop.f32.mrf.mxu0
  %214 = vmatprep.mubr.f32.mxu0 0.0
  %215 = vmatmul.mubr.f32.gmra.mxu0 %v121
  %v216 = vpop.f32.mrf.mxu0
  %v217 = vadd.f32 %v108, %v216
  %v218 = vpop.f32.mrf.mxu0
  %219 = vmatprep.mubr.f32.mxu0 0.0
  %220 = vmatmul.mubr.f32.gmra.mxu0 %v124
  %v221 = vpop.f32.mrf.mxu0
  %v222 = vadd.f32 %v108, %v221
  %v223 = vpop.f32.mrf.mxu0
  %224 = vmatprep.mubr.f32.mxu0 0.0
  %225 = vmatmul.mubr.f32.gmra.mxu0 %v127
  %v226 = vpop.f32.mrf.mxu0
  %v227 = vadd.f32 %v108, %v226
  %v228 = vpop.f32.mrf.mxu0
  %229 = vmatprep.mubr.f32.mxu0 0.0
  %230 = vmatmul.mubr.f32.gmra.mxu0 %v130
  %v231 = vpop.f32.mrf.mxu0
  %v232 = vadd.f32 %v108, %v231
  %v233 = vpop.f32.mrf.mxu0
  %234 = vmatprep.mubr.f32.mxu0 0.0
  %235 = vmatmul.mubr.f32.gmra.mxu0 %v133
  %v236 = vpop.f32.mrf.mxu0
  %v237 = vadd.f32 %v108, %v236
  %v238 = vpop.f32.mrf.mxu0
  %239 = vdwg.mxu0
  %v240 = vxor.u32 %v202, 2147483648
  %v241 = vxor.u32 %v207, 2147483648
  %v242 = vxor.u32 %v212, 2147483648
  %v243 = vxor.u32 %v217, 2147483648
  %v244 = vxor.u32 %v222, 2147483648
  %v245 = vxor.u32 %v227, 2147483648
  %v246 = vxor.u32 %v232, 2147483648
  %v247 = vxor.u32 %v237, 2147483648
  %v248 = vmul.f32 %v240, 1.442695
  %v249 = vpow.pop %v248
  %v250 = vmul.f32 %v241, 1.442695
  %v251 = vpow.pop %v250
  %v252 = vmul.f32 %v242, 1.442695
  %v253 = vpow.pop %v252
  %v254 = vmul.f32 %v243, 1.442695
  %v255 = vpow.pop %v254
  %v256 = vmul.f32 %v244, 1.442695
  %v257 = vpow.pop %v256
  %v258 = vmul.f32 %v245, 1.442695
  %v259 = vpow.pop %v258
  %v260 = vmul.f32 %v246, 1.442695
  %v261 = vpow.pop %v260
  %v262 = vmul.f32 %v247, 1.442695
  %v263 = vpow.pop %v262
  %v264 = vadd.f32 %v249, 1.0
  %v265 = vadd.f32 %v251, 1.0
  %v266 = vadd.f32 %v253, 1.0
  %v267 = vadd.f32 %v255, 1.0
  %v268 = vadd.f32 %v257, 1.0
  %v269 = vadd.f32 %v259, 1.0
  %v270 = vadd.f32 %v261, 1.0
  %v271 = vadd.f32 %v263, 1.0
  %v272 = vrcp.pop %v264
  %v273 = vmul.f32 1.0, %v272
  %v274 = vrcp.pop %v265
  %v275 = vmul.f32 1.0, %v274
  %v276 = vrcp.pop %v266
  %v277 = vmul.f32 1.0, %v276
  %v278 = vrcp.pop %v267
  %v279 = vmul.f32 1.0, %v278
  %v280 = vrcp.pop %v268
  %v281 = vmul.f32 1.0, %v280
  %v282 = vrcp.pop %v269
  %v283 = vmul.f32 1.0, %v282
  %v284 = vrcp.pop %v270
  %v285 = vmul.f32 1.0, %v284
  %v286 = vrcp.pop %v271
  %v287 = vmul.f32 1.0, %v286
  %v288 = vmul.f32 %v202, %v273
  %v289 = vmul.f32 %v207, %v275
  %v290 = vmul.f32 %v212, %v277
  %v291 = vmul.f32 %v217, %v279
  %v292 = vmul.f32 %v222, %v281
  %v293 = vmul.f32 %v227, %v283
  %v294 = vmul.f32 %v232, %v285
  %v295 = vmul.f32 %v237, %v287
  %v296 = vld [vmem:[%s5] sm:$0xff]
  %v297 = vld [vmem:[%s5 + $0x8] sm:$0xff]
  %v298 = vld [vmem:[%s5 + $0x10] sm:$0xff]
  %v299 = vld [vmem:[%s5 + $0x18] sm:$0xff]
  %v300 = vld [vmem:[%s5 + $0x20] sm:$0xff]
  %v301 = vld [vmem:[%s5 + $0x28] sm:$0xff]
  %v302 = vld [vmem:[%s6] sm:$0x1]
  %v304 = vlaneseq
  %v305 = vshrl.u32 %v304, 7
  %v306 = vsub.s32 0, %v305
  %v307 = vrot.slane %v302, %v306
  %v310 = vsel %vm110, %v288, 0
  %v313 = vsel %vm110, %v289, 0
  %v316 = vsel %vm110, %v290, 0
  %v319 = vsel %vm110, %v291, 0
  %v322 = vsel %vm110, %v292, 0
  %v325 = vsel %vm110, %v293, 0
  %v328 = vsel %vm110, %v294, 0
  %v331 = vsel %vm110, %v295, 0
  %333 = vmatprep.subr.mxu0 0.0
  %334 = vmatpush1.msra.mxu0 0.0
  %335 = vmatprep.subr.mxu0 0.0
  %336 = vmatpush1.msra.mxu0 0.0
  %337 = vmatprep.subr.mxu0 0.0
  %338 = vmatpush1.msra.mxu0 0.0
  %339 = vmatprep.subr.mxu0 0.0
  %340 = vmatpush1.msra.mxu0 0.0
  %341 = vmatprep.subr.mxu0 0.0
  %342 = vmatpush1.msra.mxu0 0.0
  %343 = vmatprep.subr.mxu0 0.0
  %344 = vmatpush1.msra.mxu0 0.0
  %345 = vmatprep.subr.mxu0 0.0
  %346 = vmatpush1.msra.mxu0 0.0
  %347 = vmatprep.subr.mxu0 0.0
  %348 = vmatpush1.msra.mxu0 0.0
  %349 = vmatprep.subr.mxu0 0.0
  %350 = vmatpush1.msra.mxu0 0.0
  %351 = vmatprep.subr.mxu0 0.0
  %352 = vmatpush1.msra.mxu0 0.0
  %353 = vmatprep.subr.mxu0 0.0
  %354 = vmatpush1.msra.mxu0 %v301
  %355 = vmatprep.subr.mxu0 0.0
  %356 = vmatpush1.msra.mxu0 %v300
  %357 = vmatprep.subr.mxu0 0.0
  %358 = vmatpush1.msra.mxu0 %v299
  %359 = vmatprep.subr.mxu0 0.0
  %360 = vmatpush1.msra.mxu0 %v298
  %361 = vmatprep.subr.mxu0 0.0
  %362 = vmatpush1.msra.mxu0 %v297
  %363 = vmatprep.subr.mxu0 0.0
  %364 = vmatpush1.msra.mxu0 %v296
  %365 = vmatprep.subr.mxu0 0.0
  %366 = vmatpush2.msra.mxu0 0.0
  %367 = vmatprep.subr.mxu0 0.0
  %368 = vmatpush2.msra.mxu0 0.0
  %369 = vmatprep.subr.mxu0 0.0
  %370 = vmatpush2.msra.mxu0 0.0
  %371 = vmatprep.subr.mxu0 0.0
  %372 = vmatpush2.msra.mxu0 0.0
  %373 = vmatprep.subr.mxu0 0.0
  %374 = vmatpush2.msra.mxu0 0.0
  %375 = vmatprep.subr.mxu0 0.0
  %376 = vmatpush2.msra.mxu0 0.0
  %377 = vmatprep.subr.mxu0 0.0
  %378 = vmatpush2.msra.mxu0 0.0
  %379 = vmatprep.subr.mxu0 0.0
  %380 = vmatpush2.msra.mxu0 0.0
  %381 = vmatprep.subr.mxu0 0.0
  %382 = vmatpush2.msra.mxu0 0.0
  %383 = vmatprep.subr.mxu0 0.0
  %384 = vmatpush2.msra.mxu0 0.0
  %385 = vmatprep.subr.mxu0 0.0
  %386 = vmatpush2.msra.mxu0 0.0
  %387 = vmatprep.subr.mxu0 0.0
  %388 = vmatpush2.msra.mxu0 0.0
  %389 = vmatprep.subr.mxu0 0.0
  %390 = vmatpush2.msra.mxu0 0.0
  %391 = vmatprep.subr.mxu0 0.0
  %392 = vmatpush2.msra.mxu0 0.0
  %393 = vmatprep.subr.mxu0 0.0
  %394 = vmatpush2.msra.mxu0 0.0
  %395 = vmatprep.subr.mxu0 0.0
  %396 = vmatpush2.msra.mxu0 0.0
  %397 = vmatprep.mubr.f32.mxu0 0.0
  %398 = vmatmul.mubr.f32.gmra.mxu0 %v310
  %v399 = vpop.f32.mrf.mxu0
  %v400 = vadd.f32 %v307, %v399
  %v401 = vpop.f32.mrf.mxu0
  %402 = vmatprep.mubr.f32.mxu0 0.0
  %403 = vmatmul.mubr.f32.gmra.mxu0 %v313
  %v404 = vpop.f32.mrf.mxu0
  %v405 = vadd.f32 %v307, %v404
  %v406 = vpop.f32.mrf.mxu0
  %407 = vmatprep.mubr.f32.mxu0 0.0
  %408 = vmatmul.mubr.f32.gmra.mxu0 %v316
  %v409 = vpop.f32.mrf.mxu0
  %v410 = vadd.f32 %v307, %v409
  %v411 = vpop.f32.mrf.mxu0
  %412 = vmatprep.mubr.f32.mxu0 0.0
  %413 = vmatmul.mubr.f32.gmra.mxu0 %v319
  %v414 = vpop.f32.mrf.mxu0
  %v415 = vadd.f32 %v307, %v414
  %v416 = vpop.f32.mrf.mxu0
  %417 = vmatprep.mubr.f32.mxu0 0.0
  %418 = vmatmul.mubr.f32.gmra.mxu0 %v322
  %v419 = vpop.f32.mrf.mxu0
  %v420 = vadd.f32 %v307, %v419
  %v421 = vpop.f32.mrf.mxu0
  %422 = vmatprep.mubr.f32.mxu0 0.0
  %423 = vmatmul.mubr.f32.gmra.mxu0 %v325
  %v424 = vpop.f32.mrf.mxu0
  %v425 = vadd.f32 %v307, %v424
  %v426 = vpop.f32.mrf.mxu0
  %427 = vmatprep.mubr.f32.mxu0 0.0
  %428 = vmatmul.mubr.f32.gmra.mxu0 %v328
  %v429 = vpop.f32.mrf.mxu0
  %v430 = vadd.f32 %v307, %v429
  %v431 = vpop.f32.mrf.mxu0
  %432 = vmatprep.mubr.f32.mxu0 0.0
  %433 = vmatmul.mubr.f32.gmra.mxu0 %v331
  %v434 = vpop.f32.mrf.mxu0
  %v435 = vadd.f32 %v307, %v434
  %v436 = vpop.f32.mrf.mxu0
  %437 = vdwg.mxu0
  %v438 = vld [vmem:[%s0] sm:$0xff]
  %v439 = vld [vmem:[%s0 + $0x8] sm:$0xff]
  %v440 = vld [vmem:[%s0 + $0x10] sm:$0xff]
  %v441 = vld [vmem:[%s0 + $0x18] sm:$0xff]
  %v442 = vld [vmem:[%s0 + $0x20] sm:$0xff]
  %v443 = vld [vmem:[%s0 + $0x28] sm:$0xff]
  %v444 = vld [vmem:[%s0 + $0x30] sm:$0xff]
  %v445 = vld [vmem:[%s0 + $0x38] sm:$0xff]
  %v446 = vld [vmem:[%s7] sm:$0xff]
  %v447 = vld [vmem:[%s7 + $0x8] sm:$0xff]
  %v448 = vld [vmem:[%s8] sm:$0xff]
  %v449 = vld [vmem:[%s8 + $0x8] sm:$0xff]
  %v450 = vld [vmem:[%s8 + $0x10] sm:$0xff]
  %v451 = vld [vmem:[%s8 + $0x18] sm:$0xff]
  %v452 = vld [vmem:[%s8 + $0x20] sm:$0xff]
  %v453 = vld [vmem:[%s8 + $0x28] sm:$0xff]
  %v455 = vsel %vm110, %v400, 0
  %v458 = vsel %vm110, %v405, 0
  %v461 = vsel %vm110, %v410, 0
  %v464 = vsel %vm110, %v415, 0
  %v467 = vsel %vm110, %v420, 0
  %v470 = vsel %vm110, %v425, 0
  %v473 = vsel %vm110, %v430, 0
  %v476 = vsel %vm110, %v435, 0
  %478 = vmatprep.subr.mxu0 0.0
  %479 = vmatpush1.msra.mxu0 0.0
  %480 = vmatprep.subr.mxu0 0.0
  %481 = vmatpush1.msra.mxu0 0.0
  %482 = vmatprep.subr.mxu0 0.0
  %483 = vmatpush1.msra.mxu0 0.0
  %484 = vmatprep.subr.mxu0 0.0
  %485 = vmatpush1.msra.mxu0 0.0
  %486 = vmatprep.subr.mxu0 0.0
  %487 = vmatpush1.msra.mxu0 0.0
  %488 = vmatprep.subr.mxu0 0.0
  %489 = vmatpush1.msra.mxu0 0.0
  %490 = vmatprep.subr.mxu0 0.0
  %491 = vmatpush1.msra.mxu0 0.0
  %492 = vmatprep.subr.mxu0 0.0
  %493 = vmatpush1.msra.mxu0 0.0
  %494 = vmatprep.subr.mxu0 0.0
  %495 = vmatpush1.msra.mxu0 0.0
  %496 = vmatprep.subr.mxu0 0.0
  %497 = vmatpush1.msra.mxu0 0.0
  %498 = vmatprep.subr.mxu0 0.0
  %499 = vmatpush1.msra.mxu0 %v453
  %500 = vmatprep.subr.mxu0 0.0
  %501 = vmatpush1.msra.mxu0 %v452
  %502 = vmatprep.subr.mxu0 0.0
  %503 = vmatpush1.msra.mxu0 %v451
  %504 = vmatprep.subr.mxu0 0.0
  %505 = vmatpush1.msra.mxu0 %v450
  %506 = vmatprep.subr.mxu0 0.0
  %507 = vmatpush1.msra.mxu0 %v449
  %508 = vmatprep.subr.mxu0 0.0
  %509 = vmatpush1.msra.mxu0 %v448
  %510 = vmatprep.subr.mxu0 0.0
  %511 = vmatpush2.msra.mxu0 0.0
  %512 = vmatprep.subr.mxu0 0.0
  %513 = vmatpush2.msra.mxu0 0.0
  %514 = vmatprep.subr.mxu0 0.0
  %515 = vmatpush2.msra.mxu0 0.0
  %516 = vmatprep.subr.mxu0 0.0
  %517 = vmatpush2.msra.mxu0 0.0
  %518 = vmatprep.subr.mxu0 0.0
  %519 = vmatpush2.msra.mxu0 0.0
  %520 = vmatprep.subr.mxu0 0.0
  %521 = vmatpush2.msra.mxu0 0.0
  %522 = vmatprep.subr.mxu0 0.0
  %523 = vmatpush2.msra.mxu0 0.0
  %524 = vmatprep.subr.mxu0 0.0
  %525 = vmatpush2.msra.mxu0 0.0
  %526 = vmatprep.subr.mxu0 0.0
  %527 = vmatpush2.msra.mxu0 0.0
  %528 = vmatprep.subr.mxu0 0.0
  %529 = vmatpush2.msra.mxu0 0.0
  %530 = vmatprep.subr.mxu0 0.0
  %531 = vmatpush2.msra.mxu0 0.0
  %532 = vmatprep.subr.mxu0 0.0
  %533 = vmatpush2.msra.mxu0 0.0
  %534 = vmatprep.subr.mxu0 0.0
  %535 = vmatpush2.msra.mxu0 0.0
  %536 = vmatprep.subr.mxu0 0.0
  %537 = vmatpush2.msra.mxu0 0.0
  %538 = vmatprep.subr.mxu0 0.0
  %539 = vmatpush2.msra.mxu0 0.0
  %540 = vmatprep.subr.mxu0 0.0
  %541 = vmatpush2.msra.mxu0 0.0
  %542 = vmatprep.mubr.f32.mxu0 0.0
  %543 = vmatmul.mubr.f32.gmra.mxu0 %v455
  %v544 = vpop.f32.mrf.mxu0
  %v545 = vadd.f32 0.0, %v544
  %v546 = vpop.f32.mrf.mxu0
  %547 = vmatprep.mubr.f32.mxu0 0.0
  %548 = vmatmul.mubr.f32.gmra.mxu0 %v458
  %v549 = vpop.f32.mrf.mxu0
  %v550 = vadd.f32 0.0, %v549
  %v551 = vpop.f32.mrf.mxu0
  %552 = vmatprep.mubr.f32.mxu0 0.0
  %553 = vmatmul.mubr.f32.gmra.mxu0 %v461
  %v554 = vpop.f32.mrf.mxu0
  %v555 = vadd.f32 0.0, %v554
  %v556 = vpop.f32.mrf.mxu0
  %557 = vmatprep.mubr.f32.mxu0 0.0
  %558 = vmatmul.mubr.f32.gmra.mxu0 %v464
  %v559 = vpop.f32.mrf.mxu0
  %v560 = vadd.f32 0.0, %v559
  %v561 = vpop.f32.mrf.mxu0
  %562 = vmatprep.mubr.f32.mxu0 0.0
  %563 = vmatmul.mubr.f32.gmra.mxu0 %v467
  %v564 = vpop.f32.mrf.mxu0
  %v565 = vadd.f32 0.0, %v564
  %v566 = vpop.f32.mrf.mxu0
  %567 = vmatprep.mubr.f32.mxu0 0.0
  %568 = vmatmul.mubr.f32.gmra.mxu0 %v470
  %v569 = vpop.f32.mrf.mxu0
  %v570 = vadd.f32 0.0, %v569
  %v571 = vpop.f32.mrf.mxu0
  %572 = vmatprep.mubr.f32.mxu0 0.0
  %573 = vmatmul.mubr.f32.gmra.mxu0 %v473
  %v574 = vpop.f32.mrf.mxu0
  %v575 = vadd.f32 0.0, %v574
  %v576 = vpop.f32.mrf.mxu0
  %577 = vmatprep.mubr.f32.mxu0 0.0
  %578 = vmatmul.mubr.f32.gmra.mxu0 %v476
  %v579 = vpop.f32.mrf.mxu0
  %v580 = vadd.f32 0.0, %v579
  %v581 = vpop.f32.mrf.mxu0
  %582 = vdwg.mxu0
  %vm583 = vcmask 130048
  %v585 = vsel %vm583, %v438, 0
  %v588 = vsel %vm583, %v439, 0
  %v591 = vsel %vm583, %v440, 0
  %v594 = vsel %vm583, %v441, 0
  %v597 = vsel %vm583, %v442, 0
  %v600 = vsel %vm583, %v443, 0
  %v603 = vsel %vm583, %v444, 0
  %v606 = vsel %vm583, %v445, 0
  %608 = vmatprep.subr.mxu0 0.0
  %609 = vmatpush1.msra.mxu0 0.0
  %610 = vmatprep.subr.mxu0 0.0
  %611 = vmatpush1.msra.mxu0 0.0
  %612 = vmatprep.subr.mxu0 0.0
  %613 = vmatpush1.msra.mxu0 0.0
  %614 = vmatprep.subr.mxu0 0.0
  %615 = vmatpush1.msra.mxu0 0.0
  %616 = vmatprep.subr.mxu0 0.0
  %617 = vmatpush1.msra.mxu0 0.0
  %618 = vmatprep.subr.mxu0 0.0
  %619 = vmatpush1.msra.mxu0 0.0
  %620 = vmatprep.subr.mxu0 0.0
  %621 = vmatpush1.msra.mxu0 0.0
  %622 = vmatprep.subr.mxu0 0.0
  %623 = vmatpush1.msra.mxu0 0.0
  %624 = vmatprep.subr.mxu0 0.0
  %625 = vmatpush1.msra.mxu0 0.0
  %626 = vmatprep.subr.mxu0 0.0
  %627 = vmatpush1.msra.mxu0 0.0
  %628 = vmatprep.subr.mxu0 0.0
  %629 = vmatpush1.msra.mxu0 0.0
  %630 = vmatprep.subr.mxu0 0.0
  %631 = vmatpush1.msra.mxu0 0.0
  %632 = vmatprep.subr.mxu0 0.0
  %633 = vmatpush1.msra.mxu0 0.0
  %634 = vmatprep.subr.mxu0 0.0
  %635 = vmatpush1.msra.mxu0 0.0
  %636 = vmatprep.subr.mxu0 0.0
  %637 = vmatpush1.msra.mxu0 %v447
  %638 = vmatprep.subr.mxu0 0.0
  %639 = vmatpush1.msra.mxu0 %v446
  %640 = vmatprep.subr.mxu0 0.0
  %641 = vmatpush2.msra.mxu0 0.0
  %642 = vmatprep.subr.mxu0 0.0
  %643 = vmatpush2.msra.mxu0 0.0
  %644 = vmatprep.subr.mxu0 0.0
  %645 = vmatpush2.msra.mxu0 0.0
  %646 = vmatprep.subr.mxu0 0.0
  %647 = vmatpush2.msra.mxu0 0.0
  %648 = vmatprep.subr.mxu0 0.0
  %649 = vmatpush2.msra.mxu0 0.0
  %650 = vmatprep.subr.mxu0 0.0
  %651 = vmatpush2.msra.mxu0 0.0
  %652 = vmatprep.subr.mxu0 0.0
  %653 = vmatpush2.msra.mxu0 0.0
  %654 = vmatprep.subr.mxu0 0.0
  %655 = vmatpush2.msra.mxu0 0.0
  %656 = vmatprep.subr.mxu0 0.0
  %657 = vmatpush2.msra.mxu0 0.0
  %658 = vmatprep.subr.mxu0 0.0
  %659 = vmatpush2.msra.mxu0 0.0
  %660 = vmatprep.subr.mxu0 0.0
  %661 = vmatpush2.msra.mxu0 0.0
  %662 = vmatprep.subr.mxu0 0.0
  %663 = vmatpush2.msra.mxu0 0.0
  %664 = vmatprep.subr.mxu0 0.0
  %665 = vmatpush2.msra.mxu0 0.0
  %666 = vmatprep.subr.mxu0 0.0
  %667 = vmatpush2.msra.mxu0 0.0
  %668 = vmatprep.subr.mxu0 0.0
  %669 = vmatpush2.msra.mxu0 0.0
  %670 = vmatprep.subr.mxu0 0.0
  %671 = vmatpush2.msra.mxu0 0.0
  %672 = vmatprep.mubr.f32.mxu0 0.0
  %673 = vmatmul.mubr.f32.gmra.mxu0 %v585
  %v674 = vpop.f32.mrf.mxu0
  %v675 = vadd.f32 %v545, %v674
  %v676 = vpop.f32.mrf.mxu0
  %677 = vmatprep.mubr.f32.mxu0 0.0
  %678 = vmatmul.mubr.f32.gmra.mxu0 %v588
  %v679 = vpop.f32.mrf.mxu0
  %v680 = vadd.f32 %v550, %v679
  %v681 = vpop.f32.mrf.mxu0
  %682 = vmatprep.mubr.f32.mxu0 0.0
  %683 = vmatmul.mubr.f32.gmra.mxu0 %v591
  %v684 = vpop.f32.mrf.mxu0
  %v685 = vadd.f32 %v555, %v684
  %v686 = vpop.f32.mrf.mxu0
  %687 = vmatprep.mubr.f32.mxu0 0.0
  %688 = vmatmul.mubr.f32.gmra.mxu0 %v594
  %v689 = vpop.f32.mrf.mxu0
  %v690 = vadd.f32 %v560, %v689
  %v691 = vpop.f32.mrf.mxu0
  %692 = vmatprep.mubr.f32.mxu0 0.0
  %693 = vmatmul.mubr.f32.gmra.mxu0 %v597
  %v694 = vpop.f32.mrf.mxu0
  %v695 = vadd.f32 %v565, %v694
  %v696 = vpop.f32.mrf.mxu0
  %697 = vmatprep.mubr.f32.mxu0 0.0
  %698 = vmatmul.mubr.f32.gmra.mxu0 %v600
  %v699 = vpop.f32.mrf.mxu0
  %v700 = vadd.f32 %v570, %v699
  %v701 = vpop.f32.mrf.mxu0
  %702 = vmatprep.mubr.f32.mxu0 0.0
  %703 = vmatmul.mubr.f32.gmra.mxu0 %v603
  %v704 = vpop.f32.mrf.mxu0
  %v705 = vadd.f32 %v575, %v704
  %v706 = vpop.f32.mrf.mxu0
  %707 = vmatprep.mubr.f32.mxu0 0.0
  %708 = vmatmul.mubr.f32.gmra.mxu0 %v606
  %v709 = vpop.f32.mrf.mxu0
  %v710 = vadd.f32 %v580, %v709
  %v711 = vpop.f32.mrf.mxu0
  %712 = vdwg.mxu0
  %v713 = vld [vmem:[%s9] sm:$0x1]
  %v715 = vlaneseq
  %v716 = vshrl.u32 %v715, 7
  %v717 = vsub.s32 0, %v716
  %v718 = vrot.slane %v713, %v717
  %v720 = vadd.f32 %v675, %v718
  %v721 = vadd.f32 %v680, %v718
  %v722 = vadd.f32 %v685, %v718
  %v723 = vadd.f32 %v690, %v718
  %v724 = vadd.f32 %v695, %v718
  %v725 = vadd.f32 %v700, %v718
  %v726 = vadd.f32 %v705, %v718
  %v727 = vadd.f32 %v710, %v718
  %v728 = vmax.f32 %v720, 0.0
  %v729 = vmax.f32 %v721, 0.0
  %v730 = vmax.f32 %v722, 0.0
  %v731 = vmax.f32 %v723, 0.0
  %v732 = vmax.f32 %v724, 0.0
  %v733 = vmax.f32 %v725, 0.0
  %v734 = vmax.f32 %v726, 0.0
  %v735 = vmax.f32 %v727, 0.0
  %v736 = vld [vmem:[%s10] sm:$0xf]
  %v737 = vld [vmem:[%s11] sm:$0x1]
  %v739 = vlaneseq
  %v740 = vshrl.u32 %v739, 7
  %v741 = vsub.s32 0, %v740
  %v742 = vrot.slane %v737, %v741
  %vm744 = vcmask 31744
  %v746 = vsel %vm744, %v728, 0
  %v749 = vsel %vm744, %v729, 0
  %v752 = vsel %vm744, %v730, 0
  %v755 = vsel %vm744, %v731, 0
  %v758 = vsel %vm744, %v732, 0
  %v761 = vsel %vm744, %v733, 0
  %v764 = vsel %vm744, %v734, 0
  %v767 = vsel %vm744, %v735, 0
  %vm769 = vcmask 1043456
  %v771 = vsel %vm769, %v736, 0
  %773 = vmatprep.subr.mxu0 0.0
  %774 = vmatpush1.msra.mxu0 0.0
  %775 = vmatprep.subr.mxu0 0.0
  %776 = vmatpush1.msra.mxu0 0.0
  %777 = vmatprep.subr.mxu0 0.0
  %778 = vmatpush1.msra.mxu0 0.0
  %779 = vmatprep.subr.mxu0 0.0
  %780 = vmatpush1.msra.mxu0 0.0
  %781 = vmatprep.subr.mxu0 0.0
  %782 = vmatpush1.msra.mxu0 0.0
  %783 = vmatprep.subr.mxu0 0.0
  %784 = vmatpush1.msra.mxu0 0.0
  %785 = vmatprep.subr.mxu0 0.0
  %786 = vmatpush1.msra.mxu0 0.0
  %787 = vmatprep.subr.mxu0 0.0
  %788 = vmatpush1.msra.mxu0 0.0
  %789 = vmatprep.subr.mxu0 0.0
  %790 = vmatpush1.msra.mxu0 0.0
  %791 = vmatprep.subr.mxu0 0.0
  %792 = vmatpush1.msra.mxu0 0.0
  %793 = vmatprep.subr.mxu0 0.0
  %794 = vmatpush1.msra.mxu0 0.0
  %795 = vmatprep.subr.mxu0 0.0
  %796 = vmatpush1.msra.mxu0 0.0
  %797 = vmatprep.subr.mxu0 0.0
  %798 = vmatpush1.msra.mxu0 0.0
  %799 = vmatprep.subr.mxu0 0.0
  %800 = vmatpush1.msra.mxu0 0.0
  %801 = vmatprep.subr.mxu0 0.0
  %802 = vmatpush1.msra.mxu0 0.0
  %803 = vmatprep.subr.mxu0 0.0
  %804 = vmatpush1.msra.mxu0 %v771
  %805 = vmatprep.subr.mxu0 0.0
  %806 = vmatpush2.msra.mxu0 0.0
  %807 = vmatprep.subr.mxu0 0.0
  %808 = vmatpush2.msra.mxu0 0.0
  %809 = vmatprep.subr.mxu0 0.0
  %810 = vmatpush2.msra.mxu0 0.0
  %811 = vmatprep.subr.mxu0 0.0
  %812 = vmatpush2.msra.mxu0 0.0
  %813 = vmatprep.subr.mxu0 0.0
  %814 = vmatpush2.msra.mxu0 0.0
  %815 = vmatprep.subr.mxu0 0.0
  %816 = vmatpush2.msra.mxu0 0.0
  %817 = vmatprep.subr.mxu0 0.0
  %818 = vmatpush2.msra.mxu0 0.0
  %819 = vmatprep.subr.mxu0 0.0
  %820 = vmatpush2.msra.mxu0 0.0
  %821 = vmatprep.subr.mxu0 0.0
  %822 = vmatpush2.msra.mxu0 0.0
  %823 = vmatprep.subr.mxu0 0.0
  %824 = vmatpush2.msra.mxu0 0.0
  %825 = vmatprep.subr.mxu0 0.0
  %826 = vmatpush2.msra.mxu0 0.0
  %827 = vmatprep.subr.mxu0 0.0
  %828 = vmatpush2.msra.mxu0 0.0
  %829 = vmatprep.subr.mxu0 0.0
  %830 = vmatpush2.msra.mxu0 0.0
  %831 = vmatprep.subr.mxu0 0.0
  %832 = vmatpush2.msra.mxu0 0.0
  %833 = vmatprep.subr.mxu0 0.0
  %834 = vmatpush2.msra.mxu0 0.0
  %835 = vmatprep.subr.mxu0 0.0
  %836 = vmatpush2.msra.mxu0 0.0
  %837 = vmatprep.mubr.f32.mxu0 0.0
  %838 = vmatmul.mubr.f32.gmra.mxu0 %v746
  %v839 = vpop.f32.mrf.mxu0
  %v840 = vadd.f32 %v742, %v839
  %v841 = vpop.f32.mrf.mxu0
  %842 = vmatprep.mubr.f32.mxu0 0.0
  %843 = vmatmul.mubr.f32.gmra.mxu0 %v749
  %v844 = vpop.f32.mrf.mxu0
  %v845 = vadd.f32 %v742, %v844
  %v846 = vpop.f32.mrf.mxu0
  %847 = vmatprep.mubr.f32.mxu0 0.0
  %848 = vmatmul.mubr.f32.gmra.mxu0 %v752
  %v849 = vpop.f32.mrf.mxu0
  %v850 = vadd.f32 %v742, %v849
  %v851 = vpop.f32.mrf.mxu0
  %852 = vmatprep.mubr.f32.mxu0 0.0
  %853 = vmatmul.mubr.f32.gmra.mxu0 %v755
  %v854 = vpop.f32.mrf.mxu0
  %v855 = vadd.f32 %v742, %v854
  %v856 = vpop.f32.mrf.mxu0
  %857 = vmatprep.mubr.f32.mxu0 0.0
  %858 = vmatmul.mubr.f32.gmra.mxu0 %v758
  %v859 = vpop.f32.mrf.mxu0
  %v860 = vadd.f32 %v742, %v859
  %v861 = vpop.f32.mrf.mxu0
  %862 = vmatprep.mubr.f32.mxu0 0.0
  %863 = vmatmul.mubr.f32.gmra.mxu0 %v761
  %v864 = vpop.f32.mrf.mxu0
  %v865 = vadd.f32 %v742, %v864
  %v866 = vpop.f32.mrf.mxu0
  %867 = vmatprep.mubr.f32.mxu0 0.0
  %868 = vmatmul.mubr.f32.gmra.mxu0 %v764
  %v869 = vpop.f32.mrf.mxu0
  %v870 = vadd.f32 %v742, %v869
  %v871 = vpop.f32.mrf.mxu0
  %872 = vmatprep.mubr.f32.mxu0 0.0
  %873 = vmatmul.mubr.f32.gmra.mxu0 %v767
  %v874 = vpop.f32.mrf.mxu0
  %v875 = vadd.f32 %v742, %v874
  %v876 = vpop.f32.mrf.mxu0
  %877 = vdwg.mxu0
  %v878 = vld [vmem:[%s12] sm:$0xff]
  %v879 = vld [vmem:[%s12 + $0x8] sm:$0xff]
  %v880 = vld [vmem:[%s12 + $0x10] sm:$0xff]
  %v881 = vld [vmem:[%s12 + $0x18] sm:$0xff]
  %v882 = vld [vmem:[%s13] sm:$0x3]
  %v884 = vlaneseq
  %v885 = vshrl.u32 %v884, 7
  %v886 = vsub.s32 0, %v885
  %v887 = vrot.slane %v882, %v886
  %v888 = vlaneseq
  %v889 = vshrl.u32 %v888, 7
  %v890 = vsub.s32 1, %v889
  %v891 = vrot.slane %v882, %v890
  %v895 = vsel %vm583, %v840, 0
  %v898 = vsel %vm583, %v845, 0
  %v901 = vsel %vm583, %v850, 0
  %v904 = vsel %vm583, %v855, 0
  %v907 = vsel %vm583, %v860, 0
  %v910 = vsel %vm583, %v865, 0
  %v913 = vsel %vm583, %v870, 0
  %v916 = vsel %vm583, %v875, 0
  %918 = vmatprep.subr.mxu0 0.0
  %919 = vmatpush1.msra.mxu0 0.0
  %920 = vmatprep.subr.mxu0 0.0
  %921 = vmatpush1.msra.mxu0 0.0
  %922 = vmatprep.subr.mxu0 0.0
  %923 = vmatpush1.msra.mxu0 0.0
  %924 = vmatprep.subr.mxu0 0.0
  %925 = vmatpush1.msra.mxu0 0.0
  %926 = vmatprep.subr.mxu0 0.0
  %927 = vmatpush1.msra.mxu0 0.0
  %928 = vmatprep.subr.mxu0 0.0
  %929 = vmatpush1.msra.mxu0 0.0
  %930 = vmatprep.subr.mxu0 0.0
  %931 = vmatpush1.msra.mxu0 0.0
  %932 = vmatprep.subr.mxu0 0.0
  %933 = vmatpush1.msra.mxu0 0.0
  %934 = vmatprep.subr.mxu0 0.0
  %935 = vmatpush1.msra.mxu0 0.0
  %936 = vmatprep.subr.mxu0 0.0
  %937 = vmatpush1.msra.mxu0 0.0
  %938 = vmatprep.subr.mxu0 0.0
  %939 = vmatpush1.msra.mxu0 0.0
  %940 = vmatprep.subr.mxu0 0.0
  %941 = vmatpush1.msra.mxu0 0.0
  %942 = vmatprep.subr.mxu0 0.0
  %943 = vmatpush1.msra.mxu0 0.0
  %944 = vmatprep.subr.mxu0 0.0
  %945 = vmatpush1.msra.mxu0 0.0
  %946 = vmatprep.subr.mxu0 %v881
  %947 = vmatpush1.msra.mxu0 %v880
  %948 = vmatprep.subr.mxu0 %v879
  %949 = vmatpush1.msra.mxu0 %v878
  %950 = vmatprep.subr.mxu0 0.0
  %951 = vmatpush2.msra.mxu0 0.0
  %952 = vmatprep.subr.mxu0 0.0
  %953 = vmatpush2.msra.mxu0 0.0
  %954 = vmatprep.subr.mxu0 0.0
  %955 = vmatpush2.msra.mxu0 0.0
  %956 = vmatprep.subr.mxu0 0.0
  %957 = vmatpush2.msra.mxu0 0.0
  %958 = vmatprep.subr.mxu0 0.0
  %959 = vmatpush2.msra.mxu0 0.0
  %960 = vmatprep.subr.mxu0 0.0
  %961 = vmatpush2.msra.mxu0 0.0
  %962 = vmatprep.subr.mxu0 0.0
  %963 = vmatpush2.msra.mxu0 0.0
  %964 = vmatprep.subr.mxu0 0.0
  %965 = vmatpush2.msra.mxu0 0.0
  %966 = vmatprep.subr.mxu0 0.0
  %967 = vmatpush2.msra.mxu0 0.0
  %968 = vmatprep.subr.mxu0 0.0
  %969 = vmatpush2.msra.mxu0 0.0
  %970 = vmatprep.subr.mxu0 0.0
  %971 = vmatpush2.msra.mxu0 0.0
  %972 = vmatprep.subr.mxu0 0.0
  %973 = vmatpush2.msra.mxu0 0.0
  %974 = vmatprep.subr.mxu0 0.0
  %975 = vmatpush2.msra.mxu0 0.0
  %976 = vmatprep.subr.mxu0 0.0
  %977 = vmatpush2.msra.mxu0 0.0
  %978 = vmatprep.subr.mxu0 0.0
  %979 = vmatpush2.msra.mxu0 0.0
  %980 = vmatprep.subr.mxu0 0.0
  %981 = vmatpush2.msra.mxu0 0.0
  %982 = vmatprep.mubr.f32.mxu0 0.0
  %983 = vmatmul.mubr.f32.gmra.mxu0 %v895
  %v984 = vpop.f32.mrf.mxu0
  %v985 = vadd.f32 %v887, %v984
  %v986 = vpop.f32.mrf.mxu0
  %v987 = vadd.f32 %v891, %v986
  %988 = vmatprep.mubr.f32.mxu0 0.0
  %989 = vmatmul.mubr.f32.gmra.mxu0 %v898
  %v990 = vpop.f32.mrf.mxu0
  %v991 = vadd.f32 %v887, %v990
  %v992 = vpop.f32.mrf.mxu0
  %v993 = vadd.f32 %v891, %v992
  %994 = vmatprep.mubr.f32.mxu0 0.0
  %995 = vmatmul.mubr.f32.gmra.mxu0 %v901
  %v996 = vpop.f32.mrf.mxu0
  %v997 = vadd.f32 %v887, %v996
  %v998 = vpop.f32.mrf.mxu0
  %v999 = vadd.f32 %v891, %v998
  %1000 = vmatprep.mubr.f32.mxu0 0.0
  %1001 = vmatmul.mubr.f32.gmra.mxu0 %v904
  %v1002 = vpop.f32.mrf.mxu0
  %v1003 = vadd.f32 %v887, %v1002
  %v1004 = vpop.f32.mrf.mxu0
  %v1005 = vadd.f32 %v891, %v1004
  %1006 = vmatprep.mubr.f32.mxu0 0.0
  %1007 = vmatmul.mubr.f32.gmra.mxu0 %v907
  %v1008 = vpop.f32.mrf.mxu0
  %v1009 = vadd.f32 %v887, %v1008
  %v1010 = vpop.f32.mrf.mxu0
  %v1011 = vadd.f32 %v891, %v1010
  %1012 = vmatprep.mubr.f32.mxu0 0.0
  %1013 = vmatmul.mubr.f32.gmra.mxu0 %v910
  %v1014 = vpop.f32.mrf.mxu0
  %v1015 = vadd.f32 %v887, %v1014
  %v1016 = vpop.f32.mrf.mxu0
  %v1017 = vadd.f32 %v891, %v1016
  %1018 = vmatprep.mubr.f32.mxu0 0.0
  %1019 = vmatmul.mubr.f32.gmra.mxu0 %v913
  %v1020 = vpop.f32.mrf.mxu0
  %v1021 = vadd.f32 %v887, %v1020
  %v1022 = vpop.f32.mrf.mxu0
  %v1023 = vadd.f32 %v891, %v1022
  %1024 = vmatprep.mubr.f32.mxu0 0.0
  %1025 = vmatmul.mubr.f32.gmra.mxu0 %v916
  %v1026 = vpop.f32.mrf.mxu0
  %v1027 = vadd.f32 %v887, %v1026
  %v1028 = vpop.f32.mrf.mxu0
  %v1029 = vadd.f32 %v891, %v1028
  %1030 = vdwg.mxu0
  %v1031 = vld [vmem:[%s14] sm:$0xff]
  %v1032 = vld [vmem:[%s14 + $0x8] sm:$0xff]
  %v1033 = vld [vmem:[%s14 + $0x10] sm:$0xff]
  %v1034 = vld [vmem:[%s14 + $0x18] sm:$0xff]
  %v1035 = vld [vmem:[%s14 + $0x20] sm:$0xff]
  %v1036 = vld [vmem:[%s14 + $0x28] sm:$0xff]
  %v1037 = vld [vmem:[%s14 + $0x30] sm:$0xff]
  %v1038 = vld [vmem:[%s14 + $0x38] sm:$0xff]
  %v1039 = vld [vmem:[%s14 + $0x40] sm:$0xff]
  %v1040 = vld [vmem:[%s14 + $0x48] sm:$0xff]
  %v1041 = vld [vmem:[%s14 + $0x50] sm:$0xff]
  %v1042 = vld [vmem:[%s14 + $0x58] sm:$0xff]
  %v1043 = vld [vmem:[%s14 + $0x60] sm:$0xff]
  %v1044 = vld [vmem:[%s14 + $0x68] sm:$0xff]
  %v1045 = vld [vmem:[%s14 + $0x70] sm:$0xff]
  %v1046 = vld [vmem:[%s14 + $0x78] sm:$0xff]
  %v1047 = vld [vmem:[%s16] sm:$0xff]
  %v1048 = vld [vmem:[%s16 + $0x8] sm:$0xff]
  %v1049 = vld [vmem:[%s16 + $0x10] sm:$0xff]
  %v1050 = vld [vmem:[%s16 + $0x18] sm:$0xff]
  %v1051 = vld [vmem:[%s16 + $0x20] sm:$0xff]
  %v1052 = vld [vmem:[%s16 + $0x28] sm:$0xff]
  %v1053 = vld [vmem:[%s16 + $0x30] sm:$0xff]
  %v1054 = vld [vmem:[%s16 + $0x38] sm:$0xff]
  %v1055 = vld [vmem:[%s16 + $0x40] sm:$0xff]
  %v1056 = vld [vmem:[%s16 + $0x48] sm:$0xff]
  %v1057 = vld [vmem:[%s16 + $0x50] sm:$0xff]
  %v1058 = vld [vmem:[%s16 + $0x58] sm:$0xff]
  %v1059 = vld [vmem:[%s16 + $0x60] sm:$0xff]
  %v1060 = vld [vmem:[%s16 + $0x68] sm:$0xff]
  %v1061 = vld [vmem:[%s16 + $0x70] sm:$0xff]
  %v1062 = vld [vmem:[%s16 + $0x78] sm:$0xff]
  %v1063 = vld [vmem:[%s18] sm:$0xff]
  %v1064 = vld [vmem:[%s18 + $0x8] sm:$0xff]
  %v1065 = vld [vmem:[%s18 + $0x10] sm:$0xff]
  %v1066 = vld [vmem:[%s18 + $0x18] sm:$0xff]
  %v1067 = vld [vmem:[%s18 + $0x20] sm:$0xff]
  %v1068 = vld [vmem:[%s18 + $0x28] sm:$0xff]
  %v1069 = vld [vmem:[%s18 + $0x30] sm:$0xff]
  %v1070 = vld [vmem:[%s18 + $0x38] sm:$0xff]
  %v1071 = vld [vmem:[%s18 + $0x40] sm:$0xff]
  %v1072 = vld [vmem:[%s18 + $0x48] sm:$0xff]
  %v1073 = vld [vmem:[%s18 + $0x50] sm:$0xff]
  %v1074 = vld [vmem:[%s18 + $0x58] sm:$0xff]
  %v1075 = vld [vmem:[%s18 + $0x60] sm:$0xff]
  %v1076 = vld [vmem:[%s18 + $0x68] sm:$0xff]
  %v1077 = vld [vmem:[%s18 + $0x70] sm:$0xff]
  %v1078 = vld [vmem:[%s18 + $0x78] sm:$0xff]
  %v1079 = vld [vmem:[%s15] sm:$0x3]
  %v1081 = vlaneseq
  %v1082 = vshrl.u32 %v1081, 7
  %v1083 = vsub.s32 0, %v1082
  %v1084 = vrot.slane %v1079, %v1083
  %v1085 = vlaneseq
  %v1086 = vshrl.u32 %v1085, 7
  %v1087 = vsub.s32 1, %v1086
  %v1088 = vrot.slane %v1079, %v1087
  %v1091 = vld [vmem:[%s17] sm:$0x3]
  %v1093 = vlaneseq
  %v1094 = vshrl.u32 %v1093, 7
  %v1095 = vsub.s32 0, %v1094
  %v1096 = vrot.slane %v1091, %v1095
  %v1097 = vlaneseq
  %v1098 = vshrl.u32 %v1097, 7
  %v1099 = vsub.s32 1, %v1098
  %v1100 = vrot.slane %v1091, %v1099
  %v1103 = vld [vmem:[%s19] sm:$0x3]
  %v1105 = vlaneseq
  %v1106 = vshrl.u32 %v1105, 7
  %v1107 = vsub.s32 0, %v1106
  %v1108 = vrot.slane %v1103, %v1107
  %v1109 = vlaneseq
  %v1110 = vshrl.u32 %v1109, 7
  %v1111 = vsub.s32 1, %v1110
  %v1112 = vrot.slane %v1103, %v1111
  %vm1115 = vcmask 523264
  %v1117 = vsel %vm1115, 0.0, 0
  %1119 = vmatprep.subr.mxu0 0.0
  %1120 = vmatpush1.msra.mxu0 0.0
  %1121 = vmatprep.subr.mxu0 0.0
  %1122 = vmatpush1.msra.mxu0 0.0
  %1123 = vmatprep.subr.mxu0 0.0
  %1124 = vmatpush1.msra.mxu0 0.0
  %1125 = vmatprep.subr.mxu0 0.0
  %1126 = vmatpush1.msra.mxu0 0.0
  %1127 = vmatprep.subr.mxu0 0.0
  %1128 = vmatpush1.msra.mxu0 0.0
  %1129 = vmatprep.subr.mxu0 0.0
  %1130 = vmatpush1.msra.mxu0 0.0
  %1131 = vmatprep.subr.mxu0 0.0
  %1132 = vmatpush1.msra.mxu0 0.0
  %1133 = vmatprep.subr.mxu0 0.0
  %1134 = vmatpush1.msra.mxu0 0.0
  %1135 = vmatprep.subr.mxu0 %v1046
  %1136 = vmatpush1.msra.mxu0 %v1045
  %1137 = vmatprep.subr.mxu0 %v1044
  %1138 = vmatpush1.msra.mxu0 %v1043
  %1139 = vmatprep.subr.mxu0 %v1042
  %1140 = vmatpush1.msra.mxu0 %v1041
  %1141 = vmatprep.subr.mxu0 %v1040
  %1142 = vmatpush1.msra.mxu0 %v1039
  %1143 = vmatprep.subr.mxu0 %v1038
  %1144 = vmatpush1.msra.mxu0 %v1037
  %1145 = vmatprep.subr.mxu0 %v1036
  %1146 = vmatpush1.msra.mxu0 %v1035
  %1147 = vmatprep.subr.mxu0 %v1034
  %1148 = vmatpush1.msra.mxu0 %v1033
  %1149 = vmatprep.subr.mxu0 %v1032
  %1150 = vmatpush1.msra.mxu0 %v1031
  %1151 = vmatprep.subr.mxu0 0.0
  %1152 = vmatpush2.msra.mxu0 0.0
  %1153 = vmatprep.subr.mxu0 0.0
  %1154 = vmatpush2.msra.mxu0 0.0
  %1155 = vmatprep.subr.mxu0 0.0
  %1156 = vmatpush2.msra.mxu0 0.0
  %1157 = vmatprep.subr.mxu0 0.0
  %1158 = vmatpush2.msra.mxu0 0.0
  %1159 = vmatprep.subr.mxu0 0.0
  %1160 = vmatpush2.msra.mxu0 0.0
  %1161 = vmatprep.subr.mxu0 0.0
  %1162 = vmatpush2.msra.mxu0 0.0
  %1163 = vmatprep.subr.mxu0 0.0
  %1164 = vmatpush2.msra.mxu0 0.0
  %1165 = vmatprep.subr.mxu0 0.0
  %1166 = vmatpush2.msra.mxu0 0.0
  %1167 = vmatprep.subr.mxu0 0.0
  %1168 = vmatpush2.msra.mxu0 0.0
  %1169 = vmatprep.subr.mxu0 0.0
  %1170 = vmatpush2.msra.mxu0 0.0
  %1171 = vmatprep.subr.mxu0 0.0
  %1172 = vmatpush2.msra.mxu0 0.0
  %1173 = vmatprep.subr.mxu0 0.0
  %1174 = vmatpush2.msra.mxu0 0.0
  %1175 = vmatprep.subr.mxu0 0.0
  %1176 = vmatpush2.msra.mxu0 0.0
  %1177 = vmatprep.subr.mxu0 0.0
  %1178 = vmatpush2.msra.mxu0 0.0
  %1179 = vmatprep.subr.mxu0 0.0
  %1180 = vmatpush2.msra.mxu0 0.0
  %1181 = vmatprep.subr.mxu0 0.0
  %1182 = vmatpush2.msra.mxu0 0.0
  %1183 = vmatprep.mubr.f32.mxu0 0.0
  %1184 = vmatmul.mubr.f32.gmra.mxu0 %v1117
  %v1185 = vpop.f32.mrf.mxu0
  %v1186 = vadd.f32 %v1084, %v1185
  %v1187 = vpop.f32.mrf.mxu0
  %v1188 = vadd.f32 %v1088, %v1187
  %1189 = vdwg.mxu0
  %v1190 = vadd.f32 %v985, %v1186
  %v1191 = vxor.u32 %v1190, 2147483648
  %v1192 = vmul.f32 %v1191, 1.442695
  %v1193 = vpow.pop %v1192
  %v1194 = vadd.f32 %v1193, 1.0
  %v1195 = vrcp.pop %v1194
  %v1196 = vmul.f32 1.0, %v1195
  %v1197 = vmul.f32 %v1196, %v1188
  %v1198 = vadd.f32 %v987, %v1197
  %v1199 = vtanh.pop %v1198
  %v1200 = vsub.f32 1.0, %v1196
  %1202 = vrot.lane.b32.xlu0 %v1199, 64
  %v1203 = vpop.permute.xlu0 %1202
  %v1205 = vmul.f32 %v1200, %v1203
  %v1206 = vmul.f32 %v1196, 0.0
  %v1207 = vadd.f32 %v1205, %v1206
  %1209 = vrot.lane.b32.xlu0 %v1207, 64
  %v1210 = vpop.permute.xlu0 %1209
  %v1211 = vsel %vm1115, %v1210, 0
  %1213 = vmatprep.subr.mxu0 0.0
  %1214 = vmatpush1.msra.mxu0 0.0
  %1215 = vmatprep.subr.mxu0 0.0
  %1216 = vmatpush1.msra.mxu0 0.0
  %1217 = vmatprep.subr.mxu0 0.0
  %1218 = vmatpush1.msra.mxu0 0.0
  %1219 = vmatprep.subr.mxu0 0.0
  %1220 = vmatpush1.msra.mxu0 0.0
  %1221 = vmatprep.subr.mxu0 0.0
  %1222 = vmatpush1.msra.mxu0 0.0
  %1223 = vmatprep.subr.mxu0 0.0
  %1224 = vmatpush1.msra.mxu0 0.0
  %1225 = vmatprep.subr.mxu0 0.0
  %1226 = vmatpush1.msra.mxu0 0.0
  %1227 = vmatprep.subr.mxu0 0.0
  %1228 = vmatpush1.msra.mxu0 0.0
  %1229 = vmatprep.subr.mxu0 %v1062
  %1230 = vmatpush1.msra.mxu0 %v1061
  %1231 = vmatprep.subr.mxu0 %v1060
  %1232 = vmatpush1.msra.mxu0 %v1059
  %1233 = vmatprep.subr.mxu0 %v1058
  %1234 = vmatpush1.msra.mxu0 %v1057
  %1235 = vmatprep.subr.mxu0 %v1056
  %1236 = vmatpush1.msra.mxu0 %v1055
  %1237 = vmatprep.subr.mxu0 %v1054
  %1238 = vmatpush1.msra.mxu0 %v1053
  %1239 = vmatprep.subr.mxu0 %v1052
  %1240 = vmatpush1.msra.mxu0 %v1051
  %1241 = vmatprep.subr.mxu0 %v1050
  %1242 = vmatpush1.msra.mxu0 %v1049
  %1243 = vmatprep.subr.mxu0 %v1048
  %1244 = vmatpush1.msra.mxu0 %v1047
  %1245 = vmatprep.subr.mxu0 0.0
  %1246 = vmatpush2.msra.mxu0 0.0
  %1247 = vmatprep.subr.mxu0 0.0
  %1248 = vmatpush2.msra.mxu0 0.0
  %1249 = vmatprep.subr.mxu0 0.0
  %1250 = vmatpush2.msra.mxu0 0.0
  %1251 = vmatprep.subr.mxu0 0.0
  %1252 = vmatpush2.msra.mxu0 0.0
  %1253 = vmatprep.subr.mxu0 0.0
  %1254 = vmatpush2.msra.mxu0 0.0
  %1255 = vmatprep.subr.mxu0 0.0
  %1256 = vmatpush2.msra.mxu0 0.0
  %1257 = vmatprep.subr.mxu0 0.0
  %1258 = vmatpush2.msra.mxu0 0.0
  %1259 = vmatprep.subr.mxu0 0.0
  %1260 = vmatpush2.msra.mxu0 0.0
  %1261 = vmatprep.subr.mxu0 0.0
  %1262 = vmatpush2.msra.mxu0 0.0
  %1263 = vmatprep.subr.mxu0 0.0
  %1264 = vmatpush2.msra.mxu0 0.0
  %1265 = vmatprep.subr.mxu0 0.0
  %1266 = vmatpush2.msra.mxu0 0.0
  %1267 = vmatprep.subr.mxu0 0.0
  %1268 = vmatpush2.msra.mxu0 0.0
  %1269 = vmatprep.subr.mxu0 0.0
  %1270 = vmatpush2.msra.mxu0 0.0
  %1271 = vmatprep.subr.mxu0 0.0
  %1272 = vmatpush2.msra.mxu0 0.0
  %1273 = vmatprep.subr.mxu0 0.0
  %1274 = vmatpush2.msra.mxu0 0.0
  %1275 = vmatprep.subr.mxu0 0.0
  %1276 = vmatpush2.msra.mxu0 0.0
  %1277 = vmatprep.mubr.f32.mxu0 0.0
  %1278 = vmatmul.mubr.f32.gmra.mxu0 %v1211
  %v1279 = vpop.f32.mrf.mxu0
  %v1280 = vadd.f32 %v1096, %v1279
  %v1281 = vpop.f32.mrf.mxu0
  %v1282 = vadd.f32 %v1100, %v1281
  %1283 = vdwg.mxu0
  %1284 = vmatprep.subr.mxu0 0.0
  %1285 = vmatpush1.msra.mxu0 0.0
  %1286 = vmatprep.subr.mxu0 0.0
  %1287 = vmatpush1.msra.mxu0 0.0
  %1288 = vmatprep.subr.mxu0 0.0
  %1289 = vmatpush1.msra.mxu0 0.0
  %1290 = vmatprep.subr.mxu0 0.0
  %1291 = vmatpush1.msra.mxu0 0.0
  %1292 = vmatprep.subr.mxu0 0.0
  %1293 = vmatpush1.msra.mxu0 0.0
  %1294 = vmatprep.subr.mxu0 0.0
  %1295 = vmatpush1.msra.mxu0 0.0
  %1296 = vmatprep.subr.mxu0 0.0
  %1297 = vmatpush1.msra.mxu0 0.0
  %1298 = vmatprep.subr.mxu0 0.0
  %1299 = vmatpush1.msra.mxu0 0.0
  %1300 = vmatprep.subr.mxu0 %v1078
  %1301 = vmatpush1.msra.mxu0 %v1077
  %1302 = vmatprep.subr.mxu0 %v1076
  %1303 = vmatpush1.msra.mxu0 %v1075
  %1304 = vmatprep.subr.mxu0 %v1074
  %1305 = vmatpush1.msra.mxu0 %v1073
  %1306 = vmatprep.subr.mxu0 %v1072
  %1307 = vmatpush1.msra.mxu0 %v1071
  %1308 = vmatprep.subr.mxu0 %v1070
  %1309 = vmatpush1.msra.mxu0 %v1069
  %1310 = vmatprep.subr.mxu0 %v1068
  %1311 = vmatpush1.msra.mxu0 %v1067
  %1312 = vmatprep.subr.mxu0 %v1066
  %1313 = vmatpush1.msra.mxu0 %v1065
  %1314 = vmatprep.subr.mxu0 %v1064
  %1315 = vmatpush1.msra.mxu0 %v1063
  %1316 = vmatprep.subr.mxu0 0.0
  %1317 = vmatpush2.msra.mxu0 0.0
  %1318 = vmatprep.subr.mxu0 0.0
  %1319 = vmatpush2.msra.mxu0 0.0
  %1320 = vmatprep.subr.mxu0 0.0
  %1321 = vmatpush2.msra.mxu0 0.0
  %1322 = vmatprep.subr.mxu0 0.0
  %1323 = vmatpush2.msra.mxu0 0.0
  %1324 = vmatprep.subr.mxu0 0.0
  %1325 = vmatpush2.msra.mxu0 0.0
  %1326 = vmatprep.subr.mxu0 0.0
  %1327 = vmatpush2.msra.mxu0 0.0
  %1328 = vmatprep.subr.mxu0 0.0
  %1329 = vmatpush2.msra.mxu0 0.0
  %1330 = vmatprep.subr.mxu0 0.0
  %1331 = vmatpush2.msra.mxu0 0.0
  %1332 = vmatprep.subr.mxu0 0.0
  %1333 = vmatpush2.msra.mxu0 0.0
  %1334 = vmatprep.subr.mxu0 0.0
  %1335 = vmatpush2.msra.mxu0 0.0
  %1336 = vmatprep.subr.mxu0 0.0
  %1337 = vmatpush2.msra.mxu0 0.0
  %1338 = vmatprep.subr.mxu0 0.0
  %1339 = vmatpush2.msra.mxu0 0.0
  %1340 = vmatprep.subr.mxu0 0.0
  %1341 = vmatpush2.msra.mxu0 0.0
  %1342 = vmatprep.subr.mxu0 0.0
  %1343 = vmatpush2.msra.mxu0 0.0
  %1344 = vmatprep.subr.mxu0 0.0
  %1345 = vmatpush2.msra.mxu0 0.0
  %1346 = vmatprep.subr.mxu0 0.0
  %1347 = vmatpush2.msra.mxu0 0.0
  %1348 = vmatprep.mubr.f32.mxu0 0.0
  %1349 = vmatmul.mubr.f32.gmra.mxu0 %v1117
  %v1350 = vpop.f32.mrf.mxu0
  %v1351 = vadd.f32 %v1108, %v1350
  %v1352 = vpop.f32.mrf.mxu0
  %v1353 = vadd.f32 %v1112, %v1352
  %1354 = vdwg.mxu0
  %v1355 = vadd.f32 %v1280, %v1351
  %v1356 = vxor.u32 %v1355, 2147483648
  %v1357 = vmul.f32 %v1356, 1.442695
  %v1358 = vpow.pop %v1357
  %v1359 = vadd.f32 %v1358, 1.0
  %v1360 = vrcp.pop %v1359
  %v1361 = vmul.f32 1.0, %v1360
  %v1362 = vmul.f32 %v1361, %v1353
  %v1363 = vadd.f32 %v1282, %v1362
  %v1364 = vtanh.pop %v1363
  %v1365 = vsub.f32 1.0, %v1361
  %1367 = vrot.lane.b32.xlu0 %v1364, 64
  %v1368 = vpop.permute.xlu0 %1367
  %v1370 = vmul.f32 %v1365, %v1368
  %v1371 = vmul.f32 %v1361, 0.0
  %v1372 = vadd.f32 %v1370, %v1371
  %1374 = vrot.lane.b32.xlu0 %v1372, 64
  %v1375 = vpop.permute.xlu0 %1374
  %1377 = vst.msk [vmem:[#allocation2] sm:$0xff] %vm1115, %v1375
  %1378 = vmatprep.subr.mxu0 0.0
  %1379 = vmatpush1.msra.mxu0 0.0
  %1380 = vmatprep.subr.mxu0 0.0
  %1381 = vmatpush1.msra.mxu0 0.0
  %1382 = vmatprep.subr.mxu0 0.0
  %1383 = vmatpush1.msra.mxu0 0.0
  %1384 = vmatprep.subr.mxu0 0.0
  %1385 = vmatpush1.msra.mxu0 0.0
  %1386 = vmatprep.subr.mxu0 0.0
  %1387 = vmatpush1.msra.mxu0 0.0
  %1388 = vmatprep.subr.mxu0 0.0
  %1389 = vmatpush1.msra.mxu0 0.0
  %1390 = vmatprep.subr.mxu0 0.0
  %1391 = vmatpush1.msra.mxu0 0.0
  %1392 = vmatprep.subr.mxu0 0.0
  %1393 = vmatpush1.msra.mxu0 0.0
  %1394 = vmatprep.subr.mxu0 %v1046
  %1395 = vmatpush1.msra.mxu0 %v1045
  %1396 = vmatprep.subr.mxu0 %v1044
  %1397 = vmatpush1.msra.mxu0 %v1043
  %1398 = vmatprep.subr.mxu0 %v1042
  %1399 = vmatpush1.msra.mxu0 %v1041
  %1400 = vmatprep.subr.mxu0 %v1040
  %1401 = vmatpush1.msra.mxu0 %v1039
  %1402 = vmatprep.subr.mxu0 %v1038
  %1403 = vmatpush1.msra.mxu0 %v1037
  %1404 = vmatprep.subr.mxu0 %v1036
  %1405 = vmatpush1.msra.mxu0 %v1035
  %1406 = vmatprep.subr.mxu0 %v1034
  %1407 = vmatpush1.msra.mxu0 %v1033
  %1408 = vmatprep.subr.mxu0 %v1032
  %1409 = vmatpush1.msra.mxu0 %v1031
  %1410 = vmatprep.subr.mxu0 0.0
  %1411 = vmatpush2.msra.mxu0 0.0
  %1412 = vmatprep.subr.mxu0 0.0
  %1413 = vmatpush2.msra.mxu0 0.0
  %1414 = vmatprep.subr.mxu0 0.0
  %1415 = vmatpush2.msra.mxu0 0.0
  %1416 = vmatprep.subr.mxu0 0.0
  %1417 = vmatpush2.msra.mxu0 0.0
  %1418 = vmatprep.subr.mxu0 0.0
  %1419 = vmatpush2.msra.mxu0 0.0
  %1420 = vmatprep.subr.mxu0 0.0
  %1421 = vmatpush2.msra.mxu0 0.0
  %1422 = vmatprep.subr.mxu0 0.0
  %1423 = vmatpush2.msra.mxu0 0.0
  %1424 = vmatprep.subr.mxu0 0.0
  %1425 = vmatpush2.msra.mxu0 0.0
  %1426 = vmatprep.subr.mxu0 0.0
  %1427 = vmatpush2.msra.mxu0 0.0
  %1428 = vmatprep.subr.mxu0 0.0
  %1429 = vmatpush2.msra.mxu0 0.0
  %1430 = vmatprep.subr.mxu0 0.0
  %1431 = vmatpush2.msra.mxu0 0.0
  %1432 = vmatprep.subr.mxu0 0.0
  %1433 = vmatpush2.msra.mxu0 0.0
  %1434 = vmatprep.subr.mxu0 0.0
  %1435 = vmatpush2.msra.mxu0 0.0
  %1436 = vmatprep.subr.mxu0 0.0
  %1437 = vmatpush2.msra.mxu0 0.0
  %1438 = vmatprep.subr.mxu0 0.0
  %1439 = vmatpush2.msra.mxu0 0.0
  %1440 = vmatprep.subr.mxu0 0.0
  %1441 = vmatpush2.msra.mxu0 0.0
  %1442 = vmatprep.mubr.f32.mxu0 0.0
  %1443 = vmatmul.mubr.f32.gmra.mxu0 %v1211
  %v1444 = vpop.f32.mrf.mxu0
  %v1445 = vadd.f32 %v1084, %v1444
  %v1446 = vpop.f32.mrf.mxu0
  %v1447 = vadd.f32 %v1088, %v1446
  %1448 = vdwg.mxu0
  %v1449 = vadd.f32 %v991, %v1445
  %v1450 = vxor.u32 %v1449, 2147483648
  %v1451 = vmul.f32 %v1450, 1.442695
  %v1452 = vpow.pop %v1451
  %v1453 = vadd.f32 %v1452, 1.0
  %v1454 = vrcp.pop %v1453
  %v1455 = vmul.f32 1.0, %v1454
  %v1456 = vmul.f32 %v1455, %v1447
  %v1457 = vadd.f32 %v993, %v1456
  %v1458 = vtanh.pop %v1457
  %v1459 = vsub.f32 1.0, %v1455
  %1461 = vrot.lane.b32.xlu0 %v1458, 64
  %v1462 = vpop.permute.xlu0 %1461
  %v1464 = vmul.f32 %v1459, %v1462
  %v1465 = vmul.f32 %v1455, %v1207
  %v1466 = vadd.f32 %v1464, %v1465
  %1468 = vrot.lane.b32.xlu0 %v1466, 64
  %v1469 = vpop.permute.xlu0 %1468
  %v1470 = vsel %vm1115, %v1469, 0
  %1472 = vmatprep.subr.mxu0 0.0
  %1473 = vmatpush1.msra.mxu0 0.0
  %1474 = vmatprep.subr.mxu0 0.0
  %1475 = vmatpush1.msra.mxu0 0.0
  %1476 = vmatprep.subr.mxu0 0.0
  %1477 = vmatpush1.msra.mxu0 0.0
  %1478 = vmatprep.subr.mxu0 0.0
  %1479 = vmatpush1.msra.mxu0 0.0
  %1480 = vmatprep.subr.mxu0 0.0
  %1481 = vmatpush1.msra.mxu0 0.0
  %1482 = vmatprep.subr.mxu0 0.0
  %1483 = vmatpush1.msra.mxu0 0.0
  %1484 = vmatprep.subr.mxu0 0.0
  %1485 = vmatpush1.msra.mxu0 0.0
  %1486 = vmatprep.subr.mxu0 0.0
  %1487 = vmatpush1.msra.mxu0 0.0
  %1488 = vmatprep.subr.mxu0 %v1062
  %1489 = vmatpush1.msra.mxu0 %v1061
  %1490 = vmatprep.subr.mxu0 %v1060
  %1491 = vmatpush1.msra.mxu0 %v1059
  %1492 = vmatprep.subr.mxu0 %v1058
  %1493 = vmatpush1.msra.mxu0 %v1057
  %1494 = vmatprep.subr.mxu0 %v1056
  %1495 = vmatpush1.msra.mxu0 %v1055
  %1496 = vmatprep.subr.mxu0 %v1054
  %1497 = vmatpush1.msra.mxu0 %v1053
  %1498 = vmatprep.subr.mxu0 %v1052
  %1499 = vmatpush1.msra.mxu0 %v1051
  %1500 = vmatprep.subr.mxu0 %v1050
  %1501 = vmatpush1.msra.mxu0 %v1049
  %1502 = vmatprep.subr.mxu0 %v1048
  %1503 = vmatpush1.msra.mxu0 %v1047
  %1504 = vmatprep.subr.mxu0 0.0
  %1505 = vmatpush2.msra.mxu0 0.0
  %1506 = vmatprep.subr.mxu0 0.0
  %1507 = vmatpush2.msra.mxu0 0.0
  %1508 = vmatprep.subr.mxu0 0.0
  %1509 = vmatpush2.msra.mxu0 0.0
  %1510 = vmatprep.subr.mxu0 0.0
  %1511 = vmatpush2.msra.mxu0 0.0
  %1512 = vmatprep.subr.mxu0 0.0
  %1513 = vmatpush2.msra.mxu0 0.0
  %1514 = vmatprep.subr.mxu0 0.0
  %1515 = vmatpush2.msra.mxu0 0.0
  %1516 = vmatprep.subr.mxu0 0.0
  %1517 = vmatpush2.msra.mxu0 0.0
  %1518 = vmatprep.subr.mxu0 0.0
  %1519 = vmatpush2.msra.mxu0 0.0
  %1520 = vmatprep.subr.mxu0 0.0
  %1521 = vmatpush2.msra.mxu0 0.0
  %1522 = vmatprep.subr.mxu0 0.0
  %1523 = vmatpush2.msra.mxu0 0.0
  %1524 = vmatprep.subr.mxu0 0.0
  %1525 = vmatpush2.msra.mxu0 0.0
  %1526 = vmatprep.subr.mxu0 0.0
  %1527 = vmatpush2.msra.mxu0 0.0
  %1528 = vmatprep.subr.mxu0 0.0
  %1529 = vmatpush2.msra.mxu0 0.0
  %1530 = vmatprep.subr.mxu0 0.0
  %1531 = vmatpush2.msra.mxu0 0.0
  %1532 = vmatprep.subr.mxu0 0.0
  %1533 = vmatpush2.msra.mxu0 0.0
  %1534 = vmatprep.subr.mxu0 0.0
  %1535 = vmatpush2.msra.mxu0 0.0
  %1536 = vmatprep.mubr.f32.mxu0 0.0
  %1537 = vmatmul.mubr.f32.gmra.mxu0 %v1470
  %v1538 = vpop.f32.mrf.mxu0
  %v1539 = vadd.f32 %v1096, %v1538
  %v1540 = vpop.f32.mrf.mxu0
  %v1541 = vadd.f32 %v1100, %v1540
  %1542 = vdwg.mxu0
  %v1543 = vsel %vm1115, %v1375, 0
  %1545 = vmatprep.subr.mxu0 0.0
  %1546 = vmatpush1.msra.mxu0 0.0
  %1547 = vmatprep.subr.mxu0 0.0
  %1548 = vmatpush1.msra.mxu0 0.0
  %1549 = vmatprep.subr.mxu0 0.0
  %1550 = vmatpush1.msra.mxu0 0.0
  %1551 = vmatprep.subr.mxu0 0.0
  %1552 = vmatpush1.msra.mxu0 0.0
  %1553 = vmatprep.subr.mxu0 0.0
  %1554 = vmatpush1.msra.mxu0 0.0
  %1555 = vmatprep.subr.mxu0 0.0
  %1556 = vmatpush1.msra.mxu0 0.0
  %1557 = vmatprep.subr.mxu0 0.0
  %1558 = vmatpush1.msra.mxu0 0.0
  %1559 = vmatprep.subr.mxu0 0.0
  %1560 = vmatpush1.msra.mxu0 0.0
  %1561 = vmatprep.subr.mxu0 %v1078
  %1562 = vmatpush1.msra.mxu0 %v1077
  %1563 = vmatprep.subr.mxu0 %v1076
  %1564 = vmatpush1.msra.mxu0 %v1075
  %1565 = vmatprep.subr.mxu0 %v1074
  %1566 = vmatpush1.msra.mxu0 %v1073
  %1567 = vmatprep.subr.mxu0 %v1072
  %1568 = vmatpush1.msra.mxu0 %v1071
  %1569 = vmatprep.subr.mxu0 %v1070
  %1570 = vmatpush1.msra.mxu0 %v1069
  %1571 = vmatprep.subr.mxu0 %v1068
  %1572 = vmatpush1.msra.mxu0 %v1067
  %1573 = vmatprep.subr.mxu0 %v1066
  %1574 = vmatpush1.msra.mxu0 %v1065
  %1575 = vmatprep.subr.mxu0 %v1064
  %1576 = vmatpush1.msra.mxu0 %v1063
  %1577 = vmatprep.subr.mxu0 0.0
  %1578 = vmatpush2.msra.mxu0 0.0
  %1579 = vmatprep.subr.mxu0 0.0
  %1580 = vmatpush2.msra.mxu0 0.0
  %1581 = vmatprep.subr.mxu0 0.0
  %1582 = vmatpush2.msra.mxu0 0.0
  %1583 = vmatprep.subr.mxu0 0.0
  %1584 = vmatpush2.msra.mxu0 0.0
  %1585 = vmatprep.subr.mxu0 0.0
  %1586 = vmatpush2.msra.mxu0 0.0
  %1587 = vmatprep.subr.mxu0 0.0
  %1588 = vmatpush2.msra.mxu0 0.0
  %1589 = vmatprep.subr.mxu0 0.0
  %1590 = vmatpush2.msra.mxu0 0.0
  %1591 = vmatprep.subr.mxu0 0.0
  %1592 = vmatpush2.msra.mxu0 0.0
  %1593 = vmatprep.subr.mxu0 0.0
  %1594 = vmatpush2.msra.mxu0 0.0
  %1595 = vmatprep.subr.mxu0 0.0
  %1596 = vmatpush2.msra.mxu0 0.0
  %1597 = vmatprep.subr.mxu0 0.0
  %1598 = vmatpush2.msra.mxu0 0.0
  %1599 = vmatprep.subr.mxu0 0.0
  %1600 = vmatpush2.msra.mxu0 0.0
  %1601 = vmatprep.subr.mxu0 0.0
  %1602 = vmatpush2.msra.mxu0 0.0
  %1603 = vmatprep.subr.mxu0 0.0
  %1604 = vmatpush2.msra.mxu0 0.0
  %1605 = vmatprep.subr.mxu0 0.0
  %1606 = vmatpush2.msra.mxu0 0.0
  %1607 = vmatprep.subr.mxu0 0.0
  %1608 = vmatpush2.msra.mxu0 0.0
  %1609 = vmatprep.mubr.f32.mxu0 0.0
  %1610 = vmatmul.mubr.f32.gmra.mxu0 %v1543
  %v1611 = vpop.f32.mrf.mxu0
  %v1612 = vadd.f32 %v1108, %v1611
  %v1613 = vpop.f32.mrf.mxu0
  %v1614 = vadd.f32 %v1112, %v1613
  %1615 = vdwg.mxu0
  %v1616 = vadd.f32 %v1539, %v1612
  %v1617 = vxor.u32 %v1616, 2147483648
  %v1618 = vmul.f32 %v1617, 1.442695
  %v1619 = vpow.pop %v1618
  %v1620 = vadd.f32 %v1619, 1.0
  %v1621 = vrcp.pop %v1620
  %v1622 = vmul.f32 1.0, %v1621
  %v1623 = vmul.f32 %v1622, %v1614
  %v1624 = vadd.f32 %v1541, %v1623
  %v1625 = vtanh.pop %v1624
  %v1626 = vsub.f32 1.0, %v1622
  %1628 = vrot.lane.b32.xlu0 %v1625, 64
  %v1629 = vpop.permute.xlu0 %1628
  %v1631 = vmul.f32 %v1626, %v1629
  %v1632 = vmul.f32 %v1622, %v1372
  %v1633 = vadd.f32 %v1631, %v1632
  %1635 = vrot.lane.b32.xlu0 %v1633, 64
  %v1636 = vpop.permute.xlu0 %1635
  %1638 = vst.msk [vmem:[#allocation2 + $0x8] sm:$0xff] %vm1115, %v1636
  %1639 = vmatprep.subr.mxu0 0.0
  %1640 = vmatpush1.msra.mxu0 0.0
  %1641 = vmatprep.subr.mxu0 0.0
  %1642 = vmatpush1.msra.mxu0 0.0
  %1643 = vmatprep.subr.mxu0 0.0
  %1644 = vmatpush1.msra.mxu0 0.0
  %1645 = vmatprep.subr.mxu0 0.0
  %1646 = vmatpush1.msra.mxu0 0.0
  %1647 = vmatprep.subr.mxu0 0.0
  %1648 = vmatpush1.msra.mxu0 0.0
  %1649 = vmatprep.subr.mxu0 0.0
  %1650 = vmatpush1.msra.mxu0 0.0
  %1651 = vmatprep.subr.mxu0 0.0
  %1652 = vmatpush1.msra.mxu0 0.0
  %1653 = vmatprep.subr.mxu0 0.0
  %1654 = vmatpush1.msra.mxu0 0.0
  %1655 = vmatprep.subr.mxu0 %v1046
  %1656 = vmatpush1.msra.mxu0 %v1045
  %1657 = vmatprep.subr.mxu0 %v1044
  %1658 = vmatpush1.msra.mxu0 %v1043
  %1659 = vmatprep.subr.mxu0 %v1042
  %1660 = vmatpush1.msra.mxu0 %v1041
  %1661 = vmatprep.subr.mxu0 %v1040
  %1662 = vmatpush1.msra.mxu0 %v1039
  %1663 = vmatprep.subr.mxu0 %v1038
  %1664 = vmatpush1.msra.mxu0 %v1037
  %1665 = vmatprep.subr.mxu0 %v1036
  %1666 = vmatpush1.msra.mxu0 %v1035
  %1667 = vmatprep.subr.mxu0 %v1034
  %1668 = vmatpush1.msra.mxu0 %v1033
  %1669 = vmatprep.subr.mxu0 %v1032
  %1670 = vmatpush1.msra.mxu0 %v1031
  %1671 = vmatprep.subr.mxu0 0.0
  %1672 = vmatpush2.msra.mxu0 0.0
  %1673 = vmatprep.subr.mxu0 0.0
  %1674 = vmatpush2.msra.mxu0 0.0
  %1675 = vmatprep.subr.mxu0 0.0
  %1676 = vmatpush2.msra.mxu0 0.0
  %1677 = vmatprep.subr.mxu0 0.0
  %1678 = vmatpush2.msra.mxu0 0.0
  %1679 = vmatprep.subr.mxu0 0.0
  %1680 = vmatpush2.msra.mxu0 0.0
  %1681 = vmatprep.subr.mxu0 0.0
  %1682 = vmatpush2.msra.mxu0 0.0
  %1683 = vmatprep.subr.mxu0 0.0
  %1684 = vmatpush2.msra.mxu0 0.0
  %1685 = vmatprep.subr.mxu0 0.0
  %1686 = vmatpush2.msra.mxu0 0.0
  %1687 = vmatprep.subr.mxu0 0.0
  %1688 = vmatpush2.msra.mxu0 0.0
  %1689 = vmatprep.subr.mxu0 0.0
  %1690 = vmatpush2.msra.mxu0 0.0
  %1691 = vmatprep.subr.mxu0 0.0
  %1692 = vmatpush2.msra.mxu0 0.0
  %1693 = vmatprep.subr.mxu0 0.0
  %1694 = vmatpush2.msra.mxu0 0.0
  %1695 = vmatprep.subr.mxu0 0.0
  %1696 = vmatpush2.msra.mxu0 0.0
  %1697 = vmatprep.subr.mxu0 0.0
  %1698 = vmatpush2.msra.mxu0 0.0
  %1699 = vmatprep.subr.mxu0 0.0
  %1700 = vmatpush2.msra.mxu0 0.0
  %1701 = vmatprep.subr.mxu0 0.0
  %1702 = vmatpush2.msra.mxu0 0.0
  %1703 = vmatprep.mubr.f32.mxu0 0.0
  %1704 = vmatmul.mubr.f32.gmra.mxu0 %v1470
  %v1705 = vpop.f32.mrf.mxu0
  %v1706 = vadd.f32 %v1084, %v1705
  %v1707 = vpop.f32.mrf.mxu0
  %v1708 = vadd.f32 %v1088, %v1707
  %1709 = vdwg.mxu0
  %v1710 = vadd.f32 %v997, %v1706
  %v1711 = vxor.u32 %v1710, 2147483648
  %v1712 = vmul.f32 %v1711, 1.442695
  %v1713 = vpow.pop %v1712
  %v1714 = vadd.f32 %v1713, 1.0
  %v1715 = vrcp.pop %v1714
  %v1716 = vmul.f32 1.0, %v1715
  %v1717 = vmul.f32 %v1716, %v1708
  %v1718 = vadd.f32 %v999, %v1717
  %v1719 = vtanh.pop %v1718
  %v1720 = vsub.f32 1.0, %v1716
  %1722 = vrot.lane.b32.xlu0 %v1719, 64
  %v1723 = vpop.permute.xlu0 %1722
  %v1725 = vmul.f32 %v1720, %v1723
  %v1726 = vmul.f32 %v1716, %v1466
  %v1727 = vadd.f32 %v1725, %v1726
  %1729 = vrot.lane.b32.xlu0 %v1727, 64
  %v1730 = vpop.permute.xlu0 %1729
  %v1731 = vsel %vm1115, %v1730, 0
  %1733 = vmatprep.subr.mxu0 0.0
  %1734 = vmatpush1.msra.mxu0 0.0
  %1735 = vmatprep.subr.mxu0 0.0
  %1736 = vmatpush1.msra.mxu0 0.0
  %1737 = vmatprep.subr.mxu0 0.0
  %1738 = vmatpush1.msra.mxu0 0.0
  %1739 = vmatprep.subr.mxu0 0.0
  %1740 = vmatpush1.msra.mxu0 0.0
  %1741 = vmatprep.subr.mxu0 0.0
  %1742 = vmatpush1.msra.mxu0 0.0
  %1743 = vmatprep.subr.mxu0 0.0
  %1744 = vmatpush1.msra.mxu0 0.0
  %1745 = vmatprep.subr.mxu0 0.0
  %1746 = vmatpush1.msra.mxu0 0.0
  %1747 = vmatprep.subr.mxu0 0.0
  %1748 = vmatpush1.msra.mxu0 0.0
  %1749 = vmatprep.subr.mxu0 %v1062
  %1750 = vmatpush1.msra.mxu0 %v1061
  %1751 = vmatprep.subr.mxu0 %v1060
  %1752 = vmatpush1.msra.mxu0 %v1059
  %1753 = vmatprep.subr.mxu0 %v1058
  %1754 = vmatpush1.msra.mxu0 %v1057
  %1755 = vmatprep.subr.mxu0 %v1056
  %1756 = vmatpush1.msra.mxu0 %v1055
  %1757 = vmatprep.subr.mxu0 %v1054
  %1758 = vmatpush1.msra.mxu0 %v1053
  %1759 = vmatprep.subr.mxu0 %v1052
  %1760 = vmatpush1.msra.mxu0 %v1051
  %1761 = vmatprep.subr.mxu0 %v1050
  %1762 = vmatpush1.msra.mxu0 %v1049
  %1763 = vmatprep.subr.mxu0 %v1048
  %1764 = vmatpush1.msra.mxu0 %v1047
  %1765 = vmatprep.subr.mxu0 0.0
  %1766 = vmatpush2.msra.mxu0 0.0
  %1767 = vmatprep.subr.mxu0 0.0
  %1768 = vmatpush2.msra.mxu0 0.0
  %1769 = vmatprep.subr.mxu0 0.0
  %1770 = vmatpush2.msra.mxu0 0.0
  %1771 = vmatprep.subr.mxu0 0.0
  %1772 = vmatpush2.msra.mxu0 0.0
  %1773 = vmatprep.subr.mxu0 0.0
  %1774 = vmatpush2.msra.mxu0 0.0
  %1775 = vmatprep.subr.mxu0 0.0
  %1776 = vmatpush2.msra.mxu0 0.0
  %1777 = vmatprep.subr.mxu0 0.0
  %1778 = vmatpush2.msra.mxu0 0.0
  %1779 = vmatprep.subr.mxu0 0.0
  %1780 = vmatpush2.msra.mxu0 0.0
  %1781 = vmatprep.subr.mxu0 0.0
  %1782 = vmatpush2.msra.mxu0 0.0
  %1783 = vmatprep.subr.mxu0 0.0
  %1784 = vmatpush2.msra.mxu0 0.0
  %1785 = vmatprep.subr.mxu0 0.0
  %1786 = vmatpush2.msra.mxu0 0.0
  %1787 = vmatprep.subr.mxu0 0.0
  %1788 = vmatpush2.msra.mxu0 0.0
  %1789 = vmatprep.subr.mxu0 0.0
  %1790 = vmatpush2.msra.mxu0 0.0
  %1791 = vmatprep.subr.mxu0 0.0
  %1792 = vmatpush2.msra.mxu0 0.0
  %1793 = vmatprep.subr.mxu0 0.0
  %1794 = vmatpush2.msra.mxu0 0.0
  %1795 = vmatprep.subr.mxu0 0.0
  %1796 = vmatpush2.msra.mxu0 0.0
  %1797 = vmatprep.mubr.f32.mxu0 0.0
  %1798 = vmatmul.mubr.f32.gmra.mxu0 %v1731
  %v1799 = vpop.f32.mrf.mxu0
  %v1800 = vadd.f32 %v1096, %v1799
  %v1801 = vpop.f32.mrf.mxu0
  %v1802 = vadd.f32 %v1100, %v1801
  %1803 = vdwg.mxu0
  %v1804 = vsel %vm1115, %v1636, 0
  %1806 = vmatprep.subr.mxu0 0.0
  %1807 = vmatpush1.msra.mxu0 0.0
  %1808 = vmatprep.subr.mxu0 0.0
  %1809 = vmatpush1.msra.mxu0 0.0
  %1810 = vmatprep.subr.mxu0 0.0
  %1811 = vmatpush1.msra.mxu0 0.0
  %1812 = vmatprep.subr.mxu0 0.0
  %1813 = vmatpush1.msra.mxu0 0.0
  %1814 = vmatprep.subr.mxu0 0.0
  %1815 = vmatpush1.msra.mxu0 0.0
  %1816 = vmatprep.subr.mxu0 0.0
  %1817 = vmatpush1.msra.mxu0 0.0
  %1818 = vmatprep.subr.mxu0 0.0
  %1819 = vmatpush1.msra.mxu0 0.0
  %1820 = vmatprep.subr.mxu0 0.0
  %1821 = vmatpush1.msra.mxu0 0.0
  %1822 = vmatprep.subr.mxu0 %v1078
  %1823 = vmatpush1.msra.mxu0 %v1077
  %1824 = vmatprep.subr.mxu0 %v1076
  %1825 = vmatpush1.msra.mxu0 %v1075
  %1826 = vmatprep.subr.mxu0 %v1074
  %1827 = vmatpush1.msra.mxu0 %v1073
  %1828 = vmatprep.subr.mxu0 %v1072
  %1829 = vmatpush1.msra.mxu0 %v1071
  %1830 = vmatprep.subr.mxu0 %v1070
  %1831 = vmatpush1.msra.mxu0 %v1069
  %1832 = vmatprep.subr.mxu0 %v1068
  %1833 = vmatpush1.msra.mxu0 %v1067
  %1834 = vmatprep.subr.mxu0 %v1066
  %1835 = vmatpush1.msra.mxu0 %v1065
  %1836 = vmatprep.subr.mxu0 %v1064
  %1837 = vmatpush1.msra.mxu0 %v1063
  %1838 = vmatprep.subr.mxu0 0.0
  %1839 = vmatpush2.msra.mxu0 0.0
  %1840 = vmatprep.subr.mxu0 0.0
  %1841 = vmatpush2.msra.mxu0 0.0
  %1842 = vmatprep.subr.mxu0 0.0
  %1843 = vmatpush2.msra.mxu0 0.0
  %1844 = vmatprep.subr.mxu0 0.0
  %1845 = vmatpush2.msra.mxu0 0.0
  %1846 = vmatprep.subr.mxu0 0.0
  %1847 = vmatpush2.msra.mxu0 0.0
  %1848 = vmatprep.subr.mxu0 0.0
  %1849 = vmatpush2.msra.mxu0 0.0
  %1850 = vmatprep.subr.mxu0 0.0
  %1851 = vmatpush2.msra.mxu0 0.0
  %1852 = vmatprep.subr.mxu0 0.0
  %1853 = vmatpush2.msra.mxu0 0.0
  %1854 = vmatprep.subr.mxu0 0.0
  %1855 = vmatpush2.msra.mxu0 0.0
  %1856 = vmatprep.subr.mxu0 0.0
  %1857 = vmatpush2.msra.mxu0 0.0
  %1858 = vmatprep.subr.mxu0 0.0
  %1859 = vmatpush2.msra.mxu0 0.0
  %1860 = vmatprep.subr.mxu0 0.0
  %1861 = vmatpush2.msra.mxu0 0.0
  %1862 = vmatprep.subr.mxu0 0.0
  %1863 = vmatpush2.msra.mxu0 0.0
  %1864 = vmatprep.subr.mxu0 0.0
  %1865 = vmatpush2.msra.mxu0 0.0
  %1866 = vmatprep.subr.mxu0 0.0
  %1867 = vmatpush2.msra.mxu0 0.0
  %1868 = vmatprep.subr.mxu0 0.0
  %1869 = vmatpush2.msra.mxu0 0.0
  %1870 = vmatprep.mubr.f32.mxu0 0.0
  %1871 = vmatmul.mubr.f32.gmra.mxu0 %v1804
  %v1872 = vpop.f32.mrf.mxu0
  %v1873 = vadd.f32 %v1108, %v1872
  %v1874 = vpop.f32.mrf.mxu0
  %v1875 = vadd.f32 %v1112, %v1874
  %1876 = vdwg.mxu0
  %v1877 = vadd.f32 %v1800, %v1873
  %v1878 = vxor.u32 %v1877, 2147483648
  %v1879 = vmul.f32 %v1878, 1.442695
  %v1880 = vpow.pop %v1879
  %v1881 = vadd.f32 %v1880, 1.0
  %v1882 = vrcp.pop %v1881
  %v1883 = vmul.f32 1.0, %v1882
  %v1884 = vmul.f32 %v1883, %v1875
  %v1885 = vadd.f32 %v1802, %v1884
  %v1886 = vtanh.pop %v1885
  %v1887 = vsub.f32 1.0, %v1883
  %1889 = vrot.lane.b32.xlu0 %v1886, 64
  %v1890 = vpop.permute.xlu0 %1889
  %v1892 = vmul.f32 %v1887, %v1890
  %v1893 = vmul.f32 %v1883, %v1633
  %v1894 = vadd.f32 %v1892, %v1893
  %1896 = vrot.lane.b32.xlu0 %v1894, 64
  %v1897 = vpop.permute.xlu0 %1896
  %1899 = vst.msk [vmem:[#allocation2 + $0x10] sm:$0xff] %vm1115, %v1897
  %1900 = vmatprep.subr.mxu0 0.0
  %1901 = vmatpush1.msra.mxu0 0.0
  %1902 = vmatprep.subr.mxu0 0.0
  %1903 = vmatpush1.msra.mxu0 0.0
  %1904 = vmatprep.subr.mxu0 0.0
  %1905 = vmatpush1.msra.mxu0 0.0
  %1906 = vmatprep.subr.mxu0 0.0
  %1907 = vmatpush1.msra.mxu0 0.0
  %1908 = vmatprep.subr.mxu0 0.0
  %1909 = vmatpush1.msra.mxu0 0.0
  %1910 = vmatprep.subr.mxu0 0.0
  %1911 = vmatpush1.msra.mxu0 0.0
  %1912 = vmatprep.subr.mxu0 0.0
  %1913 = vmatpush1.msra.mxu0 0.0
  %1914 = vmatprep.subr.mxu0 0.0
  %1915 = vmatpush1.msra.mxu0 0.0
  %1916 = vmatprep.subr.mxu0 %v1046
  %1917 = vmatpush1.msra.mxu0 %v1045
  %1918 = vmatprep.subr.mxu0 %v1044
  %1919 = vmatpush1.msra.mxu0 %v1043
  %1920 = vmatprep.subr.mxu0 %v1042
  %1921 = vmatpush1.msra.mxu0 %v1041
  %1922 = vmatprep.subr.mxu0 %v1040
  %1923 = vmatpush1.msra.mxu0 %v1039
  %1924 = vmatprep.subr.mxu0 %v1038
  %1925 = vmatpush1.msra.mxu0 %v1037
  %1926 = vmatprep.subr.mxu0 %v1036
  %1927 = vmatpush1.msra.mxu0 %v1035
  %1928 = vmatprep.subr.mxu0 %v1034
  %1929 = vmatpush1.msra.mxu0 %v1033
  %1930 = vmatprep.subr.mxu0 %v1032
  %1931 = vmatpush1.msra.mxu0 %v1031
  %1932 = vmatprep.subr.mxu0 0.0
  %1933 = vmatpush2.msra.mxu0 0.0
  %1934 = vmatprep.subr.mxu0 0.0
  %1935 = vmatpush2.msra.mxu0 0.0
  %1936 = vmatprep.subr.mxu0 0.0
  %1937 = vmatpush2.msra.mxu0 0.0
  %1938 = vmatprep.subr.mxu0 0.0
  %1939 = vmatpush2.msra.mxu0 0.0
  %1940 = vmatprep.subr.mxu0 0.0
  %1941 = vmatpush2.msra.mxu0 0.0
  %1942 = vmatprep.subr.mxu0 0.0
  %1943 = vmatpush2.msra.mxu0 0.0
  %1944 = vmatprep.subr.mxu0 0.0
  %1945 = vmatpush2.msra.mxu0 0.0
  %1946 = vmatprep.subr.mxu0 0.0
  %1947 = vmatpush2.msra.mxu0 0.0
  %1948 = vmatprep.subr.mxu0 0.0
  %1949 = vmatpush2.msra.mxu0 0.0
  %1950 = vmatprep.subr.mxu0 0.0
  %1951 = vmatpush2.msra.mxu0 0.0
  %1952 = vmatprep.subr.mxu0 0.0
  %1953 = vmatpush2.msra.mxu0 0.0
  %1954 = vmatprep.subr.mxu0 0.0
  %1955 = vmatpush2.msra.mxu0 0.0
  %1956 = vmatprep.subr.mxu0 0.0
  %1957 = vmatpush2.msra.mxu0 0.0
  %1958 = vmatprep.subr.mxu0 0.0
  %1959 = vmatpush2.msra.mxu0 0.0
  %1960 = vmatprep.subr.mxu0 0.0
  %1961 = vmatpush2.msra.mxu0 0.0
  %1962 = vmatprep.subr.mxu0 0.0
  %1963 = vmatpush2.msra.mxu0 0.0
  %1964 = vmatprep.mubr.f32.mxu0 0.0
  %1965 = vmatmul.mubr.f32.gmra.mxu0 %v1731
  %v1966 = vpop.f32.mrf.mxu0
  %v1967 = vadd.f32 %v1084, %v1966
  %v1968 = vpop.f32.mrf.mxu0
  %v1969 = vadd.f32 %v1088, %v1968
  %1970 = vdwg.mxu0
  %v1971 = vadd.f32 %v1003, %v1967
  %v1972 = vxor.u32 %v1971, 2147483648
  %v1973 = vmul.f32 %v1972, 1.442695
  %v1974 = vpow.pop %v1973
  %v1975 = vadd.f32 %v1974, 1.0
  %v1976 = vrcp.pop %v1975
  %v1977 = vmul.f32 1.0, %v1976
  %v1978 = vmul.f32 %v1977, %v1969
  %v1979 = vadd.f32 %v1005, %v1978
  %v1980 = vtanh.pop %v1979
  %v1981 = vsub.f32 1.0, %v1977
  %1983 = vrot.lane.b32.xlu0 %v1980, 64
  %v1984 = vpop.permute.xlu0 %1983
  %v1986 = vmul.f32 %v1981, %v1984
  %v1987 = vmul.f32 %v1977, %v1727
  %v1988 = vadd.f32 %v1986, %v1987
  %1990 = vrot.lane.b32.xlu0 %v1988, 64
  %v1991 = vpop.permute.xlu0 %1990
  %v1992 = vsel %vm1115, %v1991, 0
  %1994 = vmatprep.subr.mxu0 0.0
  %1995 = vmatpush1.msra.mxu0 0.0
  %1996 = vmatprep.subr.mxu0 0.0
  %1997 = vmatpush1.msra.mxu0 0.0
  %1998 = vmatprep.subr.mxu0 0.0
  %1999 = vmatpush1.msra.mxu0 0.0
  %2000 = vmatprep.subr.mxu0 0.0
  %2001 = vmatpush1.msra.mxu0 0.0
  %2002 = vmatprep.subr.mxu0 0.0
  %2003 = vmatpush1.msra.mxu0 0.0
  %2004 = vmatprep.subr.mxu0 0.0
  %2005 = vmatpush1.msra.mxu0 0.0
  %2006 = vmatprep.subr.mxu0 0.0
  %2007 = vmatpush1.msra.mxu0 0.0
  %2008 = vmatprep.subr.mxu0 0.0
  %2009 = vmatpush1.msra.mxu0 0.0
  %2010 = vmatprep.subr.mxu0 %v1062
  %2011 = vmatpush1.msra.mxu0 %v1061
  %2012 = vmatprep.subr.mxu0 %v1060
  %2013 = vmatpush1.msra.mxu0 %v1059
  %2014 = vmatprep.subr.mxu0 %v1058
  %2015 = vmatpush1.msra.mxu0 %v1057
  %2016 = vmatprep.subr.mxu0 %v1056
  %2017 = vmatpush1.msra.mxu0 %v1055
  %2018 = vmatprep.subr.mxu0 %v1054
  %2019 = vmatpush1.msra.mxu0 %v1053
  %2020 = vmatprep.subr.mxu0 %v1052
  %2021 = vmatpush1.msra.mxu0 %v1051
  %2022 = vmatprep.subr.mxu0 %v1050
  %2023 = vmatpush1.msra.mxu0 %v1049
  %2024 = vmatprep.subr.mxu0 %v1048
  %2025 = vmatpush1.msra.mxu0 %v1047
  %2026 = vmatprep.subr.mxu0 0.0
  %2027 = vmatpush2.msra.mxu0 0.0
  %2028 = vmatprep.subr.mxu0 0.0
  %2029 = vmatpush2.msra.mxu0 0.0
  %2030 = vmatprep.subr.mxu0 0.0
  %2031 = vmatpush2.msra.mxu0 0.0
  %2032 = vmatprep.subr.mxu0 0.0
  %2033 = vmatpush2.msra.mxu0 0.0
  %2034 = vmatprep.subr.mxu0 0.0
  %2035 = vmatpush2.msra.mxu0 0.0
  %2036 = vmatprep.subr.mxu0 0.0
  %2037 = vmatpush2.msra.mxu0 0.0
  %2038 = vmatprep.subr.mxu0 0.0
  %2039 = vmatpush2.msra.mxu0 0.0
  %2040 = vmatprep.subr.mxu0 0.0
  %2041 = vmatpush2.msra.mxu0 0.0
  %2042 = vmatprep.subr.mxu0 0.0
  %2043 = vmatpush2.msra.mxu0 0.0
  %2044 = vmatprep.subr.mxu0 0.0
  %2045 = vmatpush2.msra.mxu0 0.0
  %2046 = vmatprep.subr.mxu0 0.0
  %2047 = vmatpush2.msra.mxu0 0.0
  %2048 = vmatprep.subr.mxu0 0.0
  %2049 = vmatpush2.msra.mxu0 0.0
  %2050 = vmatprep.subr.mxu0 0.0
  %2051 = vmatpush2.msra.mxu0 0.0
  %2052 = vmatprep.subr.mxu0 0.0
  %2053 = vmatpush2.msra.mxu0 0.0
  %2054 = vmatprep.subr.mxu0 0.0
  %2055 = vmatpush2.msra.mxu0 0.0
  %2056 = vmatprep.subr.mxu0 0.0
  %2057 = vmatpush2.msra.mxu0 0.0
  %2058 = vmatprep.mubr.f32.mxu0 0.0
  %2059 = vmatmul.mubr.f32.gmra.mxu0 %v1992
  %v2060 = vpop.f32.mrf.mxu0
  %v2061 = vadd.f32 %v1096, %v2060
  %v2062 = vpop.f32.mrf.mxu0
  %v2063 = vadd.f32 %v1100, %v2062
  %2064 = vdwg.mxu0
  %v2065 = vsel %vm1115, %v1897, 0
  %2067 = vmatprep.subr.mxu0 0.0
  %2068 = vmatpush1.msra.mxu0 0.0
  %2069 = vmatprep.subr.mxu0 0.0
  %2070 = vmatpush1.msra.mxu0 0.0
  %2071 = vmatprep.subr.mxu0 0.0
  %2072 = vmatpush1.msra.mxu0 0.0
  %2073 = vmatprep.subr.mxu0 0.0
  %2074 = vmatpush1.msra.mxu0 0.0
  %2075 = vmatprep.subr.mxu0 0.0
  %2076 = vmatpush1.msra.mxu0 0.0
  %2077 = vmatprep.subr.mxu0 0.0
  %2078 = vmatpush1.msra.mxu0 0.0
  %2079 = vmatprep.subr.mxu0 0.0
  %2080 = vmatpush1.msra.mxu0 0.0
  %2081 = vmatprep.subr.mxu0 0.0
  %2082 = vmatpush1.msra.mxu0 0.0
  %2083 = vmatprep.subr.mxu0 %v1078
  %2084 = vmatpush1.msra.mxu0 %v1077
  %2085 = vmatprep.subr.mxu0 %v1076
  %2086 = vmatpush1.msra.mxu0 %v1075
  %2087 = vmatprep.subr.mxu0 %v1074
  %2088 = vmatpush1.msra.mxu0 %v1073
  %2089 = vmatprep.subr.mxu0 %v1072
  %2090 = vmatpush1.msra.mxu0 %v1071
  %2091 = vmatprep.subr.mxu0 %v1070
  %2092 = vmatpush1.msra.mxu0 %v1069
  %2093 = vmatprep.subr.mxu0 %v1068
  %2094 = vmatpush1.msra.mxu0 %v1067
  %2095 = vmatprep.subr.mxu0 %v1066
  %2096 = vmatpush1.msra.mxu0 %v1065
  %2097 = vmatprep.subr.mxu0 %v1064
  %2098 = vmatpush1.msra.mxu0 %v1063
  %2099 = vmatprep.subr.mxu0 0.0
  %2100 = vmatpush2.msra.mxu0 0.0
  %2101 = vmatprep.subr.mxu0 0.0
  %2102 = vmatpush2.msra.mxu0 0.0
  %2103 = vmatprep.subr.mxu0 0.0
  %2104 = vmatpush2.msra.mxu0 0.0
  %2105 = vmatprep.subr.mxu0 0.0
  %2106 = vmatpush2.msra.mxu0 0.0
  %2107 = vmatprep.subr.mxu0 0.0
  %2108 = vmatpush2.msra.mxu0 0.0
  %2109 = vmatprep.subr.mxu0 0.0
  %2110 = vmatpush2.msra.mxu0 0.0
  %2111 = vmatprep.subr.mxu0 0.0
  %2112 = vmatpush2.msra.mxu0 0.0
  %2113 = vmatprep.subr.mxu0 0.0
  %2114 = vmatpush2.msra.mxu0 0.0
  %2115 = vmatprep.subr.mxu0 0.0
  %2116 = vmatpush2.msra.mxu0 0.0
  %2117 = vmatprep.subr.mxu0 0.0
  %2118 = vmatpush2.msra.mxu0 0.0
  %2119 = vmatprep.subr.mxu0 0.0
  %2120 = vmatpush2.msra.mxu0 0.0
  %2121 = vmatprep.subr.mxu0 0.0
  %2122 = vmatpush2.msra.mxu0 0.0
  %2123 = vmatprep.subr.mxu0 0.0
  %2124 = vmatpush2.msra.mxu0 0.0
  %2125 = vmatprep.subr.mxu0 0.0
  %2126 = vmatpush2.msra.mxu0 0.0
  %2127 = vmatprep.subr.mxu0 0.0
  %2128 = vmatpush2.msra.mxu0 0.0
  %2129 = vmatprep.subr.mxu0 0.0
  %2130 = vmatpush2.msra.mxu0 0.0
  %2131 = vmatprep.mubr.f32.mxu0 0.0
  %2132 = vmatmul.mubr.f32.gmra.mxu0 %v2065
  %v2133 = vpop.f32.mrf.mxu0
  %v2134 = vadd.f32 %v1108, %v2133
  %v2135 = vpop.f32.mrf.mxu0
  %v2136 = vadd.f32 %v1112, %v2135
  %2137 = vdwg.mxu0
  %v2138 = vadd.f32 %v2061, %v2134
  %v2139 = vxor.u32 %v2138, 2147483648
  %v2140 = vmul.f32 %v2139, 1.442695
  %v2141 = vpow.pop %v2140
  %v2142 = vadd.f32 %v2141, 1.0
  %v2143 = vrcp.pop %v2142
  %v2144 = vmul.f32 1.0, %v2143
  %v2145 = vmul.f32 %v2144, %v2136
  %v2146 = vadd.f32 %v2063, %v2145
  %v2147 = vtanh.pop %v2146
  %v2148 = vsub.f32 1.0, %v2144
  %2150 = vrot.lane.b32.xlu0 %v2147, 64
  %v2151 = vpop.permute.xlu0 %2150
  %v2153 = vmul.f32 %v2148, %v2151
  %v2154 = vmul.f32 %v2144, %v1894
  %v2155 = vadd.f32 %v2153, %v2154
  %2157 = vrot.lane.b32.xlu0 %v2155, 64
  %v2158 = vpop.permute.xlu0 %2157
  %2160 = vst.msk [vmem:[#allocation2 + $0x18] sm:$0xff] %vm1115, %v2158
  %2161 = vmatprep.subr.mxu0 0.0
  %2162 = vmatpush1.msra.mxu0 0.0
  %2163 = vmatprep.subr.mxu0 0.0
  %2164 = vmatpush1.msra.mxu0 0.0
  %2165 = vmatprep.subr.mxu0 0.0
  %2166 = vmatpush1.msra.mxu0 0.0
  %2167 = vmatprep.subr.mxu0 0.0
  %2168 = vmatpush1.msra.mxu0 0.0
  %2169 = vmatprep.subr.mxu0 0.0
  %2170 = vmatpush1.msra.mxu0 0.0
  %2171 = vmatprep.subr.mxu0 0.0
  %2172 = vmatpush1.msra.mxu0 0.0
  %2173 = vmatprep.subr.mxu0 0.0
  %2174 = vmatpush1.msra.mxu0 0.0
  %2175 = vmatprep.subr.mxu0 0.0
  %2176 = vmatpush1.msra.mxu0 0.0
  %2177 = vmatprep.subr.mxu0 %v1046
  %2178 = vmatpush1.msra.mxu0 %v1045
  %2179 = vmatprep.subr.mxu0 %v1044
  %2180 = vmatpush1.msra.mxu0 %v1043
  %2181 = vmatprep.subr.mxu0 %v1042
  %2182 = vmatpush1.msra.mxu0 %v1041
  %2183 = vmatprep.subr.mxu0 %v1040
  %2184 = vmatpush1.msra.mxu0 %v1039
  %2185 = vmatprep.subr.mxu0 %v1038
  %2186 = vmatpush1.msra.mxu0 %v1037
  %2187 = vmatprep.subr.mxu0 %v1036
  %2188 = vmatpush1.msra.mxu0 %v1035
  %2189 = vmatprep.subr.mxu0 %v1034
  %2190 = vmatpush1.msra.mxu0 %v1033
  %2191 = vmatprep.subr.mxu0 %v1032
  %2192 = vmatpush1.msra.mxu0 %v1031
  %2193 = vmatprep.subr.mxu0 0.0
  %2194 = vmatpush2.msra.mxu0 0.0
  %2195 = vmatprep.subr.mxu0 0.0
  %2196 = vmatpush2.msra.mxu0 0.0
  %2197 = vmatprep.subr.mxu0 0.0
  %2198 = vmatpush2.msra.mxu0 0.0
  %2199 = vmatprep.subr.mxu0 0.0
  %2200 = vmatpush2.msra.mxu0 0.0
  %2201 = vmatprep.subr.mxu0 0.0
  %2202 = vmatpush2.msra.mxu0 0.0
  %2203 = vmatprep.subr.mxu0 0.0
  %2204 = vmatpush2.msra.mxu0 0.0
  %2205 = vmatprep.subr.mxu0 0.0
  %2206 = vmatpush2.msra.mxu0 0.0
  %2207 = vmatprep.subr.mxu0 0.0
  %2208 = vmatpush2.msra.mxu0 0.0
  %2209 = vmatprep.subr.mxu0 0.0
  %2210 = vmatpush2.msra.mxu0 0.0
  %2211 = vmatprep.subr.mxu0 0.0
  %2212 = vmatpush2.msra.mxu0 0.0
  %2213 = vmatprep.subr.mxu0 0.0
  %2214 = vmatpush2.msra.mxu0 0.0
  %2215 = vmatprep.subr.mxu0 0.0
  %2216 = vmatpush2.msra.mxu0 0.0
  %2217 = vmatprep.subr.mxu0 0.0
  %2218 = vmatpush2.msra.mxu0 0.0
  %2219 = vmatprep.subr.mxu0 0.0
  %2220 = vmatpush2.msra.mxu0 0.0
  %2221 = vmatprep.subr.mxu0 0.0
  %2222 = vmatpush2.msra.mxu0 0.0
  %2223 = vmatprep.subr.mxu0 0.0
  %2224 = vmatpush2.msra.mxu0 0.0
  %2225 = vmatprep.mubr.f32.mxu0 0.0
  %2226 = vmatmul.mubr.f32.gmra.mxu0 %v1992
  %v2227 = vpop.f32.mrf.mxu0
  %v2228 = vadd.f32 %v1084, %v2227
  %v2229 = vpop.f32.mrf.mxu0
  %v2230 = vadd.f32 %v1088, %v2229
  %2231 = vdwg.mxu0
  %v2232 = vadd.f32 %v1009, %v2228
  %v2233 = vxor.u32 %v2232, 2147483648
  %v2234 = vmul.f32 %v2233, 1.442695
  %v2235 = vpow.pop %v2234
  %v2236 = vadd.f32 %v2235, 1.0
  %v2237 = vrcp.pop %v2236
  %v2238 = vmul.f32 1.0, %v2237
  %v2239 = vmul.f32 %v2238, %v2230
  %v2240 = vadd.f32 %v1011, %v2239
  %v2241 = vtanh.pop %v2240
  %v2242 = vsub.f32 1.0, %v2238
  %2244 = vrot.lane.b32.xlu0 %v2241, 64
  %v2245 = vpop.permute.xlu0 %2244
  %v2247 = vmul.f32 %v2242, %v2245
  %v2248 = vmul.f32 %v2238, %v1988
  %v2249 = vadd.f32 %v2247, %v2248
  %2251 = vrot.lane.b32.xlu0 %v2249, 64
  %v2252 = vpop.permute.xlu0 %2251
  %v2253 = vsel %vm1115, %v2252, 0
  %2255 = vmatprep.subr.mxu0 0.0
  %2256 = vmatpush1.msra.mxu0 0.0
  %2257 = vmatprep.subr.mxu0 0.0
  %2258 = vmatpush1.msra.mxu0 0.0
  %2259 = vmatprep.subr.mxu0 0.0
  %2260 = vmatpush1.msra.mxu0 0.0
  %2261 = vmatprep.subr.mxu0 0.0
  %2262 = vmatpush1.msra.mxu0 0.0
  %2263 = vmatprep.subr.mxu0 0.0
  %2264 = vmatpush1.msra.mxu0 0.0
  %2265 = vmatprep.subr.mxu0 0.0
  %2266 = vmatpush1.msra.mxu0 0.0
  %2267 = vmatprep.subr.mxu0 0.0
  %2268 = vmatpush1.msra.mxu0 0.0
  %2269 = vmatprep.subr.mxu0 0.0
  %2270 = vmatpush1.msra.mxu0 0.0
  %2271 = vmatprep.subr.mxu0 %v1062
  %2272 = vmatpush1.msra.mxu0 %v1061
  %2273 = vmatprep.subr.mxu0 %v1060
  %2274 = vmatpush1.msra.mxu0 %v1059
  %2275 = vmatprep.subr.mxu0 %v1058
  %2276 = vmatpush1.msra.mxu0 %v1057
  %2277 = vmatprep.subr.mxu0 %v1056
  %2278 = vmatpush1.msra.mxu0 %v1055
  %2279 = vmatprep.subr.mxu0 %v1054
  %2280 = vmatpush1.msra.mxu0 %v1053
  %2281 = vmatprep.subr.mxu0 %v1052
  %2282 = vmatpush1.msra.mxu0 %v1051
  %2283 = vmatprep.subr.mxu0 %v1050
  %2284 = vmatpush1.msra.mxu0 %v1049
  %2285 = vmatprep.subr.mxu0 %v1048
  %2286 = vmatpush1.msra.mxu0 %v1047
  %2287 = vmatprep.subr.mxu0 0.0
  %2288 = vmatpush2.msra.mxu0 0.0
  %2289 = vmatprep.subr.mxu0 0.0
  %2290 = vmatpush2.msra.mxu0 0.0
  %2291 = vmatprep.subr.mxu0 0.0
  %2292 = vmatpush2.msra.mxu0 0.0
  %2293 = vmatprep.subr.mxu0 0.0
  %2294 = vmatpush2.msra.mxu0 0.0
  %2295 = vmatprep.subr.mxu0 0.0
  %2296 = vmatpush2.msra.mxu0 0.0
  %2297 = vmatprep.subr.mxu0 0.0
  %2298 = vmatpush2.msra.mxu0 0.0
  %2299 = vmatprep.subr.mxu0 0.0
  %2300 = vmatpush2.msra.mxu0 0.0
  %2301 = vmatprep.subr.mxu0 0.0
  %2302 = vmatpush2.msra.mxu0 0.0
  %2303 = vmatprep.subr.mxu0 0.0
  %2304 = vmatpush2.msra.mxu0 0.0
  %2305 = vmatprep.subr.mxu0 0.0
  %2306 = vmatpush2.msra.mxu0 0.0
  %2307 = vmatprep.subr.mxu0 0.0
  %2308 = vmatpush2.msra.mxu0 0.0
  %2309 = vmatprep.subr.mxu0 0.0
  %2310 = vmatpush2.msra.mxu0 0.0
  %2311 = vmatprep.subr.mxu0 0.0
  %2312 = vmatpush2.msra.mxu0 0.0
  %2313 = vmatprep.subr.mxu0 0.0
  %2314 = vmatpush2.msra.mxu0 0.0
  %2315 = vmatprep.subr.mxu0 0.0
  %2316 = vmatpush2.msra.mxu0 0.0
  %2317 = vmatprep.subr.mxu0 0.0
  %2318 = vmatpush2.msra.mxu0 0.0
  %2319 = vmatprep.mubr.f32.mxu0 0.0
  %2320 = vmatmul.mubr.f32.gmra.mxu0 %v2253
  %v2321 = vpop.f32.mrf.mxu0
  %v2322 = vadd.f32 %v1096, %v2321
  %v2323 = vpop.f32.mrf.mxu0
  %v2324 = vadd.f32 %v1100, %v2323
  %2325 = vdwg.mxu0
  %v2326 = vsel %vm1115, %v2158, 0
  %2328 = vmatprep.subr.mxu0 0.0
  %2329 = vmatpush1.msra.mxu0 0.0
  %2330 = vmatprep.subr.mxu0 0.0
  %2331 = vmatpush1.msra.mxu0 0.0
  %2332 = vmatprep.subr.mxu0 0.0
  %2333 = vmatpush1.msra.mxu0 0.0
  %2334 = vmatprep.subr.mxu0 0.0
  %2335 = vmatpush1.msra.mxu0 0.0
  %2336 = vmatprep.subr.mxu0 0.0
  %2337 = vmatpush1.msra.mxu0 0.0
  %2338 = vmatprep.subr.mxu0 0.0
  %2339 = vmatpush1.msra.mxu0 0.0
  %2340 = vmatprep.subr.mxu0 0.0
  %2341 = vmatpush1.msra.mxu0 0.0
  %2342 = vmatprep.subr.mxu0 0.0
  %2343 = vmatpush1.msra.mxu0 0.0
  %2344 = vmatprep.subr.mxu0 %v1078
  %2345 = vmatpush1.msra.mxu0 %v1077
  %2346 = vmatprep.subr.mxu0 %v1076
  %2347 = vmatpush1.msra.mxu0 %v1075
  %2348 = vmatprep.subr.mxu0 %v1074
  %2349 = vmatpush1.msra.mxu0 %v1073
  %2350 = vmatprep.subr.mxu0 %v1072
  %2351 = vmatpush1.msra.mxu0 %v1071
  %2352 = vmatprep.subr.mxu0 %v1070
  %2353 = vmatpush1.msra.mxu0 %v1069
  %2354 = vmatprep.subr.mxu0 %v1068
  %2355 = vmatpush1.msra.mxu0 %v1067
  %2356 = vmatprep.subr.mxu0 %v1066
  %2357 = vmatpush1.msra.mxu0 %v1065
  %2358 = vmatprep.subr.mxu0 %v1064
  %2359 = vmatpush1.msra.mxu0 %v1063
  %2360 = vmatprep.subr.mxu0 0.0
  %2361 = vmatpush2.msra.mxu0 0.0
  %2362 = vmatprep.subr.mxu0 0.0
  %2363 = vmatpush2.msra.mxu0 0.0
  %2364 = vmatprep.subr.mxu0 0.0
  %2365 = vmatpush2.msra.mxu0 0.0
  %2366 = vmatprep.subr.mxu0 0.0
  %2367 = vmatpush2.msra.mxu0 0.0
  %2368 = vmatprep.subr.mxu0 0.0
  %2369 = vmatpush2.msra.mxu0 0.0
  %2370 = vmatprep.subr.mxu0 0.0
  %2371 = vmatpush2.msra.mxu0 0.0
  %2372 = vmatprep.subr.mxu0 0.0
  %2373 = vmatpush2.msra.mxu0 0.0
  %2374 = vmatprep.subr.mxu0 0.0
  %2375 = vmatpush2.msra.mxu0 0.0
  %2376 = vmatprep.subr.mxu0 0.0
  %2377 = vmatpush2.msra.mxu0 0.0
  %2378 = vmatprep.subr.mxu0 0.0
  %2379 = vmatpush2.msra.mxu0 0.0
  %2380 = vmatprep.subr.mxu0 0.0
  %2381 = vmatpush2.msra.mxu0 0.0
  %2382 = vmatprep.subr.mxu0 0.0
  %2383 = vmatpush2.msra.mxu0 0.0
  %2384 = vmatprep.subr.mxu0 0.0
  %2385 = vmatpush2.msra.mxu0 0.0
  %2386 = vmatprep.subr.mxu0 0.0
  %2387 = vmatpush2.msra.mxu0 0.0
  %2388 = vmatprep.subr.mxu0 0.0
  %2389 = vmatpush2.msra.mxu0 0.0
  %2390 = vmatprep.subr.mxu0 0.0
  %2391 = vmatpush2.msra.mxu0 0.0
  %2392 = vmatprep.mubr.f32.mxu0 0.0
  %2393 = vmatmul.mubr.f32.gmra.mxu0 %v2326
  %v2394 = vpop.f32.mrf.mxu0
  %v2395 = vadd.f32 %v1108, %v2394
  %v2396 = vpop.f32.mrf.mxu0
  %v2397 = vadd.f32 %v1112, %v2396
  %2398 = vdwg.mxu0
  %v2399 = vadd.f32 %v2322, %v2395
  %v2400 = vxor.u32 %v2399, 2147483648
  %v2401 = vmul.f32 %v2400, 1.442695
  %v2402 = vpow.pop %v2401
  %v2403 = vadd.f32 %v2402, 1.0
  %v2404 = vrcp.pop %v2403
  %v2405 = vmul.f32 1.0, %v2404
  %v2406 = vmul.f32 %v2405, %v2397
  %v2407 = vadd.f32 %v2324, %v2406
  %v2408 = vtanh.pop %v2407
  %v2409 = vsub.f32 1.0, %v2405
  %2411 = vrot.lane.b32.xlu0 %v2408, 64
  %v2412 = vpop.permute.xlu0 %2411
  %v2414 = vmul.f32 %v2409, %v2412
  %v2415 = vmul.f32 %v2405, %v2155
  %v2416 = vadd.f32 %v2414, %v2415
  %2418 = vrot.lane.b32.xlu0 %v2416, 64
  %v2419 = vpop.permute.xlu0 %2418
  %2421 = vst.msk [vmem:[#allocation2 + $0x20] sm:$0xff] %vm1115, %v2419
  %2422 = vmatprep.subr.mxu0 0.0
  %2423 = vmatpush1.msra.mxu0 0.0
  %2424 = vmatprep.subr.mxu0 0.0
  %2425 = vmatpush1.msra.mxu0 0.0
  %2426 = vmatprep.subr.mxu0 0.0
  %2427 = vmatpush1.msra.mxu0 0.0
  %2428 = vmatprep.subr.mxu0 0.0
  %2429 = vmatpush1.msra.mxu0 0.0
  %2430 = vmatprep.subr.mxu0 0.0
  %2431 = vmatpush1.msra.mxu0 0.0
  %2432 = vmatprep.subr.mxu0 0.0
  %2433 = vmatpush1.msra.mxu0 0.0
  %2434 = vmatprep.subr.mxu0 0.0
  %2435 = vmatpush1.msra.mxu0 0.0
  %2436 = vmatprep.subr.mxu0 0.0
  %2437 = vmatpush1.msra.mxu0 0.0
  %2438 = vmatprep.subr.mxu0 %v1046
  %2439 = vmatpush1.msra.mxu0 %v1045
  %2440 = vmatprep.subr.mxu0 %v1044
  %2441 = vmatpush1.msra.mxu0 %v1043
  %2442 = vmatprep.subr.mxu0 %v1042
  %2443 = vmatpush1.msra.mxu0 %v1041
  %2444 = vmatprep.subr.mxu0 %v1040
  %2445 = vmatpush1.msra.mxu0 %v1039
  %2446 = vmatprep.subr.mxu0 %v1038
  %2447 = vmatpush1.msra.mxu0 %v1037
  %2448 = vmatprep.subr.mxu0 %v1036
  %2449 = vmatpush1.msra.mxu0 %v1035
  %2450 = vmatprep.subr.mxu0 %v1034
  %2451 = vmatpush1.msra.mxu0 %v1033
  %2452 = vmatprep.subr.mxu0 %v1032
  %2453 = vmatpush1.msra.mxu0 %v1031
  %2454 = vmatprep.subr.mxu0 0.0
  %2455 = vmatpush2.msra.mxu0 0.0
  %2456 = vmatprep.subr.mxu0 0.0
  %2457 = vmatpush2.msra.mxu0 0.0
  %2458 = vmatprep.subr.mxu0 0.0
  %2459 = vmatpush2.msra.mxu0 0.0
  %2460 = vmatprep.subr.mxu0 0.0
  %2461 = vmatpush2.msra.mxu0 0.0
  %2462 = vmatprep.subr.mxu0 0.0
  %2463 = vmatpush2.msra.mxu0 0.0
  %2464 = vmatprep.subr.mxu0 0.0
  %2465 = vmatpush2.msra.mxu0 0.0
  %2466 = vmatprep.subr.mxu0 0.0
  %2467 = vmatpush2.msra.mxu0 0.0
  %2468 = vmatprep.subr.mxu0 0.0
  %2469 = vmatpush2.msra.mxu0 0.0
  %2470 = vmatprep.subr.mxu0 0.0
  %2471 = vmatpush2.msra.mxu0 0.0
  %2472 = vmatprep.subr.mxu0 0.0
  %2473 = vmatpush2.msra.mxu0 0.0
  %2474 = vmatprep.subr.mxu0 0.0
  %2475 = vmatpush2.msra.mxu0 0.0
  %2476 = vmatprep.subr.mxu0 0.0
  %2477 = vmatpush2.msra.mxu0 0.0
  %2478 = vmatprep.subr.mxu0 0.0
  %2479 = vmatpush2.msra.mxu0 0.0
  %2480 = vmatprep.subr.mxu0 0.0
  %2481 = vmatpush2.msra.mxu0 0.0
  %2482 = vmatprep.subr.mxu0 0.0
  %2483 = vmatpush2.msra.mxu0 0.0
  %2484 = vmatprep.subr.mxu0 0.0
  %2485 = vmatpush2.msra.mxu0 0.0
  %2486 = vmatprep.mubr.f32.mxu0 0.0
  %2487 = vmatmul.mubr.f32.gmra.mxu0 %v2253
  %v2488 = vpop.f32.mrf.mxu0
  %v2489 = vadd.f32 %v1084, %v2488
  %v2490 = vpop.f32.mrf.mxu0
  %v2491 = vadd.f32 %v1088, %v2490
  %2492 = vdwg.mxu0
  %v2493 = vadd.f32 %v1015, %v2489
  %v2494 = vxor.u32 %v2493, 2147483648
  %v2495 = vmul.f32 %v2494, 1.442695
  %v2496 = vpow.pop %v2495
  %v2497 = vadd.f32 %v2496, 1.0
  %v2498 = vrcp.pop %v2497
  %v2499 = vmul.f32 1.0, %v2498
  %v2500 = vmul.f32 %v2499, %v2491
  %v2501 = vadd.f32 %v1017, %v2500
  %v2502 = vtanh.pop %v2501
  %v2503 = vsub.f32 1.0, %v2499
  %2505 = vrot.lane.b32.xlu0 %v2502, 64
  %v2506 = vpop.permute.xlu0 %2505
  %v2508 = vmul.f32 %v2503, %v2506
  %v2509 = vmul.f32 %v2499, %v2249
  %v2510 = vadd.f32 %v2508, %v2509
  %2512 = vrot.lane.b32.xlu0 %v2510, 64
  %v2513 = vpop.permute.xlu0 %2512
  %v2514 = vsel %vm1115, %v2513, 0
  %2516 = vmatprep.subr.mxu0 0.0
  %2517 = vmatpush1.msra.mxu0 0.0
  %2518 = vmatprep.subr.mxu0 0.0
  %2519 = vmatpush1.msra.mxu0 0.0
  %2520 = vmatprep.subr.mxu0 0.0
  %2521 = vmatpush1.msra.mxu0 0.0
  %2522 = vmatprep.subr.mxu0 0.0
  %2523 = vmatpush1.msra.mxu0 0.0
  %2524 = vmatprep.subr.mxu0 0.0
  %2525 = vmatpush1.msra.mxu0 0.0
  %2526 = vmatprep.subr.mxu0 0.0
  %2527 = vmatpush1.msra.mxu0 0.0
  %2528 = vmatprep.subr.mxu0 0.0
  %2529 = vmatpush1.msra.mxu0 0.0
  %2530 = vmatprep.subr.mxu0 0.0
  %2531 = vmatpush1.msra.mxu0 0.0
  %2532 = vmatprep.subr.mxu0 %v1062
  %2533 = vmatpush1.msra.mxu0 %v1061
  %2534 = vmatprep.subr.mxu0 %v1060
  %2535 = vmatpush1.msra.mxu0 %v1059
  %2536 = vmatprep.subr.mxu0 %v1058
  %2537 = vmatpush1.msra.mxu0 %v1057
  %2538 = vmatprep.subr.mxu0 %v1056
  %2539 = vmatpush1.msra.mxu0 %v1055
  %2540 = vmatprep.subr.mxu0 %v1054
  %2541 = vmatpush1.msra.mxu0 %v1053
  %2542 = vmatprep.subr.mxu0 %v1052
  %2543 = vmatpush1.msra.mxu0 %v1051
  %2544 = vmatprep.subr.mxu0 %v1050
  %2545 = vmatpush1.msra.mxu0 %v1049
  %2546 = vmatprep.subr.mxu0 %v1048
  %2547 = vmatpush1.msra.mxu0 %v1047
  %2548 = vmatprep.subr.mxu0 0.0
  %2549 = vmatpush2.msra.mxu0 0.0
  %2550 = vmatprep.subr.mxu0 0.0
  %2551 = vmatpush2.msra.mxu0 0.0
  %2552 = vmatprep.subr.mxu0 0.0
  %2553 = vmatpush2.msra.mxu0 0.0
  %2554 = vmatprep.subr.mxu0 0.0
  %2555 = vmatpush2.msra.mxu0 0.0
  %2556 = vmatprep.subr.mxu0 0.0
  %2557 = vmatpush2.msra.mxu0 0.0
  %2558 = vmatprep.subr.mxu0 0.0
  %2559 = vmatpush2.msra.mxu0 0.0
  %2560 = vmatprep.subr.mxu0 0.0
  %2561 = vmatpush2.msra.mxu0 0.0
  %2562 = vmatprep.subr.mxu0 0.0
  %2563 = vmatpush2.msra.mxu0 0.0
  %2564 = vmatprep.subr.mxu0 0.0
  %2565 = vmatpush2.msra.mxu0 0.0
  %2566 = vmatprep.subr.mxu0 0.0
  %2567 = vmatpush2.msra.mxu0 0.0
  %2568 = vmatprep.subr.mxu0 0.0
  %2569 = vmatpush2.msra.mxu0 0.0
  %2570 = vmatprep.subr.mxu0 0.0
  %2571 = vmatpush2.msra.mxu0 0.0
  %2572 = vmatprep.subr.mxu0 0.0
  %2573 = vmatpush2.msra.mxu0 0.0
  %2574 = vmatprep.subr.mxu0 0.0
  %2575 = vmatpush2.msra.mxu0 0.0
  %2576 = vmatprep.subr.mxu0 0.0
  %2577 = vmatpush2.msra.mxu0 0.0
  %2578 = vmatprep.subr.mxu0 0.0
  %2579 = vmatpush2.msra.mxu0 0.0
  %2580 = vmatprep.mubr.f32.mxu0 0.0
  %2581 = vmatmul.mubr.f32.gmra.mxu0 %v2514
  %v2582 = vpop.f32.mrf.mxu0
  %v2583 = vadd.f32 %v1096, %v2582
  %v2584 = vpop.f32.mrf.mxu0
  %v2585 = vadd.f32 %v1100, %v2584
  %2586 = vdwg.mxu0
  %v2587 = vsel %vm1115, %v2419, 0
  %2589 = vmatprep.subr.mxu0 0.0
  %2590 = vmatpush1.msra.mxu0 0.0
  %2591 = vmatprep.subr.mxu0 0.0
  %2592 = vmatpush1.msra.mxu0 0.0
  %2593 = vmatprep.subr.mxu0 0.0
  %2594 = vmatpush1.msra.mxu0 0.0
  %2595 = vmatprep.subr.mxu0 0.0
  %2596 = vmatpush1.msra.mxu0 0.0
  %2597 = vmatprep.subr.mxu0 0.0
  %2598 = vmatpush1.msra.mxu0 0.0
  %2599 = vmatprep.subr.mxu0 0.0
  %2600 = vmatpush1.msra.mxu0 0.0
  %2601 = vmatprep.subr.mxu0 0.0
  %2602 = vmatpush1.msra.mxu0 0.0
  %2603 = vmatprep.subr.mxu0 0.0
  %2604 = vmatpush1.msra.mxu0 0.0
  %2605 = vmatprep.subr.mxu0 %v1078
  %2606 = vmatpush1.msra.mxu0 %v1077
  %2607 = vmatprep.subr.mxu0 %v1076
  %2608 = vmatpush1.msra.mxu0 %v1075
  %2609 = vmatprep.subr.mxu0 %v1074
  %2610 = vmatpush1.msra.mxu0 %v1073
  %2611 = vmatprep.subr.mxu0 %v1072
  %2612 = vmatpush1.msra.mxu0 %v1071
  %2613 = vmatprep.subr.mxu0 %v1070
  %2614 = vmatpush1.msra.mxu0 %v1069
  %2615 = vmatprep.subr.mxu0 %v1068
  %2616 = vmatpush1.msra.mxu0 %v1067
  %2617 = vmatprep.subr.mxu0 %v1066
  %2618 = vmatpush1.msra.mxu0 %v1065
  %2619 = vmatprep.subr.mxu0 %v1064
  %2620 = vmatpush1.msra.mxu0 %v1063
  %2621 = vmatprep.subr.mxu0 0.0
  %2622 = vmatpush2.msra.mxu0 0.0
  %2623 = vmatprep.subr.mxu0 0.0
  %2624 = vmatpush2.msra.mxu0 0.0
  %2625 = vmatprep.subr.mxu0 0.0
  %2626 = vmatpush2.msra.mxu0 0.0
  %2627 = vmatprep.subr.mxu0 0.0
  %2628 = vmatpush2.msra.mxu0 0.0
  %2629 = vmatprep.subr.mxu0 0.0
  %2630 = vmatpush2.msra.mxu0 0.0
  %2631 = vmatprep.subr.mxu0 0.0
  %2632 = vmatpush2.msra.mxu0 0.0
  %2633 = vmatprep.subr.mxu0 0.0
  %2634 = vmatpush2.msra.mxu0 0.0
  %2635 = vmatprep.subr.mxu0 0.0
  %2636 = vmatpush2.msra.mxu0 0.0
  %2637 = vmatprep.subr.mxu0 0.0
  %2638 = vmatpush2.msra.mxu0 0.0
  %2639 = vmatprep.subr.mxu0 0.0
  %2640 = vmatpush2.msra.mxu0 0.0
  %2641 = vmatprep.subr.mxu0 0.0
  %2642 = vmatpush2.msra.mxu0 0.0
  %2643 = vmatprep.subr.mxu0 0.0
  %2644 = vmatpush2.msra.mxu0 0.0
  %2645 = vmatprep.subr.mxu0 0.0
  %2646 = vmatpush2.msra.mxu0 0.0
  %2647 = vmatprep.subr.mxu0 0.0
  %2648 = vmatpush2.msra.mxu0 0.0
  %2649 = vmatprep.subr.mxu0 0.0
  %2650 = vmatpush2.msra.mxu0 0.0
  %2651 = vmatprep.subr.mxu0 0.0
  %2652 = vmatpush2.msra.mxu0 0.0
  %2653 = vmatprep.mubr.f32.mxu0 0.0
  %2654 = vmatmul.mubr.f32.gmra.mxu0 %v2587
  %v2655 = vpop.f32.mrf.mxu0
  %v2656 = vadd.f32 %v1108, %v2655
  %v2657 = vpop.f32.mrf.mxu0
  %v2658 = vadd.f32 %v1112, %v2657
  %2659 = vdwg.mxu0
  %v2660 = vadd.f32 %v2583, %v2656
  %v2661 = vxor.u32 %v2660, 2147483648
  %v2662 = vmul.f32 %v2661, 1.442695
  %v2663 = vpow.pop %v2662
  %v2664 = vadd.f32 %v2663, 1.0
  %v2665 = vrcp.pop %v2664
  %v2666 = vmul.f32 1.0, %v2665
  %v2667 = vmul.f32 %v2666, %v2658
  %v2668 = vadd.f32 %v2585, %v2667
  %v2669 = vtanh.pop %v2668
  %v2670 = vsub.f32 1.0, %v2666
  %2672 = vrot.lane.b32.xlu0 %v2669, 64
  %v2673 = vpop.permute.xlu0 %2672
  %v2675 = vmul.f32 %v2670, %v2673
  %v2676 = vmul.f32 %v2666, %v2416
  %v2677 = vadd.f32 %v2675, %v2676
  %2679 = vrot.lane.b32.xlu0 %v2677, 64
  %v2680 = vpop.permute.xlu0 %2679
  %2682 = vst.msk [vmem:[#allocation2 + $0x28] sm:$0xff] %vm1115, %v2680
  %2683 = vmatprep.subr.mxu0 0.0
  %2684 = vmatpush1.msra.mxu0 0.0
  %2685 = vmatprep.subr.mxu0 0.0
  %2686 = vmatpush1.msra.mxu0 0.0
  %2687 = vmatprep.subr.mxu0 0.0
  %2688 = vmatpush1.msra.mxu0 0.0
  %2689 = vmatprep.subr.mxu0 0.0
  %2690 = vmatpush1.msra.mxu0 0.0
  %2691 = vmatprep.subr.mxu0 0.0
  %2692 = vmatpush1.msra.mxu0 0.0
  %2693 = vmatprep.subr.mxu0 0.0
  %2694 = vmatpush1.msra.mxu0 0.0
  %2695 = vmatprep.subr.mxu0 0.0
  %2696 = vmatpush1.msra.mxu0 0.0
  %2697 = vmatprep.subr.mxu0 0.0
  %2698 = vmatpush1.msra.mxu0 0.0
  %2699 = vmatprep.subr.mxu0 %v1046
  %2700 = vmatpush1.msra.mxu0 %v1045
  %2701 = vmatprep.subr.mxu0 %v1044
  %2702 = vmatpush1.msra.mxu0 %v1043
  %2703 = vmatprep.subr.mxu0 %v1042
  %2704 = vmatpush1.msra.mxu0 %v1041
  %2705 = vmatprep.subr.mxu0 %v1040
  %2706 = vmatpush1.msra.mxu0 %v1039
  %2707 = vmatprep.subr.mxu0 %v1038
  %2708 = vmatpush1.msra.mxu0 %v1037
  %2709 = vmatprep.subr.mxu0 %v1036
  %2710 = vmatpush1.msra.mxu0 %v1035
  %2711 = vmatprep.subr.mxu0 %v1034
  %2712 = vmatpush1.msra.mxu0 %v1033
  %2713 = vmatprep.subr.mxu0 %v1032
  %2714 = vmatpush1.msra.mxu0 %v1031
  %2715 = vmatprep.subr.mxu0 0.0
  %2716 = vmatpush2.msra.mxu0 0.0
  %2717 = vmatprep.subr.mxu0 0.0
  %2718 = vmatpush2.msra.mxu0 0.0
  %2719 = vmatprep.subr.mxu0 0.0
  %2720 = vmatpush2.msra.mxu0 0.0
  %2721 = vmatprep.subr.mxu0 0.0
  %2722 = vmatpush2.msra.mxu0 0.0
  %2723 = vmatprep.subr.mxu0 0.0
  %2724 = vmatpush2.msra.mxu0 0.0
  %2725 = vmatprep.subr.mxu0 0.0
  %2726 = vmatpush2.msra.mxu0 0.0
  %2727 = vmatprep.subr.mxu0 0.0
  %2728 = vmatpush2.msra.mxu0 0.0
  %2729 = vmatprep.subr.mxu0 0.0
  %2730 = vmatpush2.msra.mxu0 0.0
  %2731 = vmatprep.subr.mxu0 0.0
  %2732 = vmatpush2.msra.mxu0 0.0
  %2733 = vmatprep.subr.mxu0 0.0
  %2734 = vmatpush2.msra.mxu0 0.0
  %2735 = vmatprep.subr.mxu0 0.0
  %2736 = vmatpush2.msra.mxu0 0.0
  %2737 = vmatprep.subr.mxu0 0.0
  %2738 = vmatpush2.msra.mxu0 0.0
  %2739 = vmatprep.subr.mxu0 0.0
  %2740 = vmatpush2.msra.mxu0 0.0
  %2741 = vmatprep.subr.mxu0 0.0
  %2742 = vmatpush2.msra.mxu0 0.0
  %2743 = vmatprep.subr.mxu0 0.0
  %2744 = vmatpush2.msra.mxu0 0.0
  %2745 = vmatprep.subr.mxu0 0.0
  %2746 = vmatpush2.msra.mxu0 0.0
  %2747 = vmatprep.mubr.f32.mxu0 0.0
  %2748 = vmatmul.mubr.f32.gmra.mxu0 %v2514
  %v2749 = vpop.f32.mrf.mxu0
  %v2750 = vadd.f32 %v1084, %v2749
  %v2751 = vpop.f32.mrf.mxu0
  %v2752 = vadd.f32 %v1088, %v2751
  %2753 = vdwg.mxu0
  %v2754 = vadd.f32 %v1021, %v2750
  %v2755 = vxor.u32 %v2754, 2147483648
  %v2756 = vmul.f32 %v2755, 1.442695
  %v2757 = vpow.pop %v2756
  %v2758 = vadd.f32 %v2757, 1.0
  %v2759 = vrcp.pop %v2758
  %v2760 = vmul.f32 1.0, %v2759
  %v2761 = vmul.f32 %v2760, %v2752
  %v2762 = vadd.f32 %v1023, %v2761
  %v2763 = vtanh.pop %v2762
  %v2764 = vsub.f32 1.0, %v2760
  %2766 = vrot.lane.b32.xlu0 %v2763, 64
  %v2767 = vpop.permute.xlu0 %2766
  %v2769 = vmul.f32 %v2764, %v2767
  %v2770 = vmul.f32 %v2760, %v2510
  %v2771 = vadd.f32 %v2769, %v2770
  %2773 = vrot.lane.b32.xlu0 %v2771, 64
  %v2774 = vpop.permute.xlu0 %2773
  %v2775 = vsel %vm1115, %v2774, 0
  %2777 = vmatprep.subr.mxu0 0.0
  %2778 = vmatpush1.msra.mxu0 0.0
  %2779 = vmatprep.subr.mxu0 0.0
  %2780 = vmatpush1.msra.mxu0 0.0
  %2781 = vmatprep.subr.mxu0 0.0
  %2782 = vmatpush1.msra.mxu0 0.0
  %2783 = vmatprep.subr.mxu0 0.0
  %2784 = vmatpush1.msra.mxu0 0.0
  %2785 = vmatprep.subr.mxu0 0.0
  %2786 = vmatpush1.msra.mxu0 0.0
  %2787 = vmatprep.subr.mxu0 0.0
  %2788 = vmatpush1.msra.mxu0 0.0
  %2789 = vmatprep.subr.mxu0 0.0
  %2790 = vmatpush1.msra.mxu0 0.0
  %2791 = vmatprep.subr.mxu0 0.0
  %2792 = vmatpush1.msra.mxu0 0.0
  %2793 = vmatprep.subr.mxu0 %v1062
  %2794 = vmatpush1.msra.mxu0 %v1061
  %2795 = vmatprep.subr.mxu0 %v1060
  %2796 = vmatpush1.msra.mxu0 %v1059
  %2797 = vmatprep.subr.mxu0 %v1058
  %2798 = vmatpush1.msra.mxu0 %v1057
  %2799 = vmatprep.subr.mxu0 %v1056
  %2800 = vmatpush1.msra.mxu0 %v1055
  %2801 = vmatprep.subr.mxu0 %v1054
  %2802 = vmatpush1.msra.mxu0 %v1053
  %2803 = vmatprep.subr.mxu0 %v1052
  %2804 = vmatpush1.msra.mxu0 %v1051
  %2805 = vmatprep.subr.mxu0 %v1050
  %2806 = vmatpush1.msra.mxu0 %v1049
  %2807 = vmatprep.subr.mxu0 %v1048
  %2808 = vmatpush1.msra.mxu0 %v1047
  %2809 = vmatprep.subr.mxu0 0.0
  %2810 = vmatpush2.msra.mxu0 0.0
  %2811 = vmatprep.subr.mxu0 0.0
  %2812 = vmatpush2.msra.mxu0 0.0
  %2813 = vmatprep.subr.mxu0 0.0
  %2814 = vmatpush2.msra.mxu0 0.0
  %2815 = vmatprep.subr.mxu0 0.0
  %2816 = vmatpush2.msra.mxu0 0.0
  %2817 = vmatprep.subr.mxu0 0.0
  %2818 = vmatpush2.msra.mxu0 0.0
  %2819 = vmatprep.subr.mxu0 0.0
  %2820 = vmatpush2.msra.mxu0 0.0
  %2821 = vmatprep.subr.mxu0 0.0
  %2822 = vmatpush2.msra.mxu0 0.0
  %2823 = vmatprep.subr.mxu0 0.0
  %2824 = vmatpush2.msra.mxu0 0.0
  %2825 = vmatprep.subr.mxu0 0.0
  %2826 = vmatpush2.msra.mxu0 0.0
  %2827 = vmatprep.subr.mxu0 0.0
  %2828 = vmatpush2.msra.mxu0 0.0
  %2829 = vmatprep.subr.mxu0 0.0
  %2830 = vmatpush2.msra.mxu0 0.0
  %2831 = vmatprep.subr.mxu0 0.0
  %2832 = vmatpush2.msra.mxu0 0.0
  %2833 = vmatprep.subr.mxu0 0.0
  %2834 = vmatpush2.msra.mxu0 0.0
  %2835 = vmatprep.subr.mxu0 0.0
  %2836 = vmatpush2.msra.mxu0 0.0
  %2837 = vmatprep.subr.mxu0 0.0
  %2838 = vmatpush2.msra.mxu0 0.0
  %2839 = vmatprep.subr.mxu0 0.0
  %2840 = vmatpush2.msra.mxu0 0.0
  %2841 = vmatprep.mubr.f32.mxu0 0.0
  %2842 = vmatmul.mubr.f32.gmra.mxu0 %v2775
  %v2843 = vpop.f32.mrf.mxu0
  %v2844 = vadd.f32 %v1096, %v2843
  %v2845 = vpop.f32.mrf.mxu0
  %v2846 = vadd.f32 %v1100, %v2845
  %2847 = vdwg.mxu0
  %v2848 = vsel %vm1115, %v2680, 0
  %2850 = vmatprep.subr.mxu0 0.0
  %2851 = vmatpush1.msra.mxu0 0.0
  %2852 = vmatprep.subr.mxu0 0.0
  %2853 = vmatpush1.msra.mxu0 0.0
  %2854 = vmatprep.subr.mxu0 0.0
  %2855 = vmatpush1.msra.mxu0 0.0
  %2856 = vmatprep.subr.mxu0 0.0
  %2857 = vmatpush1.msra.mxu0 0.0
  %2858 = vmatprep.subr.mxu0 0.0
  %2859 = vmatpush1.msra.mxu0 0.0
  %2860 = vmatprep.subr.mxu0 0.0
  %2861 = vmatpush1.msra.mxu0 0.0
  %2862 = vmatprep.subr.mxu0 0.0
  %2863 = vmatpush1.msra.mxu0 0.0
  %2864 = vmatprep.subr.mxu0 0.0
  %2865 = vmatpush1.msra.mxu0 0.0
  %2866 = vmatprep.subr.mxu0 %v1078
  %2867 = vmatpush1.msra.mxu0 %v1077
  %2868 = vmatprep.subr.mxu0 %v1076
  %2869 = vmatpush1.msra.mxu0 %v1075
  %2870 = vmatprep.subr.mxu0 %v1074
  %2871 = vmatpush1.msra.mxu0 %v1073
  %2872 = vmatprep.subr.mxu0 %v1072
  %2873 = vmatpush1.msra.mxu0 %v1071
  %2874 = vmatprep.subr.mxu0 %v1070
  %2875 = vmatpush1.msra.mxu0 %v1069
  %2876 = vmatprep.subr.mxu0 %v1068
  %2877 = vmatpush1.msra.mxu0 %v1067
  %2878 = vmatprep.subr.mxu0 %v1066
  %2879 = vmatpush1.msra.mxu0 %v1065
  %2880 = vmatprep.subr.mxu0 %v1064
  %2881 = vmatpush1.msra.mxu0 %v1063
  %2882 = vmatprep.subr.mxu0 0.0
  %2883 = vmatpush2.msra.mxu0 0.0
  %2884 = vmatprep.subr.mxu0 0.0
  %2885 = vmatpush2.msra.mxu0 0.0
  %2886 = vmatprep.subr.mxu0 0.0
  %2887 = vmatpush2.msra.mxu0 0.0
  %2888 = vmatprep.subr.mxu0 0.0
  %2889 = vmatpush2.msra.mxu0 0.0
  %2890 = vmatprep.subr.mxu0 0.0
  %2891 = vmatpush2.msra.mxu0 0.0
  %2892 = vmatprep.subr.mxu0 0.0
  %2893 = vmatpush2.msra.mxu0 0.0
  %2894 = vmatprep.subr.mxu0 0.0
  %2895 = vmatpush2.msra.mxu0 0.0
  %2896 = vmatprep.subr.mxu0 0.0
  %2897 = vmatpush2.msra.mxu0 0.0
  %2898 = vmatprep.subr.mxu0 0.0
  %2899 = vmatpush2.msra.mxu0 0.0
  %2900 = vmatprep.subr.mxu0 0.0
  %2901 = vmatpush2.msra.mxu0 0.0
  %2902 = vmatprep.subr.mxu0 0.0
  %2903 = vmatpush2.msra.mxu0 0.0
  %2904 = vmatprep.subr.mxu0 0.0
  %2905 = vmatpush2.msra.mxu0 0.0
  %2906 = vmatprep.subr.mxu0 0.0
  %2907 = vmatpush2.msra.mxu0 0.0
  %2908 = vmatprep.subr.mxu0 0.0
  %2909 = vmatpush2.msra.mxu0 0.0
  %2910 = vmatprep.subr.mxu0 0.0
  %2911 = vmatpush2.msra.mxu0 0.0
  %2912 = vmatprep.subr.mxu0 0.0
  %2913 = vmatpush2.msra.mxu0 0.0
  %2914 = vmatprep.mubr.f32.mxu0 0.0
  %2915 = vmatmul.mubr.f32.gmra.mxu0 %v2848
  %v2916 = vpop.f32.mrf.mxu0
  %v2917 = vadd.f32 %v1108, %v2916
  %v2918 = vpop.f32.mrf.mxu0
  %v2919 = vadd.f32 %v1112, %v2918
  %2920 = vdwg.mxu0
  %v2921 = vadd.f32 %v2844, %v2917
  %v2922 = vxor.u32 %v2921, 2147483648
  %v2923 = vmul.f32 %v2922, 1.442695
  %v2924 = vpow.pop %v2923
  %v2925 = vadd.f32 %v2924, 1.0
  %v2926 = vrcp.pop %v2925
  %v2927 = vmul.f32 1.0, %v2926
  %v2928 = vmul.f32 %v2927, %v2919
  %v2929 = vadd.f32 %v2846, %v2928
  %v2930 = vtanh.pop %v2929
  %v2931 = vsub.f32 1.0, %v2927
  %2933 = vrot.lane.b32.xlu0 %v2930, 64
  %v2934 = vpop.permute.xlu0 %2933
  %v2936 = vmul.f32 %v2931, %v2934
  %v2937 = vmul.f32 %v2927, %v2677
  %v2938 = vadd.f32 %v2936, %v2937
  %2940 = vrot.lane.b32.xlu0 %v2938, 64
  %v2941 = vpop.permute.xlu0 %2940
  %2943 = vst.msk [vmem:[#allocation2 + $0x30] sm:$0xff] %vm1115, %v2941
  %2944 = vmatprep.subr.mxu0 0.0
  %2945 = vmatpush1.msra.mxu0 0.0
  %2946 = vmatprep.subr.mxu0 0.0
  %2947 = vmatpush1.msra.mxu0 0.0
  %2948 = vmatprep.subr.mxu0 0.0
  %2949 = vmatpush1.msra.mxu0 0.0
  %2950 = vmatprep.subr.mxu0 0.0
  %2951 = vmatpush1.msra.mxu0 0.0
  %2952 = vmatprep.subr.mxu0 0.0
  %2953 = vmatpush1.msra.mxu0 0.0
  %2954 = vmatprep.subr.mxu0 0.0
  %2955 = vmatpush1.msra.mxu0 0.0
  %2956 = vmatprep.subr.mxu0 0.0
  %2957 = vmatpush1.msra.mxu0 0.0
  %2958 = vmatprep.subr.mxu0 0.0
  %2959 = vmatpush1.msra.mxu0 0.0
  %2960 = vmatprep.subr.mxu0 %v1046
  %2961 = vmatpush1.msra.mxu0 %v1045
  %2962 = vmatprep.subr.mxu0 %v1044
  %2963 = vmatpush1.msra.mxu0 %v1043
  %2964 = vmatprep.subr.mxu0 %v1042
  %2965 = vmatpush1.msra.mxu0 %v1041
  %2966 = vmatprep.subr.mxu0 %v1040
  %2967 = vmatpush1.msra.mxu0 %v1039
  %2968 = vmatprep.subr.mxu0 %v1038
  %2969 = vmatpush1.msra.mxu0 %v1037
  %2970 = vmatprep.subr.mxu0 %v1036
  %2971 = vmatpush1.msra.mxu0 %v1035
  %2972 = vmatprep.subr.mxu0 %v1034
  %2973 = vmatpush1.msra.mxu0 %v1033
  %2974 = vmatprep.subr.mxu0 %v1032
  %2975 = vmatpush1.msra.mxu0 %v1031
  %2976 = vmatprep.subr.mxu0 0.0
  %2977 = vmatpush2.msra.mxu0 0.0
  %2978 = vmatprep.subr.mxu0 0.0
  %2979 = vmatpush2.msra.mxu0 0.0
  %2980 = vmatprep.subr.mxu0 0.0
  %2981 = vmatpush2.msra.mxu0 0.0
  %2982 = vmatprep.subr.mxu0 0.0
  %2983 = vmatpush2.msra.mxu0 0.0
  %2984 = vmatprep.subr.mxu0 0.0
  %2985 = vmatpush2.msra.mxu0 0.0
  %2986 = vmatprep.subr.mxu0 0.0
  %2987 = vmatpush2.msra.mxu0 0.0
  %2988 = vmatprep.subr.mxu0 0.0
  %2989 = vmatpush2.msra.mxu0 0.0
  %2990 = vmatprep.subr.mxu0 0.0
  %2991 = vmatpush2.msra.mxu0 0.0
  %2992 = vmatprep.subr.mxu0 0.0
  %2993 = vmatpush2.msra.mxu0 0.0
  %2994 = vmatprep.subr.mxu0 0.0
  %2995 = vmatpush2.msra.mxu0 0.0
  %2996 = vmatprep.subr.mxu0 0.0
  %2997 = vmatpush2.msra.mxu0 0.0
  %2998 = vmatprep.subr.mxu0 0.0
  %2999 = vmatpush2.msra.mxu0 0.0
  %3000 = vmatprep.subr.mxu0 0.0
  %3001 = vmatpush2.msra.mxu0 0.0
  %3002 = vmatprep.subr.mxu0 0.0
  %3003 = vmatpush2.msra.mxu0 0.0
  %3004 = vmatprep.subr.mxu0 0.0
  %3005 = vmatpush2.msra.mxu0 0.0
  %3006 = vmatprep.subr.mxu0 0.0
  %3007 = vmatpush2.msra.mxu0 0.0
  %3008 = vmatprep.mubr.f32.mxu0 0.0
  %3009 = vmatmul.mubr.f32.gmra.mxu0 %v2775
  %v3010 = vpop.f32.mrf.mxu0
  %v3011 = vadd.f32 %v1084, %v3010
  %v3012 = vpop.f32.mrf.mxu0
  %v3013 = vadd.f32 %v1088, %v3012
  %3014 = vdwg.mxu0
  %v3015 = vadd.f32 %v1027, %v3011
  %v3016 = vxor.u32 %v3015, 2147483648
  %v3017 = vmul.f32 %v3016, 1.442695
  %v3018 = vpow.pop %v3017
  %v3019 = vadd.f32 %v3018, 1.0
  %v3020 = vrcp.pop %v3019
  %v3021 = vmul.f32 1.0, %v3020
  %v3022 = vmul.f32 %v3021, %v3013
  %v3023 = vadd.f32 %v1029, %v3022
  %v3024 = vtanh.pop %v3023
  %v3025 = vsub.f32 1.0, %v3021
  %3027 = vrot.lane.b32.xlu0 %v3024, 64
  %v3028 = vpop.permute.xlu0 %3027
  %v3030 = vmul.f32 %v3025, %v3028
  %v3031 = vmul.f32 %v3021, %v2771
  %v3032 = vadd.f32 %v3030, %v3031
  %3034 = vrot.lane.b32.xlu0 %v3032, 64
  %v3035 = vpop.permute.xlu0 %3034
  %v3036 = vsel %vm1115, %v3035, 0
  %3038 = vmatprep.subr.mxu0 0.0
  %3039 = vmatpush1.msra.mxu0 0.0
  %3040 = vmatprep.subr.mxu0 0.0
  %3041 = vmatpush1.msra.mxu0 0.0
  %3042 = vmatprep.subr.mxu0 0.0
  %3043 = vmatpush1.msra.mxu0 0.0
  %3044 = vmatprep.subr.mxu0 0.0
  %3045 = vmatpush1.msra.mxu0 0.0
  %3046 = vmatprep.subr.mxu0 0.0
  %3047 = vmatpush1.msra.mxu0 0.0
  %3048 = vmatprep.subr.mxu0 0.0
  %3049 = vmatpush1.msra.mxu0 0.0
  %3050 = vmatprep.subr.mxu0 0.0
  %3051 = vmatpush1.msra.mxu0 0.0
  %3052 = vmatprep.subr.mxu0 0.0
  %3053 = vmatpush1.msra.mxu0 0.0
  %3054 = vmatprep.subr.mxu0 %v1062
  %3055 = vmatpush1.msra.mxu0 %v1061
  %3056 = vmatprep.subr.mxu0 %v1060
  %3057 = vmatpush1.msra.mxu0 %v1059
  %3058 = vmatprep.subr.mxu0 %v1058
  %3059 = vmatpush1.msra.mxu0 %v1057
  %3060 = vmatprep.subr.mxu0 %v1056
  %3061 = vmatpush1.msra.mxu0 %v1055
  %3062 = vmatprep.subr.mxu0 %v1054
  %3063 = vmatpush1.msra.mxu0 %v1053
  %3064 = vmatprep.subr.mxu0 %v1052
  %3065 = vmatpush1.msra.mxu0 %v1051
  %3066 = vmatprep.subr.mxu0 %v1050
  %3067 = vmatpush1.msra.mxu0 %v1049
  %3068 = vmatprep.subr.mxu0 %v1048
  %3069 = vmatpush1.msra.mxu0 %v1047
  %3070 = vmatprep.subr.mxu0 0.0
  %3071 = vmatpush2.msra.mxu0 0.0
  %3072 = vmatprep.subr.mxu0 0.0
  %3073 = vmatpush2.msra.mxu0 0.0
  %3074 = vmatprep.subr.mxu0 0.0
  %3075 = vmatpush2.msra.mxu0 0.0
  %3076 = vmatprep.subr.mxu0 0.0
  %3077 = vmatpush2.msra.mxu0 0.0
  %3078 = vmatprep.subr.mxu0 0.0
  %3079 = vmatpush2.msra.mxu0 0.0
  %3080 = vmatprep.subr.mxu0 0.0
  %3081 = vmatpush2.msra.mxu0 0.0
  %3082 = vmatprep.subr.mxu0 0.0
  %3083 = vmatpush2.msra.mxu0 0.0
  %3084 = vmatprep.subr.mxu0 0.0
  %3085 = vmatpush2.msra.mxu0 0.0
  %3086 = vmatprep.subr.mxu0 0.0
  %3087 = vmatpush2.msra.mxu0 0.0
  %3088 = vmatprep.subr.mxu0 0.0
  %3089 = vmatpush2.msra.mxu0 0.0
  %3090 = vmatprep.subr.mxu0 0.0
  %3091 = vmatpush2.msra.mxu0 0.0
  %3092 = vmatprep.subr.mxu0 0.0
  %3093 = vmatpush2.msra.mxu0 0.0
  %3094 = vmatprep.subr.mxu0 0.0
  %3095 = vmatpush2.msra.mxu0 0.0
  %3096 = vmatprep.subr.mxu0 0.0
  %3097 = vmatpush2.msra.mxu0 0.0
  %3098 = vmatprep.subr.mxu0 0.0
  %3099 = vmatpush2.msra.mxu0 0.0
  %3100 = vmatprep.subr.mxu0 0.0
  %3101 = vmatpush2.msra.mxu0 0.0
  %3102 = vmatprep.mubr.f32.mxu0 0.0
  %3103 = vmatmul.mubr.f32.gmra.mxu0 %v3036
  %v3104 = vpop.f32.mrf.mxu0
  %v3105 = vadd.f32 %v1096, %v3104
  %v3106 = vpop.f32.mrf.mxu0
  %v3107 = vadd.f32 %v1100, %v3106
  %3108 = vdwg.mxu0
  %v3109 = vsel %vm1115, %v2941, 0
  %3111 = vmatprep.subr.mxu0 0.0
  %3112 = vmatpush1.msra.mxu0 0.0
  %3113 = vmatprep.subr.mxu0 0.0
  %3114 = vmatpush1.msra.mxu0 0.0
  %3115 = vmatprep.subr.mxu0 0.0
  %3116 = vmatpush1.msra.mxu0 0.0
  %3117 = vmatprep.subr.mxu0 0.0
  %3118 = vmatpush1.msra.mxu0 0.0
  %3119 = vmatprep.subr.mxu0 0.0
  %3120 = vmatpush1.msra.mxu0 0.0
  %3121 = vmatprep.subr.mxu0 0.0
  %3122 = vmatpush1.msra.mxu0 0.0
  %3123 = vmatprep.subr.mxu0 0.0
  %3124 = vmatpush1.msra.mxu0 0.0
  %3125 = vmatprep.subr.mxu0 0.0
  %3126 = vmatpush1.msra.mxu0 0.0
  %3127 = vmatprep.subr.mxu0 %v1078
  %3128 = vmatpush1.msra.mxu0 %v1077
  %3129 = vmatprep.subr.mxu0 %v1076
  %3130 = vmatpush1.msra.mxu0 %v1075
  %3131 = vmatprep.subr.mxu0 %v1074
  %3132 = vmatpush1.msra.mxu0 %v1073
  %3133 = vmatprep.subr.mxu0 %v1072
  %3134 = vmatpush1.msra.mxu0 %v1071
  %3135 = vmatprep.subr.mxu0 %v1070
  %3136 = vmatpush1.msra.mxu0 %v1069
  %3137 = vmatprep.subr.mxu0 %v1068
  %3138 = vmatpush1.msra.mxu0 %v1067
  %3139 = vmatprep.subr.mxu0 %v1066
  %3140 = vmatpush1.msra.mxu0 %v1065
  %3141 = vmatprep.subr.mxu0 %v1064
  %3142 = vmatpush1.msra.mxu0 %v1063
  %3143 = vmatprep.subr.mxu0 0.0
  %3144 = vmatpush2.msra.mxu0 0.0
  %3145 = vmatprep.subr.mxu0 0.0
  %3146 = vmatpush2.msra.mxu0 0.0
  %3147 = vmatprep.subr.mxu0 0.0
  %3148 = vmatpush2.msra.mxu0 0.0
  %3149 = vmatprep.subr.mxu0 0.0
  %3150 = vmatpush2.msra.mxu0 0.0
  %3151 = vmatprep.subr.mxu0 0.0
  %3152 = vmatpush2.msra.mxu0 0.0
  %3153 = vmatprep.subr.mxu0 0.0
  %3154 = vmatpush2.msra.mxu0 0.0
  %3155 = vmatprep.subr.mxu0 0.0
  %3156 = vmatpush2.msra.mxu0 0.0
  %3157 = vmatprep.subr.mxu0 0.0
  %3158 = vmatpush2.msra.mxu0 0.0
  %3159 = vmatprep.subr.mxu0 0.0
  %3160 = vmatpush2.msra.mxu0 0.0
  %3161 = vmatprep.subr.mxu0 0.0
  %3162 = vmatpush2.msra.mxu0 0.0
  %3163 = vmatprep.subr.mxu0 0.0
  %3164 = vmatpush2.msra.mxu0 0.0
  %3165 = vmatprep.subr.mxu0 0.0
  %3166 = vmatpush2.msra.mxu0 0.0
  %3167 = vmatprep.subr.mxu0 0.0
  %3168 = vmatpush2.msra.mxu0 0.0
  %3169 = vmatprep.subr.mxu0 0.0
  %3170 = vmatpush2.msra.mxu0 0.0
  %3171 = vmatprep.subr.mxu0 0.0
  %3172 = vmatpush2.msra.mxu0 0.0
  %3173 = vmatprep.subr.mxu0 0.0
  %3174 = vmatpush2.msra.mxu0 0.0
  %3175 = vmatprep.mubr.f32.mxu0 0.0
  %3176 = vmatmul.mubr.f32.gmra.mxu0 %v3109
  %v3177 = vpop.f32.mrf.mxu0
  %v3178 = vadd.f32 %v1108, %v3177
  %v3179 = vpop.f32.mrf.mxu0
  %v3180 = vadd.f32 %v1112, %v3179
  %3181 = vdwg.mxu0
  %v3182 = vadd.f32 %v3105, %v3178
  %v3183 = vxor.u32 %v3182, 2147483648
  %v3184 = vmul.f32 %v3183, 1.442695
  %v3185 = vpow.pop %v3184
  %v3186 = vadd.f32 %v3185, 1.0
  %v3187 = vrcp.pop %v3186
  %v3188 = vmul.f32 1.0, %v3187
  %v3189 = vmul.f32 %v3188, %v3180
  %v3190 = vadd.f32 %v3107, %v3189
  %v3191 = vtanh.pop %v3190
  %v3192 = vsub.f32 1.0, %v3188
  %3194 = vrot.lane.b32.xlu0 %v3191, 64
  %v3195 = vpop.permute.xlu0 %3194
  %v3197 = vmul.f32 %v3192, %v3195
  %v3198 = vmul.f32 %v3188, %v2938
  %v3199 = vadd.f32 %v3197, %v3198
  %3201 = vrot.lane.b32.xlu0 %v3199, 64
  %v3202 = vpop.permute.xlu0 %3201
  %3204 = vst.msk [vmem:[#allocation2 + $0x38] sm:$0xff] %vm1115, %v3202
  %v3205 = vld [vmem:[#allocation2] sm:$0xff]
  %v3206 = vld [vmem:[#allocation2 + $0x8] sm:$0xff]
  %v3207 = vld [vmem:[#allocation2 + $0x10] sm:$0xff]
  %v3208 = vld [vmem:[#allocation2 + $0x18] sm:$0xff]
  %v3209 = vld [vmem:[#allocation2 + $0x20] sm:$0xff]
  %v3210 = vld [vmem:[#allocation2 + $0x28] sm:$0xff]
  %v3211 = vld [vmem:[#allocation2 + $0x30] sm:$0xff]
  %v3212 = vld [vmem:[#allocation2 + $0x38] sm:$0xff]
  %v3213 = vld [vmem:[%s20] sm:$0xff]
  %v3214 = vld [vmem:[%s20 + $0x8] sm:$0xff]
  %v3215 = vld [vmem:[%s20 + $0x10] sm:$0xff]
  %v3216 = vld [vmem:[%s20 + $0x18] sm:$0xff]
  %v3217 = vld [vmem:[%s20 + $0x20] sm:$0xff]
  %v3218 = vld [vmem:[%s20 + $0x28] sm:$0xff]
  %v3219 = vld [vmem:[%s20 + $0x30] sm:$0xff]
  %v3220 = vld [vmem:[%s20 + $0x38] sm:$0xff]
  %v3221 = vld [vmem:[%s21] sm:$0x1]
  %v3223 = vlaneseq
  %v3224 = vshrl.u32 %v3223, 7
  %v3225 = vsub.s32 0, %v3224
  %v3226 = vrot.slane %v3221, %v3225
  %v3229 = vsel %vm1115, %v3205, 0
  %v3232 = vsel %vm1115, %v3206, 0
  %v3235 = vsel %vm1115, %v3207, 0
  %v3238 = vsel %vm1115, %v3208, 0
  %v3241 = vsel %vm1115, %v3209, 0
  %v3244 = vsel %vm1115, %v3210, 0
  %v3247 = vsel %vm1115, %v3211, 0
  %v3250 = vsel %vm1115, %v3212, 0
  %3252 = vmatprep.subr.mxu0 0.0
  %3253 = vmatpush1.msra.mxu0 0.0
  %3254 = vmatprep.subr.mxu0 0.0
  %3255 = vmatpush1.msra.mxu0 0.0
  %3256 = vmatprep.subr.mxu0 0.0
  %3257 = vmatpush1.msra.mxu0 0.0
  %3258 = vmatprep.subr.mxu0 0.0
  %3259 = vmatpush1.msra.mxu0 0.0
  %3260 = vmatprep.subr.mxu0 0.0
  %3261 = vmatpush1.msra.mxu0 0.0
  %3262 = vmatprep.subr.mxu0 0.0
  %3263 = vmatpush1.msra.mxu0 0.0
  %3264 = vmatprep.subr.mxu0 0.0
  %3265 = vmatpush1.msra.mxu0 0.0
  %3266 = vmatprep.subr.mxu0 0.0
  %3267 = vmatpush1.msra.mxu0 0.0
  %3268 = vmatprep.subr.mxu0 0.0
  %3269 = vmatpush1.msra.mxu0 %v3220
  %3270 = vmatprep.subr.mxu0 0.0
  %3271 = vmatpush1.msra.mxu0 %v3219
  %3272 = vmatprep.subr.mxu0 0.0
  %3273 = vmatpush1.msra.mxu0 %v3218
  %3274 = vmatprep.subr.mxu0 0.0
  %3275 = vmatpush1.msra.mxu0 %v3217
  %3276 = vmatprep.subr.mxu0 0.0
  %3277 = vmatpush1.msra.mxu0 %v3216
  %3278 = vmatprep.subr.mxu0 0.0
  %3279 = vmatpush1.msra.mxu0 %v3215
  %3280 = vmatprep.subr.mxu0 0.0
  %3281 = vmatpush1.msra.mxu0 %v3214
  %3282 = vmatprep.subr.mxu0 0.0
  %3283 = vmatpush1.msra.mxu0 %v3213
  %3284 = vmatprep.subr.mxu0 0.0
  %3285 = vmatpush2.msra.mxu0 0.0
  %3286 = vmatprep.subr.mxu0 0.0
  %3287 = vmatpush2.msra.mxu0 0.0
  %3288 = vmatprep.subr.mxu0 0.0
  %3289 = vmatpush2.msra.mxu0 0.0
  %3290 = vmatprep.subr.mxu0 0.0
  %3291 = vmatpush2.msra.mxu0 0.0
  %3292 = vmatprep.subr.mxu0 0.0
  %3293 = vmatpush2.msra.mxu0 0.0
  %3294 = vmatprep.subr.mxu0 0.0
  %3295 = vmatpush2.msra.mxu0 0.0
  %3296 = vmatprep.subr.mxu0 0.0
  %3297 = vmatpush2.msra.mxu0 0.0
  %3298 = vmatprep.subr.mxu0 0.0
  %3299 = vmatpush2.msra.mxu0 0.0
  %3300 = vmatprep.subr.mxu0 0.0
  %3301 = vmatpush2.msra.mxu0 0.0
  %3302 = vmatprep.subr.mxu0 0.0
  %3303 = vmatpush2.msra.mxu0 0.0
  %3304 = vmatprep.subr.mxu0 0.0
  %3305 = vmatpush2.msra.mxu0 0.0
  %3306 = vmatprep.subr.mxu0 0.0
  %3307 = vmatpush2.msra.mxu0 0.0
  %3308 = vmatprep.subr.mxu0 0.0
  %3309 = vmatpush2.msra.mxu0 0.0
  %3310 = vmatprep.subr.mxu0 0.0
  %3311 = vmatpush2.msra.mxu0 0.0
  %3312 = vmatprep.subr.mxu0 0.0
  %3313 = vmatpush2.msra.mxu0 0.0
  %3314 = vmatprep.subr.mxu0 0.0
  %3315 = vmatpush2.msra.mxu0 0.0
  %3316 = vmatprep.mubr.f32.mxu0 0.0
  %3317 = vmatmul.mubr.f32.gmra.mxu0 %v3229
  %v3318 = vpop.f32.mrf.mxu0
  %v3319 = vadd.f32 %v3226, %v3318
  %v3320 = vpop.f32.mrf.mxu0
  %3321 = vmatprep.mubr.f32.mxu0 0.0
  %3322 = vmatmul.mubr.f32.gmra.mxu0 %v3232
  %v3323 = vpop.f32.mrf.mxu0
  %v3324 = vadd.f32 %v3226, %v3323
  %v3325 = vpop.f32.mrf.mxu0
  %3326 = vmatprep.mubr.f32.mxu0 0.0
  %3327 = vmatmul.mubr.f32.gmra.mxu0 %v3235
  %v3328 = vpop.f32.mrf.mxu0
  %v3329 = vadd.f32 %v3226, %v3328
  %v3330 = vpop.f32.mrf.mxu0
  %3331 = vmatprep.mubr.f32.mxu0 0.0
  %3332 = vmatmul.mubr.f32.gmra.mxu0 %v3238
  %v3333 = vpop.f32.mrf.mxu0
  %v3334 = vadd.f32 %v3226, %v3333
  %v3335 = vpop.f32.mrf.mxu0
  %3336 = vmatprep.mubr.f32.mxu0 0.0
  %3337 = vmatmul.mubr.f32.gmra.mxu0 %v3241
  %v3338 = vpop.f32.mrf.mxu0
  %v3339 = vadd.f32 %v3226, %v3338
  %v3340 = vpop.f32.mrf.mxu0
  %3341 = vmatprep.mubr.f32.mxu0 0.0
  %3342 = vmatmul.mubr.f32.gmra.mxu0 %v3244
  %v3343 = vpop.f32.mrf.mxu0
  %v3344 = vadd.f32 %v3226, %v3343
  %v3345 = vpop.f32.mrf.mxu0
  %3346 = vmatprep.mubr.f32.mxu0 0.0
  %3347 = vmatmul.mubr.f32.gmra.mxu0 %v3247
  %v3348 = vpop.f32.mrf.mxu0
  %v3349 = vadd.f32 %v3226, %v3348
  %v3350 = vpop.f32.mrf.mxu0
  %3351 = vmatprep.mubr.f32.mxu0 0.0
  %3352 = vmatmul.mubr.f32.gmra.mxu0 %v3250
  %v3353 = vpop.f32.mrf.mxu0
  %v3354 = vadd.f32 %v3226, %v3353
  %v3355 = vpop.f32.mrf.mxu0
  %3356 = vdwg.mxu0
  %v3357 = vld [vmem:[%s2] sm:$0xff]
  %v3358 = vld [vmem:[%s2 + $0x8] sm:$0xff]
  %v3359 = vld [vmem:[%s2 + $0x10] sm:$0xff]
  %v3360 = vld [vmem:[%s2 + $0x18] sm:$0xff]
  %v3361 = vld [vmem:[%s2 + $0x20] sm:$0xff]
  %v3362 = vld [vmem:[%s2 + $0x28] sm:$0xff]
  %v3363 = vld [vmem:[%s2 + $0x30] sm:$0xff]
  %v3364 = vld [vmem:[%s2 + $0x38] sm:$0xff]
  %v3365 = vmul.f32 %v3319, 0.5
  %v3366 = vmul.f32 %v3324, 0.5
  %v3367 = vmul.f32 %v3329, 0.5
  %v3368 = vmul.f32 %v3334, 0.5
  %v3369 = vmul.f32 %v3339, 0.5
  %v3370 = vmul.f32 %v3344, 0.5
  %v3371 = vmul.f32 %v3349, 0.5
  %v3372 = vmul.f32 %v3354, 0.5
  %v3373 = vmul.f32 %v3365, 1.442695
  %v3374 = vpow.pop %v3373
  %v3375 = vmul.f32 %v3366, 1.442695
  %v3376 = vpow.pop %v3375
  %v3377 = vmul.f32 %v3367, 1.442695
  %v3378 = vpow.pop %v3377
  %v3379 = vmul.f32 %v3368, 1.442695
  %v3380 = vpow.pop %v3379
  %v3381 = vmul.f32 %v3369, 1.442695
  %v3382 = vpow.pop %v3381
  %v3383 = vmul.f32 %v3370, 1.442695
  %v3384 = vpow.pop %v3383
  %v3385 = vmul.f32 %v3371, 1.442695
  %v3386 = vpow.pop %v3385
  %v3387 = vmul.f32 %v3372, 1.442695
  %v3388 = vpow.pop %v3387
  %3397 = vrot.lane.b32.xlu0 %v3374, 120
  %v3398 = vpop.permute.xlu0 %3397
  %3399 = vrot.lane.b32.xlu0 %v3376, 120
  %v3400 = vpop.permute.xlu0 %3399
  %3401 = vrot.lane.b32.xlu0 %v3378, 120
  %v3402 = vpop.permute.xlu0 %3401
  %3403 = vrot.lane.b32.xlu0 %v3380, 120
  %v3404 = vpop.permute.xlu0 %3403
  %3405 = vrot.lane.b32.xlu0 %v3382, 120
  %v3406 = vpop.permute.xlu0 %3405
  %3407 = vrot.lane.b32.xlu0 %v3384, 120
  %v3408 = vpop.permute.xlu0 %3407
  %3409 = vrot.lane.b32.xlu0 %v3386, 120
  %v3410 = vpop.permute.xlu0 %3409
  %3411 = vrot.lane.b32.xlu0 %v3388, 120
  %v3412 = vpop.permute.xlu0 %3411
  %v3421 = vmul.f32 %v3357, %v3398
  %v3422 = vmul.f32 %v3358, %v3400
  %v3423 = vmul.f32 %v3359, %v3402
  %v3424 = vmul.f32 %v3360, %v3404
  %v3425 = vmul.f32 %v3361, %v3406
  %v3426 = vmul.f32 %v3362, %v3408
  %v3427 = vmul.f32 %v3363, %v3410
  %v3428 = vmul.f32 %v3364, %v3412
  %v3429 = vadd.f32 %v3319, %v3421
  %v3430 = vadd.f32 %v3324, %v3422
  %v3431 = vadd.f32 %v3329, %v3423
  %v3432 = vadd.f32 %v3334, %v3424
  %v3433 = vadd.f32 %v3339, %v3425
  %v3434 = vadd.f32 %v3344, %v3426
  %v3435 = vadd.f32 %v3349, %v3427
  %v3436 = vadd.f32 %v3354, %v3428
  %v3437 = vld [vmem:[%s22] sm:$0xff]
  %v3438 = vld [vmem:[%s23] sm:$0x1]
  %v3440 = vlaneseq
  %v3441 = vshrl.u32 %v3440, 7
  %v3442 = vsub.s32 0, %v3441
  %v3443 = vrot.slane %v3438, %v3442
  %vm3445 = vcmask 64512
  %v3447 = vsel %vm3445, %v3429, 0
  %v3450 = vsel %vm3445, %v3430, 0
  %v3453 = vsel %vm3445, %v3431, 0
  %v3456 = vsel %vm3445, %v3432, 0
  %v3459 = vsel %vm3445, %v3433, 0
  %v3462 = vsel %vm3445, %v3434, 0
  %v3465 = vsel %vm3445, %v3435, 0
  %v3468 = vsel %vm3445, %v3436, 0
  %3470 = vmatprep.subr.mxu0 0.0
  %3471 = vmatpush1.msra.mxu0 0.0
  %3472 = vmatprep.subr.mxu0 0.0
  %3473 = vmatpush1.msra.mxu0 0.0
  %3474 = vmatprep.subr.mxu0 0.0
  %3475 = vmatpush1.msra.mxu0 0.0
  %3476 = vmatprep.subr.mxu0 0.0
  %3477 = vmatpush1.msra.mxu0 0.0
  %3478 = vmatprep.subr.mxu0 0.0
  %3479 = vmatpush1.msra.mxu0 0.0
  %3480 = vmatprep.subr.mxu0 0.0
  %3481 = vmatpush1.msra.mxu0 0.0
  %3482 = vmatprep.subr.mxu0 0.0
  %3483 = vmatpush1.msra.mxu0 0.0
  %3484 = vmatprep.subr.mxu0 0.0
  %3485 = vmatpush1.msra.mxu0 0.0
  %3486 = vmatprep.subr.mxu0 0.0
  %3487 = vmatpush1.msra.mxu0 0.0
  %3488 = vmatprep.subr.mxu0 0.0
  %3489 = vmatpush1.msra.mxu0 0.0
  %3490 = vmatprep.subr.mxu0 0.0
  %3491 = vmatpush1.msra.mxu0 0.0
  %3492 = vmatprep.subr.mxu0 0.0
  %3493 = vmatpush1.msra.mxu0 0.0
  %3494 = vmatprep.subr.mxu0 0.0
  %3495 = vmatpush1.msra.mxu0 0.0
  %3496 = vmatprep.subr.mxu0 0.0
  %3497 = vmatpush1.msra.mxu0 0.0
  %3498 = vmatprep.subr.mxu0 0.0
  %3499 = vmatpush1.msra.mxu0 0.0
  %3500 = vmatprep.subr.mxu0 0.0
  %3501 = vmatpush1.msra.mxu0 %v3437
  %3502 = vmatprep.subr.mxu0 0.0
  %3503 = vmatpush2.msra.mxu0 0.0
  %3504 = vmatprep.subr.mxu0 0.0
  %3505 = vmatpush2.msra.mxu0 0.0
  %3506 = vmatprep.subr.mxu0 0.0
  %3507 = vmatpush2.msra.mxu0 0.0
  %3508 = vmatprep.subr.mxu0 0.0
  %3509 = vmatpush2.msra.mxu0 0.0
  %3510 = vmatprep.subr.mxu0 0.0
  %3511 = vmatpush2.msra.mxu0 0.0
  %3512 = vmatprep.subr.mxu0 0.0
  %3513 = vmatpush2.msra.mxu0 0.0
  %3514 = vmatprep.subr.mxu0 0.0
  %3515 = vmatpush2.msra.mxu0 0.0
  %3516 = vmatprep.subr.mxu0 0.0
  %3517 = vmatpush2.msra.mxu0 0.0
  %3518 = vmatprep.subr.mxu0 0.0
  %3519 = vmatpush2.msra.mxu0 0.0
  %3520 = vmatprep.subr.mxu0 0.0
  %3521 = vmatpush2.msra.mxu0 0.0
  %3522 = vmatprep.subr.mxu0 0.0
  %3523 = vmatpush2.msra.mxu0 0.0
  %3524 = vmatprep.subr.mxu0 0.0
  %3525 = vmatpush2.msra.mxu0 0.0
  %3526 = vmatprep.subr.mxu0 0.0
  %3527 = vmatpush2.msra.mxu0 0.0
  %3528 = vmatprep.subr.mxu0 0.0
  %3529 = vmatpush2.msra.mxu0 0.0
  %3530 = vmatprep.subr.mxu0 0.0
  %3531 = vmatpush2.msra.mxu0 0.0
  %3532 = vmatprep.subr.mxu0 0.0
  %3533 = vmatpush2.msra.mxu0 0.0
  %3534 = vmatprep.mubr.f32.mxu0 0.0
  %3535 = vmatmul.mubr.f32.gmra.mxu0 %v3447
  %v3536 = vpop.f32.mrf.mxu0
  %v3537 = vadd.f32 %v3443, %v3536
  %v3538 = vpop.f32.mrf.mxu0
  %3539 = vmatprep.mubr.f32.mxu0 0.0
  %3540 = vmatmul.mubr.f32.gmra.mxu0 %v3450
  %v3541 = vpop.f32.mrf.mxu0
  %v3542 = vadd.f32 %v3443, %v3541
  %v3543 = vpop.f32.mrf.mxu0
  %3544 = vmatprep.mubr.f32.mxu0 0.0
  %3545 = vmatmul.mubr.f32.gmra.mxu0 %v3453
  %v3546 = vpop.f32.mrf.mxu0
  %v3547 = vadd.f32 %v3443, %v3546
  %v3548 = vpop.f32.mrf.mxu0
  %3549 = vmatprep.mubr.f32.mxu0 0.0
  %3550 = vmatmul.mubr.f32.gmra.mxu0 %v3456
  %v3551 = vpop.f32.mrf.mxu0
  %v3552 = vadd.f32 %v3443, %v3551
  %v3553 = vpop.f32.mrf.mxu0
  %3554 = vmatprep.mubr.f32.mxu0 0.0
  %3555 = vmatmul.mubr.f32.gmra.mxu0 %v3459
  %v3556 = vpop.f32.mrf.mxu0
  %v3557 = vadd.f32 %v3443, %v3556
  %v3558 = vpop.f32.mrf.mxu0
  %3559 = vmatprep.mubr.f32.mxu0 0.0
  %3560 = vmatmul.mubr.f32.gmra.mxu0 %v3462
  %v3561 = vpop.f32.mrf.mxu0
  %v3562 = vadd.f32 %v3443, %v3561
  %v3563 = vpop.f32.mrf.mxu0
  %3564 = vmatprep.mubr.f32.mxu0 0.0
  %3565 = vmatmul.mubr.f32.gmra.mxu0 %v3465
  %v3566 = vpop.f32.mrf.mxu0
  %v3567 = vadd.f32 %v3443, %v3566
  %v3568 = vpop.f32.mrf.mxu0
  %3569 = vmatprep.mubr.f32.mxu0 0.0
  %3570 = vmatmul.mubr.f32.gmra.mxu0 %v3468
  %v3571 = vpop.f32.mrf.mxu0
  %v3572 = vadd.f32 %v3443, %v3571
  %v3573 = vpop.f32.mrf.mxu0
  %3574 = vdwg.mxu0
  %v3575 = vmax.f32 %v3537, 0.0
  %v3576 = vmax.f32 %v3542, 0.0
  %v3577 = vmax.f32 %v3547, 0.0
  %v3578 = vmax.f32 %v3552, 0.0
  %v3579 = vmax.f32 %v3557, 0.0
  %v3580 = vmax.f32 %v3562, 0.0
  %v3581 = vmax.f32 %v3567, 0.0
  %v3582 = vmax.f32 %v3572, 0.0
  %v3583 = vld [vmem:[%s24] sm:$0xff]
  %v3584 = vld [vmem:[%s24 + $0x8] sm:$0xff]
  %v3585 = vld [vmem:[%s24 + $0x10] sm:$0xff]
  %v3586 = vld [vmem:[%s24 + $0x18] sm:$0xff]
  %v3587 = vld [vmem:[%s25] sm:$0x1]
  %v3589 = vlaneseq
  %v3590 = vshrl.u32 %v3589, 7
  %v3591 = vsub.s32 0, %v3590
  %v3592 = vrot.slane %v3587, %v3591
  %vm3594 = vcmask 261120
  %v3596 = vsel %vm3594, %v3575, 0
  %v3599 = vsel %vm3594, %v3576, 0
  %v3602 = vsel %vm3594, %v3577, 0
  %v3605 = vsel %vm3594, %v3578, 0
  %v3608 = vsel %vm3594, %v3579, 0
  %v3611 = vsel %vm3594, %v3580, 0
  %v3614 = vsel %vm3594, %v3581, 0
  %v3617 = vsel %vm3594, %v3582, 0
  %3619 = vmatprep.subr.mxu0 0.0
  %3620 = vmatpush1.msra.mxu0 0.0
  %3621 = vmatprep.subr.mxu0 0.0
  %3622 = vmatpush1.msra.mxu0 0.0
  %3623 = vmatprep.subr.mxu0 0.0
  %3624 = vmatpush1.msra.mxu0 0.0
  %3625 = vmatprep.subr.mxu0 0.0
  %3626 = vmatpush1.msra.mxu0 0.0
  %3627 = vmatprep.subr.mxu0 0.0
  %3628 = vmatpush1.msra.mxu0 0.0
  %3629 = vmatprep.subr.mxu0 0.0
  %3630 = vmatpush1.msra.mxu0 0.0
  %3631 = vmatprep.subr.mxu0 0.0
  %3632 = vmatpush1.msra.mxu0 0.0
  %3633 = vmatprep.subr.mxu0 0.0
  %3634 = vmatpush1.msra.mxu0 0.0
  %3635 = vmatprep.subr.mxu0 0.0
  %3636 = vmatpush1.msra.mxu0 0.0
  %3637 = vmatprep.subr.mxu0 0.0
  %3638 = vmatpush1.msra.mxu0 0.0
  %3639 = vmatprep.subr.mxu0 0.0
  %3640 = vmatpush1.msra.mxu0 0.0
  %3641 = vmatprep.subr.mxu0 0.0
  %3642 = vmatpush1.msra.mxu0 0.0
  %3643 = vmatprep.subr.mxu0 0.0
  %3644 = vmatpush1.msra.mxu0 %v3586
  %3645 = vmatprep.subr.mxu0 0.0
  %3646 = vmatpush1.msra.mxu0 %v3585
  %3647 = vmatprep.subr.mxu0 0.0
  %3648 = vmatpush1.msra.mxu0 %v3584
  %3649 = vmatprep.subr.mxu0 0.0
  %3650 = vmatpush1.msra.mxu0 %v3583
  %3651 = vmatprep.subr.mxu0 0.0
  %3652 = vmatpush2.msra.mxu0 0.0
  %3653 = vmatprep.subr.mxu0 0.0
  %3654 = vmatpush2.msra.mxu0 0.0
  %3655 = vmatprep.subr.mxu0 0.0
  %3656 = vmatpush2.msra.mxu0 0.0
  %3657 = vmatprep.subr.mxu0 0.0
  %3658 = vmatpush2.msra.mxu0 0.0
  %3659 = vmatprep.subr.mxu0 0.0
  %3660 = vmatpush2.msra.mxu0 0.0
  %3661 = vmatprep.subr.mxu0 0.0
  %3662 = vmatpush2.msra.mxu0 0.0
  %3663 = vmatprep.subr.mxu0 0.0
  %3664 = vmatpush2.msra.mxu0 0.0
  %3665 = vmatprep.subr.mxu0 0.0
  %3666 = vmatpush2.msra.mxu0 0.0
  %3667 = vmatprep.subr.mxu0 0.0
  %3668 = vmatpush2.msra.mxu0 0.0
  %3669 = vmatprep.subr.mxu0 0.0
  %3670 = vmatpush2.msra.mxu0 0.0
  %3671 = vmatprep.subr.mxu0 0.0
  %3672 = vmatpush2.msra.mxu0 0.0
  %3673 = vmatprep.subr.mxu0 0.0
  %3674 = vmatpush2.msra.mxu0 0.0
  %3675 = vmatprep.subr.mxu0 0.0
  %3676 = vmatpush2.msra.mxu0 0.0
  %3677 = vmatprep.subr.mxu0 0.0
  %3678 = vmatpush2.msra.mxu0 0.0
  %3679 = vmatprep.subr.mxu0 0.0
  %3680 = vmatpush2.msra.mxu0 0.0
  %3681 = vmatprep.subr.mxu0 0.0
  %3682 = vmatpush2.msra.mxu0 0.0
  %3683 = vmatprep.mubr.f32.mxu0 0.0
  %3684 = vmatmul.mubr.f32.gmra.mxu0 %v3596
  %v3685 = vpop.f32.mrf.mxu0
  %v3686 = vadd.f32 %v3592, %v3685
  %v3687 = vpop.f32.mrf.mxu0
  %3688 = vmatprep.mubr.f32.mxu0 0.0
  %3689 = vmatmul.mubr.f32.gmra.mxu0 %v3599
  %v3690 = vpop.f32.mrf.mxu0
  %v3691 = vadd.f32 %v3592, %v3690
  %v3692 = vpop.f32.mrf.mxu0
  %3693 = vmatprep.mubr.f32.mxu0 0.0
  %3694 = vmatmul.mubr.f32.gmra.mxu0 %v3602
  %v3695 = vpop.f32.mrf.mxu0
  %v3696 = vadd.f32 %v3592, %v3695
  %v3697 = vpop.f32.mrf.mxu0
  %3698 = vmatprep.mubr.f32.mxu0 0.0
  %3699 = vmatmul.mubr.f32.gmra.mxu0 %v3605
  %v3700 = vpop.f32.mrf.mxu0
  %v3701 = vadd.f32 %v3592, %v3700
  %v3702 = vpop.f32.mrf.mxu0
  %3703 = vmatprep.mubr.f32.mxu0 0.0
  %3704 = vmatmul.mubr.f32.gmra.mxu0 %v3608
  %v3705 = vpop.f32.mrf.mxu0
  %v3706 = vadd.f32 %v3592, %v3705
  %v3707 = vpop.f32.mrf.mxu0
  %3708 = vmatprep.mubr.f32.mxu0 0.0
  %3709 = vmatmul.mubr.f32.gmra.mxu0 %v3611
  %v3710 = vpop.f32.mrf.mxu0
  %v3711 = vadd.f32 %v3592, %v3710
  %v3712 = vpop.f32.mrf.mxu0
  %3713 = vmatprep.mubr.f32.mxu0 0.0
  %3714 = vmatmul.mubr.f32.gmra.mxu0 %v3614
  %v3715 = vpop.f32.mrf.mxu0
  %v3716 = vadd.f32 %v3592, %v3715
  %v3717 = vpop.f32.mrf.mxu0
  %3718 = vmatprep.mubr.f32.mxu0 0.0
  %3719 = vmatmul.mubr.f32.gmra.mxu0 %v3617
  %v3720 = vpop.f32.mrf.mxu0
  %v3721 = vadd.f32 %v3592, %v3720
  %v3722 = vpop.f32.mrf.mxu0
  %3723 = vdwg.mxu0
  %v3724 = vld [vmem:[%s26] sm:$0xff]
  %v3725 = vld [vmem:[%s26 + $0x8] sm:$0xff]
  %v3726 = vld [vmem:[%s26 + $0x10] sm:$0xff]
  %v3727 = vld [vmem:[%s26 + $0x18] sm:$0xff]
  %v3728 = vld [vmem:[%s27] sm:$0x1]
  %v3730 = vlaneseq
  %v3731 = vshrl.u32 %v3730, 7
  %v3732 = vsub.s32 0, %v3731
  %v3733 = vrot.slane %v3728, %v3732
  %v3736 = vsel %vm3594, %v3686, 0
  %v3739 = vsel %vm3594, %v3691, 0
  %v3742 = vsel %vm3594, %v3696, 0
  %v3745 = vsel %vm3594, %v3701, 0
  %v3748 = vsel %vm3594, %v3706, 0
  %v3751 = vsel %vm3594, %v3711, 0
  %v3754 = vsel %vm3594, %v3716, 0
  %v3757 = vsel %vm3594, %v3721, 0
  %3759 = vmatprep.subr.mxu0 0.0
  %3760 = vmatpush1.msra.mxu0 0.0
  %3761 = vmatprep.subr.mxu0 0.0
  %3762 = vmatpush1.msra.mxu0 0.0
  %3763 = vmatprep.subr.mxu0 0.0
  %3764 = vmatpush1.msra.mxu0 0.0
  %3765 = vmatprep.subr.mxu0 0.0
  %3766 = vmatpush1.msra.mxu0 0.0
  %3767 = vmatprep.subr.mxu0 0.0
  %3768 = vmatpush1.msra.mxu0 0.0
  %3769 = vmatprep.subr.mxu0 0.0
  %3770 = vmatpush1.msra.mxu0 0.0
  %3771 = vmatprep.subr.mxu0 0.0
  %3772 = vmatpush1.msra.mxu0 0.0
  %3773 = vmatprep.subr.mxu0 0.0
  %3774 = vmatpush1.msra.mxu0 0.0
  %3775 = vmatprep.subr.mxu0 0.0
  %3776 = vmatpush1.msra.mxu0 0.0
  %3777 = vmatprep.subr.mxu0 0.0
  %3778 = vmatpush1.msra.mxu0 0.0
  %3779 = vmatprep.subr.mxu0 0.0
  %3780 = vmatpush1.msra.mxu0 0.0
  %3781 = vmatprep.subr.mxu0 0.0
  %3782 = vmatpush1.msra.mxu0 0.0
  %3783 = vmatprep.subr.mxu0 0.0
  %3784 = vmatpush1.msra.mxu0 %v3727
  %3785 = vmatprep.subr.mxu0 0.0
  %3786 = vmatpush1.msra.mxu0 %v3726
  %3787 = vmatprep.subr.mxu0 0.0
  %3788 = vmatpush1.msra.mxu0 %v3725
  %3789 = vmatprep.subr.mxu0 0.0
  %3790 = vmatpush1.msra.mxu0 %v3724
  %3791 = vmatprep.subr.mxu0 0.0
  %3792 = vmatpush2.msra.mxu0 0.0
  %3793 = vmatprep.subr.mxu0 0.0
  %3794 = vmatpush2.msra.mxu0 0.0
  %3795 = vmatprep.subr.mxu0 0.0
  %3796 = vmatpush2.msra.mxu0 0.0
  %3797 = vmatprep.subr.mxu0 0.0
  %3798 = vmatpush2.msra.mxu0 0.0
  %3799 = vmatprep.subr.mxu0 0.0
  %3800 = vmatpush2.msra.mxu0 0.0
  %3801 = vmatprep.subr.mxu0 0.0
  %3802 = vmatpush2.msra.mxu0 0.0
  %3803 = vmatprep.subr.mxu0 0.0
  %3804 = vmatpush2.msra.mxu0 0.0
  %3805 = vmatprep.subr.mxu0 0.0
  %3806 = vmatpush2.msra.mxu0 0.0
  %3807 = vmatprep.subr.mxu0 0.0
  %3808 = vmatpush2.msra.mxu0 0.0
  %3809 = vmatprep.subr.mxu0 0.0
  %3810 = vmatpush2.msra.mxu0 0.0
  %3811 = vmatprep.subr.mxu0 0.0
  %3812 = vmatpush2.msra.mxu0 0.0
  %3813 = vmatprep.subr.mxu0 0.0
  %3814 = vmatpush2.msra.mxu0 0.0
  %3815 = vmatprep.subr.mxu0 0.0
  %3816 = vmatpush2.msra.mxu0 0.0
  %3817 = vmatprep.subr.mxu0 0.0
  %3818 = vmatpush2.msra.mxu0 0.0
  %3819 = vmatprep.subr.mxu0 0.0
  %3820 = vmatpush2.msra.mxu0 0.0
  %3821 = vmatprep.subr.mxu0 0.0
  %3822 = vmatpush2.msra.mxu0 0.0
  %3823 = vmatprep.mubr.f32.mxu0 0.0
  %3824 = vmatmul.mubr.f32.gmra.mxu0 %v3736
  %v3825 = vpop.f32.mrf.mxu0
  %v3826 = vadd.f32 %v3733, %v3825
  %v3827 = vpop.f32.mrf.mxu0
  %3828 = vmatprep.mubr.f32.mxu0 0.0
  %3829 = vmatmul.mubr.f32.gmra.mxu0 %v3739
  %v3830 = vpop.f32.mrf.mxu0
  %v3831 = vadd.f32 %v3733, %v3830
  %v3832 = vpop.f32.mrf.mxu0
  %3833 = vmatprep.mubr.f32.mxu0 0.0
  %3834 = vmatmul.mubr.f32.gmra.mxu0 %v3742
  %v3835 = vpop.f32.mrf.mxu0
  %v3836 = vadd.f32 %v3733, %v3835
  %v3837 = vpop.f32.mrf.mxu0
  %3838 = vmatprep.mubr.f32.mxu0 0.0
  %3839 = vmatmul.mubr.f32.gmra.mxu0 %v3745
  %v3840 = vpop.f32.mrf.mxu0
  %v3841 = vadd.f32 %v3733, %v3840
  %v3842 = vpop.f32.mrf.mxu0
  %3843 = vmatprep.mubr.f32.mxu0 0.0
  %3844 = vmatmul.mubr.f32.gmra.mxu0 %v3748
  %v3845 = vpop.f32.mrf.mxu0
  %v3846 = vadd.f32 %v3733, %v3845
  %v3847 = vpop.f32.mrf.mxu0
  %3848 = vmatprep.mubr.f32.mxu0 0.0
  %3849 = vmatmul.mubr.f32.gmra.mxu0 %v3751
  %v3850 = vpop.f32.mrf.mxu0
  %v3851 = vadd.f32 %v3733, %v3850
  %v3852 = vpop.f32.mrf.mxu0
  %3853 = vmatprep.mubr.f32.mxu0 0.0
  %3854 = vmatmul.mubr.f32.gmra.mxu0 %v3754
  %v3855 = vpop.f32.mrf.mxu0
  %v3856 = vadd.f32 %v3733, %v3855
  %v3857 = vpop.f32.mrf.mxu0
  %3858 = vmatprep.mubr.f32.mxu0 0.0
  %3859 = vmatmul.mubr.f32.gmra.mxu0 %v3757
  %v3860 = vpop.f32.mrf.mxu0
  %v3861 = vadd.f32 %v3733, %v3860
  %v3862 = vpop.f32.mrf.mxu0
  %3863 = vdwg.mxu0
  %3864 = vst.msk [vmem:[%s28] sm:$0xff] %vm3445, %v3319
  %3865 = vst.msk [vmem:[%s28 + $0x8] sm:$0xff] %vm3445, %v3324
  %3866 = vst.msk [vmem:[%s28 + $0x10] sm:$0xff] %vm3445, %v3329
  %3867 = vst.msk [vmem:[%s28 + $0x18] sm:$0xff] %vm3445, %v3334
  %3868 = vst.msk [vmem:[%s28 + $0x20] sm:$0xff] %vm3445, %v3339
  %3869 = vst.msk [vmem:[%s28 + $0x28] sm:$0xff] %vm3445, %v3344
  %3870 = vst.msk [vmem:[%s28 + $0x30] sm:$0xff] %vm3445, %v3349
  %3871 = vst.msk [vmem:[%s28 + $0x38] sm:$0xff] %vm3445, %v3354
  %vm3872 = vcmask 130112
  %3873 = vst.msk [vmem:[%s28] sm:$0xff] %vm3872, %v3319
  %3874 = vst.msk [vmem:[%s28 + $0x8] sm:$0xff] %vm3872, %v3324
  %3875 = vst.msk [vmem:[%s28 + $0x10] sm:$0xff] %vm3872, %v3329
  %3876 = vst.msk [vmem:[%s28 + $0x18] sm:$0xff] %vm3872, %v3334
  %3877 = vst.msk [vmem:[%s28 + $0x20] sm:$0xff] %vm3872, %v3339
  %3878 = vst.msk [vmem:[%s28 + $0x28] sm:$0xff] %vm3872, %v3344
  %3879 = vst.msk [vmem:[%s28 + $0x30] sm:$0xff] %vm3872, %v3349
  %3880 = vst.msk [vmem:[%s28 + $0x38] sm:$0xff] %vm3872, %v3354
  %3881 = vrot.lane.b32.xlu0 %v3429, 16
  %v3882 = vpop.permute.xlu0 %3881
  %3883 = vrot.lane.b32.xlu0 %v3430, 16
  %v3884 = vpop.permute.xlu0 %3883
  %3885 = vrot.lane.b32.xlu0 %v3431, 16
  %v3886 = vpop.permute.xlu0 %3885
  %3887 = vrot.lane.b32.xlu0 %v3432, 16
  %v3888 = vpop.permute.xlu0 %3887
  %3889 = vrot.lane.b32.xlu0 %v3433, 16
  %v3890 = vpop.permute.xlu0 %3889
  %3891 = vrot.lane.b32.xlu0 %v3434, 16
  %v3892 = vpop.permute.xlu0 %3891
  %3893 = vrot.lane.b32.xlu0 %v3435, 16
  %v3894 = vpop.permute.xlu0 %3893
  %3895 = vrot.lane.b32.xlu0 %v3436, 16
  %v3896 = vpop.permute.xlu0 %3895
  %vm3905 = vcmask 195712
  %3906 = vst.msk [vmem:[%s28] sm:$0xff] %vm3905, %v3882
  %3907 = vst.msk [vmem:[%s28 + $0x8] sm:$0xff] %vm3905, %v3884
  %3908 = vst.msk [vmem:[%s28 + $0x10] sm:$0xff] %vm3905, %v3886
  %3909 = vst.msk [vmem:[%s28 + $0x18] sm:$0xff] %vm3905, %v3888
  %3910 = vst.msk [vmem:[%s28 + $0x20] sm:$0xff] %vm3905, %v3890
  %3911 = vst.msk [vmem:[%s28 + $0x28] sm:$0xff] %vm3905, %v3892
  %3912 = vst.msk [vmem:[%s28 + $0x30] sm:$0xff] %vm3905, %v3894
  %3913 = vst.msk [vmem:[%s28 + $0x38] sm:$0xff] %vm3905, %v3896
  %3922 = vrot.lane.b32.xlu0 %v3826, 24
  %v3923 = vpop.permute.xlu0 %3922
  %3924 = vrot.lane.b32.xlu0 %v3831, 24
  %v3925 = vpop.permute.xlu0 %3924
  %3926 = vrot.lane.b32.xlu0 %v3836, 24
  %v3927 = vpop.permute.xlu0 %3926
  %3928 = vrot.lane.b32.xlu0 %v3841, 24
  %v3929 = vpop.permute.xlu0 %3928
  %3930 = vrot.lane.b32.xlu0 %v3846, 24
  %v3931 = vpop.permute.xlu0 %3930
  %3932 = vrot.lane.b32.xlu0 %v3851, 24
  %v3933 = vpop.permute.xlu0 %3932
  %3934 = vrot.lane.b32.xlu0 %v3856, 24
  %v3935 = vpop.permute.xlu0 %3934
  %3936 = vrot.lane.b32.xlu0 %v3861, 24
  %v3937 = vpop.permute.xlu0 %3936
  %vm3946 = vcmask 277696
  %3947 = vst.msk [vmem:[%s28] sm:$0xff] %vm3946, %v3923
  %3948 = vst.msk [vmem:[%s28 + $0x8] sm:$0xff] %vm3946, %v3925
  %3949 = vst.msk [vmem:[%s28 + $0x10] sm:$0xff] %vm3946, %v3927
  %3950 = vst.msk [vmem:[%s28 + $0x18] sm:$0xff] %vm3946, %v3929
  %3951 = vst.msk [vmem:[%s28 + $0x20] sm:$0xff] %vm3946, %v3931
  %3952 = vst.msk [vmem:[%s28 + $0x28] sm:$0xff] %vm3946, %v3933
  %3953 = vst.msk [vmem:[%s28 + $0x30] sm:$0xff] %vm3946, %v3935
  %3954 = vst.msk [vmem:[%s28 + $0x38] sm:$0xff] %vm3946, %v3937
  %v3955 = vxor.u32 %v3826, 2147483648
  %v3956 = vxor.u32 %v3831, 2147483648
  %v3957 = vxor.u32 %v3836, 2147483648
  %v3958 = vxor.u32 %v3841, 2147483648
  %v3959 = vxor.u32 %v3846, 2147483648
  %v3960 = vxor.u32 %v3851, 2147483648
  %v3961 = vxor.u32 %v3856, 2147483648
  %v3962 = vxor.u32 %v3861, 2147483648
  %v3963 = vmul.f32 %v3955, 1.442695
  %v3964 = vpow.pop %v3963
  %v3965 = vmul.f32 %v3956, 1.442695
  %v3966 = vpow.pop %v3965
  %v3967 = vmul.f32 %v3957, 1.442695
  %v3968 = vpow.pop %v3967
  %v3969 = vmul.f32 %v3958, 1.442695
  %v3970 = vpow.pop %v3969
  %v3971 = vmul.f32 %v3959, 1.442695
  %v3972 = vpow.pop %v3971
  %v3973 = vmul.f32 %v3960, 1.442695
  %v3974 = vpow.pop %v3973
  %v3975 = vmul.f32 %v3961, 1.442695
  %v3976 = vpow.pop %v3975
  %v3977 = vmul.f32 %v3962, 1.442695
  %v3978 = vpow.pop %v3977
  %v3979 = vadd.f32 %v3964, 1.0
  %v3980 = vadd.f32 %v3966, 1.0
  %v3981 = vadd.f32 %v3968, 1.0
  %v3982 = vadd.f32 %v3970, 1.0
  %v3983 = vadd.f32 %v3972, 1.0
  %v3984 = vadd.f32 %v3974, 1.0
  %v3985 = vadd.f32 %v3976, 1.0
  %v3986 = vadd.f32 %v3978, 1.0
  %v3987 = vrcp.pop %v3979
  %v3988 = vmul.f32 1.0, %v3987
  %v3989 = vrcp.pop %v3980
  %v3990 = vmul.f32 1.0, %v3989
  %v3991 = vrcp.pop %v3981
  %v3992 = vmul.f32 1.0, %v3991
  %v3993 = vrcp.pop %v3982
  %v3994 = vmul.f32 1.0, %v3993
  %v3995 = vrcp.pop %v3983
  %v3996 = vmul.f32 1.0, %v3995
  %v3997 = vrcp.pop %v3984
  %v3998 = vmul.f32 1.0, %v3997
  %v3999 = vrcp.pop %v3985
  %v4000 = vmul.f32 1.0, %v3999
  %v4001 = vrcp.pop %v3986
  %v4002 = vmul.f32 1.0, %v4001
  %4011 = vrot.lane.b32.xlu0 %v3988, 24
  %v4012 = vpop.permute.xlu0 %4011
  %4013 = vrot.lane.b32.xlu0 %v3990, 24
  %v4014 = vpop.permute.xlu0 %4013
  %4015 = vrot.lane.b32.xlu0 %v3992, 24
  %v4016 = vpop.permute.xlu0 %4015
  %4017 = vrot.lane.b32.xlu0 %v3994, 24
  %v4018 = vpop.permute.xlu0 %4017
  %4019 = vrot.lane.b32.xlu0 %v3996, 24
  %v4020 = vpop.permute.xlu0 %4019
  %4021 = vrot.lane.b32.xlu0 %v3998, 24
  %v4022 = vpop.permute.xlu0 %4021
  %4023 = vrot.lane.b32.xlu0 %v4000, 24
  %v4024 = vpop.permute.xlu0 %4023
  %4025 = vrot.lane.b32.xlu0 %v4002, 24
  %v4026 = vpop.permute.xlu0 %4025
  %vm4035 = vcmask 302352
  %4036 = vst.msk [vmem:[%s28] sm:$0xff] %vm4035, %v4012
  %4037 = vst.msk [vmem:[%s28 + $0x8] sm:$0xff] %vm4035, %v4014
  %4038 = vst.msk [vmem:[%s28 + $0x10] sm:$0xff] %vm4035, %v4016
  %4039 = vst.msk [vmem:[%s28 + $0x18] sm:$0xff] %vm4035, %v4018
  %4040 = vst.msk [vmem:[%s28 + $0x20] sm:$0xff] %vm4035, %v4020
  %4041 = vst.msk [vmem:[%s28 + $0x28] sm:$0xff] %vm4035, %v4022
  %4042 = vst.msk [vmem:[%s28 + $0x30] sm:$0xff] %vm4035, %v4024
  %4043 = vst.msk [vmem:[%s28 + $0x38] sm:$0xff] %vm4035, %v4026
  // Predicated region
  $region114: #{deapstack_forward.1} parent=0 // pred_check
    _
  $region115: #{deapstack_forward.1} parent=0 // pred_check_branch
    %4045 = sbr.rel (0) target = $region117
  $region116: #{deapstack_forward.1} parent=0 // pred_region
    _
  $region117: #{deapstack_forward.1} parent=0 // pred_fallthru
    _
  // Predicated region
  $region118: #{deapstack_forward.1} parent=0 // pred_check
    _
  $region119: #{deapstack_forward.1} parent=0 // pred_check_branch
    %4047 = sbr.rel (0) target = $region121
  $region120: #{deapstack_forward.1} parent=0 // pred_region
    _
  $region121: #{deapstack_forward.1} parent=0 // pred_fallthru
    _

</llo_original>
